<compile_context>
chip_gen: v7x
topology: tpu7x:2x2x1
jax: 0.10.0
libtpu: 0.0.40
codegen_flags: <defaults>
</compile_context>

<pallas_src>
import functools

import jax
import jax.numpy as jnp
from jax.experimental import pallas as pl
from jax.experimental.pallas import tpu as pltpu


_BN_EPS = 1e-5
_LANES = 128

_COMPILER_PARAMS = pltpu.CompilerParams(
    dimension_semantics=("parallel",),
    vmem_limit_bytes=32 * 1024 * 1024,
)


# ---------------------------------------------------------------------------
# helpers
# ---------------------------------------------------------------------------
def _round_up(v, m):
    return ((v + m - 1) // m) * m


def _pad_to(a, axis, target):
    if a.shape[axis] == target:
        return a
    pads = [(0, 0)] * a.ndim
    pads[axis] = (0, target - a.shape[axis])
    return jnp.pad(a, pads)


def _conv_taps(H, W, d, off):
    """Tap schedule for a 3x3 conv (dilation d, padding d, stride 1) acting on a
    zero-padded flat (L, Cin) slab whose H*W interior rows (row-major) start at
    flat offset `off` (requires off >= d*(W+1) and tail padding >= d*(W+1)).

    Returns [(k, start, lo, hi)]: k indexes the (9, Cin, Cout) weight, `start`
    is the static offset of the length-H*W operand window, [lo, hi) the valid
    output-column range (None = unbounded).  Taps whose receptive field lies
    entirely in the zero padding are dropped at trace time (for dilation >= H, W
    only the centre tap survives)."""
    taps = []
    for ky in range(3):
        dy = (ky - 1) * d
        if dy <= -H or dy >= H:
            continue
        for kx in range(3):
            dx = (kx - 1) * d
            lo = max(0, -dx)
            hi = min(W, W - dx)
            if lo >= hi:
                continue
            taps.append((ky * 3 + kx, off + dy * W + dx,
                         lo if lo > 0 else None,
                         hi if hi < W else None))
    return taps


def _taps_need_col(taps):
    return any(lo is not None or hi is not None for _, _, lo, hi in taps)


def _is_degenerate(taps):
    """True iff the 3x3 conv collapses to its unmasked centre tap (1x1 conv)."""
    return (len(taps) == 1 and taps[0][0] == 4
            and taps[0][2] is None and taps[0][3] is None)


def _flat_col_index(M, W):
    """(M,1) f32 output-column index built in-kernel (no DMA'd index array).
    floor((i+0.5)/W) is robust to reciprocal rounding for any W."""
    row = jax.lax.broadcasted_iota(jnp.int32, (M, 1), 0).astype(jnp.float32)
    q = jnp.floor((row + 0.5) * (1.0 / W))
    return row - q * W


def _tap_matmul(src_ref, w_ref, taps, M, col):
    """Implicit-GEMM 3x3 conv off a zero-padded flat (L, Cin) slab: sum of
    shifted (M,Cin)@(Cin,Cout) MXU dots.  Horizontal-boundary taps mask the
    bf16 input slab (cheaper than masking the f32 MXU result)."""
    acc = None
    for k, start, lo, hi in taps:
        slab = src_ref[pl.ds(start, M), :]
        if lo is not None or hi is not None:
            cond = None
            if lo is not None:
                cond = col >= float(lo)
            if hi is not None:
                c2 = col < float(hi)
                cond = c2 if cond is None else jnp.logical_and(cond, c2)
            slab = jnp.where(cond, slab, jnp.zeros_like(slab))
        contrib = jnp.dot(slab, w_ref[k], preferred_element_type=jnp.float32)
        acc = contrib if acc is None else acc + contrib
    return acc


def _write_stats(s_ref, acc, C):
    ssum = jnp.sum(acc, axis=0, keepdims=True)
    ssq = jnp.sum(acc * acc, axis=0, keepdims=True)
    s_ref[0, 0] = jnp.broadcast_to(ssum, (8, C))
    s_ref[0, 1] = jnp.broadcast_to(ssq, (8, C))


def _bn_scale_shift(stats, gamma, beta, count):
    """Training-mode BatchNorm scale/shift from per-batch partial sums (hoisted
    out of the kernels; tiny wrapper reduction over (N,2,8,C))."""
    tot = jnp.sum(stats, axis=(0, 2))                 # (2, C)
    inv = 1.0 / (8.0 * count)                         # stats broadcast over 8 sublanes
    mean = tot[0] * inv
    var = jnp.maximum(tot[1] * inv - mean * mean, 0.0)
    scale = gamma * jax.lax.rsqrt(var + _BN_EPS)
    return scale, beta - mean * scale


def _tile2(v):
    """(C,) -> (1,1,2C): BN affine tiled over the width-pair lane axis."""
    return jnp.concatenate([v, v]).reshape(1, 1, -1)


def _group_for_pool(t_flat, H, W, C):
    """(N, H*W, C) row-major -> (N, H//2, 2, W//2, 2C): height-pair on a leading
    dim, width-pair folded into the lane axis (no sublane-2 block dims)."""
    return t_flat.reshape(t_flat.shape[0], H // 2, 2, W // 2, 2 * C)


# ---------------------------------------------------------------------------
# kernel 1: first conv as a dense im2col matmul + bias + BN partial stats
# ---------------------------------------------------------------------------
def conv1_im2col_stats(x_cols, w, b):
    """x_cols: (N, M, K) bf16 im2col of the 3x3/s1/p1 first conv; w: (K, C) bf16;
    b: (1, C) f32.  Returns pre-BN map (N, M, C) bf16 and per-batch BN partial
    stats (N, 2, 8, C) f32 (sum / sum-of-squares, broadcast over 8 sublanes)."""
    N, M, K = x_cols.shape
    C = w.shape[-1]

    def kernel(x_ref, w_ref, b_ref, t_ref, s_ref):
        acc = jnp.dot(x_ref[0], w_ref[...],
                      preferred_element_type=jnp.float32) + b_ref[...]
        t_ref[0] = acc.astype(t_ref.dtype)
        _write_stats(s_ref, acc, C)

    return pl.pallas_call(
        kernel,
        grid=(N,),
        out_shape=(jax.ShapeDtypeStruct((N, M, C), jnp.bfloat16),
                   jax.ShapeDtypeStruct((N, 2, 8, C), jnp.float32)),
        in_specs=[
            pl.BlockSpec((1, M, K), lambda n: (n, 0, 0)),
            pl.BlockSpec((K, C), lambda n: (0, 0)),
            pl.BlockSpec((1, C), lambda n: (0, 0)),
        ],
        out_specs=(pl.BlockSpec((1, M, C), lambda n: (n, 0, 0)),
                   pl.BlockSpec((1, 2, 8, C), lambda n: (n, 0, 0, 0))),
        compiler_params=_COMPILER_PARAMS,
    )(x_cols, w, b)


# ---------------------------------------------------------------------------
# kernel 2: BN + ReLU + 2x2 max-pool fused into the next 3x3 conv
# ---------------------------------------------------------------------------
def bn_pool_conv3x3(t6, scale2, shift2, w9, bias, Hp, Wp, C):
    """t6: (N, Hp, 2, Wp, 2C) bf16 producer pre-BN map grouped for pooling
    (pooled size Hp x Wp); scale2/shift2: (1,1,2C) f32 hoisted BN affine tiled
    over the width-pair lanes; w9: (9, C, C) bf16; bias: (1, C) f32.
    BN+ReLU+pool is written to a zero-padded VMEM scratch and the 3x3/s1/p1
    conv runs as an implicit GEMM off that scratch (no HBM round trip).
    Returns the consumer pre-BN map (N, Hp*Wp, C) bf16 + BN partial stats."""
    N = t6.shape[0]
    M = Hp * Wp
    off = _round_up(Wp + 1, 8)                 # interior offset >= d*(Wp+1), d=1
    L = off + M + (Wp + 1)
    taps = _conv_taps(Hp, Wp, 1, off)
    need_col = _taps_need_col(taps)

    def kernel(t_ref, sc_ref, sh_ref, w_ref, b_ref, t2_ref, s_ref, xpad_ref):
        # ---- BN (hoisted) + ReLU + 2x2 max-pool into the zero-padded scratch
        xpad_ref[...] = jnp.zeros_like(xpad_ref)
        v = t_ref[0]                                        # (Hp, 2, Wp, 2C)
        sc = sc_ref[...]
        sh = sh_ref[...]
        ze = jnp.maximum(v[:, 0, :, :].astype(jnp.float32) * sc + sh, 0.0)
        zo = jnp.maximum(v[:, 1, :, :].astype(jnp.float32) * sc + sh, 0.0)
        h = jnp.maximum(ze, zo)                             # (Hp, Wp, 2C)
        pooled = jnp.maximum(h[:, :, :C], h[:, :, C:]).astype(jnp.bfloat16)
        for r in range(Hp):
            xpad_ref[pl.ds(off + r * Wp, Wp), :] = pooled[r]
        # ---- 3x3 conv (implicit GEMM off the scratch) + bias
        col = _flat_col_index(M, Wp) if need_col else None
        acc = _tap_matmul(xpad_ref, w_ref, taps, M, col) + b_ref[...]
        t2_ref[0] = acc.astype(t2_ref.dtype)
        _write_stats(s_ref, acc, C)

    return pl.pallas_call(
        kernel,
        grid=(N,),
        out_shape=(jax.ShapeDtypeStruct((N, M, C), jnp.bfloat16),
                   jax.ShapeDtypeStruct((N, 2, 8, C), jnp.float32)),
        in_specs=[
            pl.BlockSpec((1, Hp, 2, Wp, 2 * C), lambda n: (n, 0, 0, 0, 0)),
            pl.BlockSpec((1, 1, 2 * C), lambda n: (0, 0, 0)),
            pl.BlockSpec((1, 1, 2 * C), lambda n: (0, 0, 0)),
            pl.BlockSpec((9, C, C), lambda n: (0, 0, 0)),
            pl.BlockSpec((1, C), lambda n: (0, 0)),
        ],
        out_specs=(pl.BlockSpec((1, M, C), lambda n: (n, 0, 0)),
                   pl.BlockSpec((1, 2, 8, C), lambda n: (n, 0, 0, 0))),
        scratch_shapes=[pltpu.VMEM((L, C), jnp.bfloat16)],
        compiler_params=_COMPILER_PARAMS,
    )(t6, scale2, shift2, w9, bias)


# ---------------------------------------------------------------------------
# kernel 3: BN + ReLU + 2x2 max-pool fused with the whole ASPP block
# ---------------------------------------------------------------------------
def bn_pool_aspp(t6, scale2, shift2, w_merged, w_gap, nd_weights, nd_dilations,
                 Hp, Wp, C):
    """Fused block-2 BN+ReLU+pool + ASPP with the 1x1 projection folded into
    every branch weight host-side.
      w_merged (C,C): aspp1 branch + every dilated branch that degenerates to a
        centre-tap 1x1 at this feature size, each pre-multiplied by its slab of
        aspp_conv1_w.
      w_gap (C,C): global-average-pool branch weight, also pre-projected
        (bilinear upsample of a 1x1 source with align_corners=True is an exact
        broadcast, so it is a per-image additive row).
      nd_weights: one (9,C,C) pre-projected tap weight per non-degenerate
        dilation (none at small feature sizes).
    Returns the pre-BN ASPP map (N, Hp*Wp, C) bf16 + per-batch BN stats."""
    N = t6.shape[0]
    M = Hp * Wp
    n_nd = len(nd_weights)
    if nd_dilations:
        off = _round_up(max(nd_dilations) * (Wp + 1), 8)
        L = off + M + max(nd_dilations) * (Wp + 1)
    else:
        off = 0
        L = M
    tapss = [_conv_taps(Hp, Wp, d, off) for d in nd_dilations]
    need_col = any(_taps_need_col(t) for t in tapss)
    inv_m = 1.0 / M

    def kernel(*refs):
        t_ref, sc_ref, sh_ref, wm_ref, wg_ref = refs[:5]
        wd_refs = refs[5:5 + n_nd]
        u_ref, s_ref = refs[5 + n_nd], refs[6 + n_nd]
        xpad_ref = refs[7 + n_nd]
        # ---- BN (hoisted) + ReLU + 2x2 max-pool into the zero-padded scratch
        xpad_ref[...] = jnp.zeros_like(xpad_ref)
        v = t_ref[0]                                        # (Hp, 2, Wp, 2C)
        sc = sc_ref[...]
        sh = sh_ref[...]
        ze = jnp.maximum(v[:, 0, :, :].astype(jnp.float32) * sc + sh, 0.0)
        zo = jnp.maximum(v[:, 1, :, :].astype(jnp.float32) * sc + sh, 0.0)
        h = jnp.maximum(ze, zo)
        pooled = jnp.maximum(h[:, :, :C], h[:, :, C:]).astype(jnp.bfloat16)
        for r in range(Hp):
            xpad_ref[pl.ds(off + r * Wp, Wp), :] = pooled[r]
        y = xpad_ref[pl.ds(off, M), :]                      # pooled map (M, C) bf16
        # ---- merged 1x1 branches (aspp1 + degenerate dilated branches)
        acc = jnp.dot(y, wm_ref[...], preferred_element_type=jnp.float32)
        # ---- non-degenerate dilated branches (implicit GEMM, pre-projected)
        col = _flat_col_index(M, Wp) if need_col else None
        for j in range(n_nd):
            acc = acc + _tap_matmul(xpad_ref, wd_refs[j], tapss[j], M, col)
        # ---- global-average-pool branch: per-image additive row
        gap = jnp.sum(y.astype(jnp.float32), axis=0, keepdims=True) * inv_m
        acc = acc + jnp.dot(gap.astype(jnp.bfloat16), wg_ref[...],
                            preferred_element_type=jnp.float32)
        u_ref[0] = acc.astype(u_ref.dtype)
        _write_stats(s_ref, acc, C)

    in_specs = [
        pl.BlockSpec((1, Hp, 2, Wp, 2 * C), lambda n: (n, 0, 0, 0, 0)),
        pl.BlockSpec((1, 1, 2 * C), lambda n: (0, 0, 0)),
        pl.BlockSpec((1, 1, 2 * C), lambda n: (0, 0, 0)),
        pl.BlockSpec((C, C), lambda n: (0, 0)),
        pl.BlockSpec((C, C), lambda n: (0, 0)),
    ] + [pl.BlockSpec((9, C, C), lambda n: (0, 0, 0)) for _ in range(n_nd)]

    return pl.pallas_call(
        kernel,
        grid=(N,),
        out_shape=(jax.ShapeDtypeStruct((N, M, C), jnp.bfloat16),
                   jax.ShapeDtypeStruct((N, 2, 8, C), jnp.float32)),
        in_specs=in_specs,
        out_specs=(pl.BlockSpec((1, M, C), lambda n: (n, 0, 0)),
                   pl.BlockSpec((1, 2, 8, C), lambda n: (n, 0, 0, 0))),
        scratch_shapes=[pltpu.VMEM((L, C), jnp.bfloat16)],
        compiler_params=_COMPILER_PARAMS,
    )(t6, scale2, shift2, w_merged, w_gap, *nd_weights)


# ---------------------------------------------------------------------------
# kernel 4: ASPP BN + ReLU + global-average-pool + classifier (batched)
# ---------------------------------------------------------------------------
def aspp_head(u, scale, shift, cls_w, cls_b):
    """Pool hoisted before the 1x1 classifier conv (they commute exactly), so
    the classifier is a single batched (N,C)@(C,Ccls) matmul in one grid step."""
    N, M, C = u.shape
    Ccls = cls_w.shape[-1]
    inv_m = 1.0 / M

    def kernel(u_ref, sc_ref, sh_ref, w_ref, b_ref, o_ref):
        z = jnp.maximum(u_ref[...].astype(jnp.float32) * sc_ref[...] + sh_ref[...],
                        0.0)                                  # (N, M, C)
        pooled = jnp.sum(z, axis=1) * inv_m                   # (N, C)
        o_ref[...] = jnp.dot(pooled.astype(jnp.bfloat16), w_ref[...],
                             preferred_element_type=jnp.float32) + b_ref[...]

    return pl.pallas_call(
        kernel,
        grid=(1,),
        out_shape=jax.ShapeDtypeStruct((N, Ccls), jnp.float32),
        in_specs=[
            pl.BlockSpec((N, M, C), lambda i: (0, 0, 0)),
            pl.BlockSpec((1, 1, C), lambda i: (0, 0, 0)),
            pl.BlockSpec((1, 1, C), lambda i: (0, 0, 0)),
            pl.BlockSpec((C, Ccls), lambda i: (0, 0)),
            pl.BlockSpec((1, Ccls), lambda i: (0, 0)),
        ],
        out_specs=pl.BlockSpec((N, Ccls), lambda i: (0, 0)),
        compiler_params=pltpu.CompilerParams(
            dimension_semantics=("arbitrary",),
            vmem_limit_bytes=32 * 1024 * 1024),
    )(u, scale, shift, cls_w, cls_b)


# ---------------------------------------------------------------------------
# parameters (deterministic, synthetic)
# ---------------------------------------------------------------------------
def init_params(key, num_classes=251):
    ks = jax.random.split(key, 18)
    n = lambda k, shape, s=0.05: (s * jax.random.normal(k, shape)).astype(jnp.float32)
    p = {}
    p["conv1_w"] = n(ks[0], (3, 3, 3, 32))          # (KH,KW,Cin,Cout)
    p["conv1_b"] = n(ks[1], (32,))
    p["bn1_g"] = 1.0 + n(ks[2], (32,))
    p["bn1_b"] = n(ks[3], (32,))
    p["conv2_w"] = n(ks[4], (3, 3, 32, 64))
    p["conv2_b"] = n(ks[5], (64,))
    p["bn2_g"] = 1.0 + n(ks[6], (64,))
    p["bn2_b"] = n(ks[7], (64,))
    p["aspp1_w"] = n(ks[8], (64, 128))
    p["aspp2_w"] = n(ks[9], (3, 3, 64, 128))
    p["aspp3_w"] = n(ks[10], (3, 3, 64, 128))
    p["aspp4_w"] = n(ks[11], (3, 3, 64, 128))
    p["aspp_gap_w"] = n(ks[12], (64, 128))
    p["aspp_conv1_w"] = n(ks[13], (640, 128))       # concat order x1..x5
    p["aspp_bn_g"] = 1.0 + n(ks[14], (128,))
    p["aspp_bn_b"] = n(ks[15], (128,))
    p["cls_w"] = n(ks[16], (128, num_classes))
    p["cls_b"] = n(ks[17], (num_classes,))
    return p


# ---------------------------------------------------------------------------
# forward
# ---------------------------------------------------------------------------
@functools.partial(jax.jit, static_argnames=("num_classes",))
def foodnet_aspp_forward(x_nchw, params, num_classes=251):
    p = params
    x = jnp.transpose(x_nchw, (0, 2, 3, 1)).astype(jnp.float32)     # NHWC
    N, H, W, Cin = x.shape
    assert H % 4 == 0 and W % 4 == 0, "two 2x2 max-pools need H, W divisible by 4"

    C = _LANES
    Ccls = _round_up(num_classes, _LANES)
    H1, W1 = H // 2, W // 2             # after pool 1 (conv2 feature size)
    H2, W2 = H1 // 2, W1 // 2           # after pool 2 (ASPP feature size)

    # ---- parameter packing: channels zero-padded to 128 lanes, bf16 MXU
    #      operands, f32 bias/BN affine.  Zero-padded channels stay exactly zero
    #      through conv + BN(batch stats) + ReLU (padded beta = 0).
    K1 = _round_up(9 * Cin, 32)
    w1 = _pad_to(p["conv1_w"].reshape(9 * Cin, 32), 0, K1)
    w1 = _pad_to(w1, 1, C).astype(jnp.bfloat16)                      # (K1, C)
    b1 = _pad_to(p["conv1_b"], 0, C).reshape(1, C)
    g1 = jnp.concatenate([p["bn1_g"], jnp.ones((C - 32,), jnp.float32)])
    be1 = _pad_to(p["bn1_b"], 0, C)

    w2 = _pad_to(_pad_to(p["conv2_w"].reshape(9, 32, 64), 1, C), 2, C).astype(jnp.bfloat16)
    b2 = _pad_to(p["conv2_b"], 0, C).reshape(1, C)
    g2 = jnp.concatenate([p["bn2_g"], jnp.ones((C - 64,), jnp.float32)])
    be2 = _pad_to(p["bn2_b"], 0, C)

    # ASPP: fold the 1x1 projection slab of each branch into the branch weight
    # (f32 host-side matmuls, bf16 at the end).  Dilations whose 3x3 degenerates
    # to a centre-tap 1x1 at this feature size (trace-time tap pruning) are
    # merged with the aspp1 branch into a single (C,C) matrix.
    slabs = p["aspp_conv1_w"].reshape(5, 128, 128)
    w_merged = _pad_to(p["aspp1_w"] @ slabs[0], 0, C)
    nd_weights, nd_dilations = [], []
    for j, d in enumerate((6, 12, 18)):
        w3 = p[f"aspp{j + 2}_w"].reshape(9, 64, 128)
        taps = _conv_taps(H2, W2, d, d * (W2 + 1))
        if _is_degenerate(taps):
            w_merged = w_merged + _pad_to(w3[4] @ slabs[j + 1], 0, C)
        else:
            folded = jnp.einsum("kio,oc->kic", w3, slabs[j + 1])
            nd_weights.append(_pad_to(folded, 1, C).astype(jnp.bfloat16))
            nd_dilations.append(d)
    w_merged = w_merged.astype(jnp.bfloat16)
    w_gap = _pad_to(p["aspp_gap_w"] @ slabs[4], 0, C).astype(jnp.bfloat16)
    ga = p["aspp_bn_g"].astype(jnp.float32)
    ba = p["aspp_bn_b"].astype(jnp.float32)

    wc = _pad_to(p["cls_w"], 1, Ccls).astype(jnp.bfloat16)
    bc = _pad_to(p["cls_b"], 0, Ccls).reshape(1, Ccls)

    # ---- block 1: first conv as a dense im2col matmul (+ BN partial stats)
    xp = jnp.pad(x, ((0, 0), (1, 1), (1, 1), (0, 0)))
    cols = [xp[:, ky:ky + H, kx:kx + W, :] for ky in range(3) for kx in range(3)]
    xim = jnp.concatenate(cols, axis=-1).reshape(N, H * W, 9 * Cin)
    xim = _pad_to(xim, 2, K1).astype(jnp.bfloat16)
    t1, st1 = conv1_im2col_stats(xim, w1, b1)

    # ---- block 2: BN1 + ReLU + pool fused into conv2 (+ BN2 partial stats)
    sc1, sh1 = _bn_scale_shift(st1, g1, be1, N * H * W)
    t2, st2 = bn_pool_conv3x3(_group_for_pool(t1, H, W, C),
                              _tile2(sc1), _tile2(sh1), w2, b2, H1, W1, C)

    # ---- ASPP: BN2 + ReLU + pool fused with all five branches + projection
    sc2, sh2 = _bn_scale_shift(st2, g2, be2, N * H1 * W1)
    u, stu = bn_pool_aspp(_group_for_pool(t2, H1, W1, C),
                          _tile2(sc2), _tile2(sh2), w_merged, w_gap,
                          nd_weights, nd_dilations, H2, W2, C)

    # ---- head: ASPP BN + ReLU + global average pool + classifier
    sca, sha = _bn_scale_shift(stu, ga, ba, N * H2 * W2)
    head = aspp_head(u, sca.reshape(1, 1, C), sha.reshape(1, 1, C), wc, bc)
    return head[:, :num_classes]


# ---------------------------------------------------------------------------
if __name__ == "__main__":
    key = jax.random.PRNGKey(0)
    k_x, k_p = jax.random.split(key)
    x = jax.random.normal(k_x, (2, 3, 16, 16), dtype=jnp.float32)   # NCHW like PyTorch
    params = init_params(k_p, num_classes=251)

    out = foodnet_aspp_forward(x, params, num_classes=251)
    out = jax.block_until_ready(out)
    assert out.shape == (2, 251), out.shape
    assert bool(jnp.all(jnp.isfinite(out)))
    print("KERNEL_OK")
</pallas_src>

<mosaic_0001>
module attributes {stable_mosaic.version = 11 : i64} {
  func.func @kernel(%arg0: i32, %arg1: memref<1x256x32xbf16, #tpu.memory_space<vmem>>, %arg2: memref<32x128xbf16, #tpu.memory_space<vmem>>, %arg3: memref<1x128xf32, #tpu.memory_space<vmem>>, %arg4: memref<1x256x128xbf16, #tpu.memory_space<vmem>>, %arg5: memref<1x2x8x128xf32, #tpu.memory_space<vmem>>) attributes {dimension_semantics = [#tpu.dimension_semantics<parallel>], iteration_bounds = array<i64: 2>, scalar_prefetch = 0 : i64, scratch_operands = 0 : i64, tpu.core_type = #tpu.core_type<tc>, window_params = [{transform_indices = @transform_0, window_bounds = array<i64: 1, 256, 32>}, {pipeline_mode = #tpu.pipeline_mode<synchronous>, transform_indices = @transform_1, window_bounds = array<i64: 32, 128>}, {pipeline_mode = #tpu.pipeline_mode<synchronous>, transform_indices = @transform_2, window_bounds = array<i64: 1, 128>}, {transform_indices = @transform_3, window_bounds = array<i64: 1, 256, 128>}, {transform_indices = @transform_4, window_bounds = array<i64: 1, 2, 8, 128>}]} {
    %c0 = arith.constant 0 : index
    %c0_0 = arith.constant 0 : index
    %c0_1 = arith.constant 0 : index
    %0 = vector.load %arg1[%c0, %c0_0, %c0_1] : memref<1x256x32xbf16, #tpu.memory_space<vmem>>, vector<1x256x32xbf16>
    %1 = vector.shape_cast %0 : vector<1x256x32xbf16> to vector<256x32xbf16>
    %c0_2 = arith.constant 0 : index
    %c0_3 = arith.constant 0 : index
    %2 = vector.load %arg2[%c0_2, %c0_3] : memref<32x128xbf16, #tpu.memory_space<vmem>>, vector<32x128xbf16>
    %cst = arith.constant dense<0.000000e+00> : vector<256x128xf32>
    %3 = tpu.matmul %1, %2, %cst {dimension_numbers = #tpu.dot_dimension_numbers<[1], [0], [0], [1], [0, 0, 1, 1], [], []>} : vector<256x32xbf16>, vector<32x128xbf16>, vector<256x128xf32> -> vector<256x128xf32>
    %c0_4 = arith.constant 0 : index
    %c0_5 = arith.constant 0 : index
    %4 = vector.load %arg3[%c0_4, %c0_5] : memref<1x128xf32, #tpu.memory_space<vmem>>, vector<1x128xf32>
    %5 = vector.broadcast %4 : vector<1x128xf32> to vector<256x128xf32>
    %6 = arith.addf %3, %5 : vector<256x128xf32>
    %7 = arith.truncf %6 : vector<256x128xf32> to vector<256x128xbf16>
    %c0_6 = arith.constant 0 : index
    %c0_7 = arith.constant 0 : index
    %c0_8 = arith.constant 0 : index
    %8 = vector.load %arg4[%c0_6, %c0_7, %c0_8] : memref<1x256x128xbf16, #tpu.memory_space<vmem>>, vector<1x256x128xbf16>
    %9 = vector.shape_cast %8 : vector<1x256x128xbf16> to vector<256x128xbf16>
    %10 = vector.shape_cast %7 : vector<256x128xbf16> to vector<1x256x128xbf16>
    tpu.vector_store %arg4[%c0_6, %c0_7, %c0_8], %10 {strides = array<i32>} : memref<1x256x128xbf16, #tpu.memory_space<vmem>>, vector<1x256x128xbf16>,
    %cst_9 = arith.constant dense<0.000000e+00> : vector<128xf32>
    %11 = vector.multi_reduction <add>, %6, %cst_9 [0] : vector<256x128xf32> to vector<128xf32>
    %12 = vector.shape_cast %11 : vector<128xf32> to vector<1x128xf32>
    %13 = arith.mulf %6, %6 : vector<256x128xf32>
    %cst_10 = arith.constant dense<0.000000e+00> : vector<128xf32>
    %14 = vector.multi_reduction <add>, %13, %cst_10 [0] : vector<256x128xf32> to vector<128xf32>
    %15 = vector.shape_cast %14 : vector<128xf32> to vector<1x128xf32>
    %16 = vector.shape_cast %12 : vector<1x128xf32> to vector<1x128xf32>
    %17 = vector.broadcast %16 : vector<1x128xf32> to vector<8x128xf32>
    %c0_11 = arith.constant 0 : index
    %c0_12 = arith.constant 0 : index
    %c0_13 = arith.constant 0 : index
    %c0_14 = arith.constant 0 : index
    %18 = vector.load %arg5[%c0_11, %c0_12, %c0_13, %c0_14] : memref<1x2x8x128xf32, #tpu.memory_space<vmem>>, vector<1x1x8x128xf32>
    %19 = vector.shape_cast %18 : vector<1x1x8x128xf32> to vector<8x128xf32>
    %20 = vector.shape_cast %17 : vector<8x128xf32> to vector<1x1x8x128xf32>
    tpu.vector_store %arg5[%c0_11, %c0_12, %c0_13, %c0_14], %20 {strides = array<i32>} : memref<1x2x8x128xf32, #tpu.memory_space<vmem>>, vector<1x1x8x128xf32>,
    %21 = vector.shape_cast %15 : vector<1x128xf32> to vector<1x128xf32>
    %22 = vector.broadcast %21 : vector<1x128xf32> to vector<8x128xf32>
    %c0_15 = arith.constant 0 : index
    %c1 = arith.constant 1 : index
    %c0_16 = arith.constant 0 : index
    %c0_17 = arith.constant 0 : index
    %23 = vector.load %arg5[%c0_15, %c1, %c0_16, %c0_17] : memref<1x2x8x128xf32, #tpu.memory_space<vmem>>, vector<1x1x8x128xf32>
    %24 = vector.shape_cast %23 : vector<1x1x8x128xf32> to vector<8x128xf32>
    %25 = vector.shape_cast %22 : vector<8x128xf32> to vector<1x1x8x128xf32>
    tpu.vector_store %arg5[%c0_15, %c1, %c0_16, %c0_17], %25 {strides = array<i32>} : memref<1x2x8x128xf32, #tpu.memory_space<vmem>>, vector<1x1x8x128xf32>,
    return
  }
  func.func @transform_0(%arg0: i32) -> (i32, i32, i32) {
    %c0_i32 = arith.constant 0 : i32
    %c0_i32_0 = arith.constant 0 : i32
    %c0_i32_1 = arith.constant 0 : i32
    return %arg0, %c0_i32, %c0_i32_0 : i32, i32, i32
  }
  func.func @transform_1(%arg0: i32) -> (i32, i32) {
    %c0_i32 = arith.constant 0 : i32
    %c0_i32_0 = arith.constant 0 : i32
    %c0_i32_1 = arith.constant 0 : i32
    return %c0_i32, %c0_i32_0 : i32, i32
  }
  func.func @transform_2(%arg0: i32) -> (i32, i32) {
    %c0_i32 = arith.constant 0 : i32
    %c0_i32_0 = arith.constant 0 : i32
    %c0_i32_1 = arith.constant 0 : i32
    return %c0_i32, %c0_i32_0 : i32, i32
  }
  func.func @transform_3(%arg0: i32) -> (i32, i32, i32) {
    %c0_i32 = arith.constant 0 : i32
    %c0_i32_0 = arith.constant 0 : i32
    %c0_i32_1 = arith.constant 0 : i32
    return %arg0, %c0_i32, %c0_i32_0 : i32, i32, i32
  }
  func.func @transform_4(%arg0: i32) -> (i32, i32, i32, i32) {
    %c0_i32 = arith.constant 0 : i32
    %c0_i32_0 = arith.constant 0 : i32
    %c0_i32_1 = arith.constant 0 : i32
    %c0_i32_2 = arith.constant 0 : i32
    return %arg0, %c0_i32, %c0_i32_0, %c0_i32_1 : i32, i32, i32, i32
  }
}

module attributes {stable_mosaic.version = 11 : i64} {
  func.func @kernel(%arg0: i32, %arg1: memref<1x8x2x8x256xbf16, #tpu.memory_space<vmem>>, %arg2: memref<1x1x256xf32, #tpu.memory_space<vmem>>, %arg3: memref<1x1x256xf32, #tpu.memory_space<vmem>>, %arg4: memref<9x128x128xbf16, #tpu.memory_space<vmem>>, %arg5: memref<1x128xf32, #tpu.memory_space<vmem>>, %arg6: memref<1x64x128xbf16, #tpu.memory_space<vmem>>, %arg7: memref<1x2x8x128xf32, #tpu.memory_space<vmem>>, %arg8: memref<89x128xbf16, #tpu.memory_space<vmem>>) attributes {dimension_semantics = [#tpu.dimension_semantics<parallel>], iteration_bounds = array<i64: 2>, scalar_prefetch = 0 : i64, scratch_operands = 1 : i64, tpu.core_type = #tpu.core_type<tc>, window_params = [{transform_indices = @transform_0, window_bounds = array<i64: 1, 8, 2, 8, 256>}, {pipeline_mode = #tpu.pipeline_mode<synchronous>, transform_indices = @transform_1, window_bounds = array<i64: 1, 1, 256>}, {pipeline_mode = #tpu.pipeline_mode<synchronous>, transform_indices = @transform_2, window_bounds = array<i64: 1, 1, 256>}, {pipeline_mode = #tpu.pipeline_mode<synchronous>, transform_indices = @transform_3, window_bounds = array<i64: 9, 128, 128>}, {pipeline_mode = #tpu.pipeline_mode<synchronous>, transform_indices = @transform_4, window_bounds = array<i64: 1, 128>}, {transform_indices = @transform_5, window_bounds = array<i64: 1, 64, 128>}, {transform_indices = @transform_6, window_bounds = array<i64: 1, 2, 8, 128>}]} {
    %cst = arith.constant 0.000000e+00 : bf16
    %0 = vector.broadcast %cst : bf16 to vector<89x128xbf16>
    %c0 = arith.constant 0 : index
    %c0_0 = arith.constant 0 : index
    %1 = vector.load %arg8[%c0, %c0_0] : memref<89x128xbf16, #tpu.memory_space<vmem>>, vector<89x128xbf16>
    tpu.vector_store %arg8[%c0, %c0_0], %0 {strides = array<i32>} : memref<89x128xbf16, #tpu.memory_space<vmem>>, vector<89x128xbf16>,
    %c0_1 = arith.constant 0 : index
    %c0_2 = arith.constant 0 : index
    %c0_3 = arith.constant 0 : index
    %c0_4 = arith.constant 0 : index
    %c0_5 = arith.constant 0 : index
    %2 = vector.load %arg1[%c0_1, %c0_2, %c0_3, %c0_4, %c0_5] : memref<1x8x2x8x256xbf16, #tpu.memory_space<vmem>>, vector<1x8x2x8x256xbf16>
    %3 = vector.shape_cast %2 : vector<1x8x2x8x256xbf16> to vector<8x2x8x256xbf16>
    %c0_6 = arith.constant 0 : index
    %c0_7 = arith.constant 0 : index
    %c0_8 = arith.constant 0 : index
    %4 = vector.load %arg2[%c0_6, %c0_7, %c0_8] : memref<1x1x256xf32, #tpu.memory_space<vmem>>, vector<1x1x256xf32>
    %c0_9 = arith.constant 0 : index
    %c0_10 = arith.constant 0 : index
    %c0_11 = arith.constant 0 : index
    %5 = vector.load %arg3[%c0_9, %c0_10, %c0_11] : memref<1x1x256xf32, #tpu.memory_space<vmem>>, vector<1x1x256xf32>
    %6 = vector.extract_strided_slice %3 {offsets = [0, 0, 0, 0], sizes = [8, 1, 8, 256], strides = [1, 1, 1, 1]} : vector<8x2x8x256xbf16> to vector<8x1x8x256xbf16>
    %7 = vector.shape_cast %6 : vector<8x1x8x256xbf16> to vector<8x8x256xbf16>
    %8 = arith.extf %7 : vector<8x8x256xbf16> to vector<8x8x256xf32>
    %9 = vector.broadcast %4 : vector<1x1x256xf32> to vector<8x8x256xf32>
    %10 = arith.mulf %8, %9 : vector<8x8x256xf32>
    %11 = vector.broadcast %5 : vector<1x1x256xf32> to vector<8x8x256xf32>
    %12 = arith.addf %10, %11 : vector<8x8x256xf32>
    %cst_12 = arith.constant 0.000000e+00 : f32
    %13 = vector.broadcast %cst_12 : f32 to vector<8x8x256xf32>
    %14 = arith.maximumf %12, %13 : vector<8x8x256xf32>
    %15 = vector.extract_strided_slice %3 {offsets = [0, 1, 0, 0], sizes = [8, 1, 8, 256], strides = [1, 1, 1, 1]} : vector<8x2x8x256xbf16> to vector<8x1x8x256xbf16>
    %16 = vector.shape_cast %15 : vector<8x1x8x256xbf16> to vector<8x8x256xbf16>
    %17 = arith.extf %16 : vector<8x8x256xbf16> to vector<8x8x256xf32>
    %18 = vector.broadcast %4 : vector<1x1x256xf32> to vector<8x8x256xf32>
    %19 = arith.mulf %17, %18 : vector<8x8x256xf32>
    %20 = vector.broadcast %5 : vector<1x1x256xf32> to vector<8x8x256xf32>
    %21 = arith.addf %19, %20 : vector<8x8x256xf32>
    %cst_13 = arith.constant 0.000000e+00 : f32
    %22 = vector.broadcast %cst_13 : f32 to vector<8x8x256xf32>
    %23 = arith.maximumf %21, %22 : vector<8x8x256xf32>
    %24 = arith.maximumf %14, %23 : vector<8x8x256xf32>
    %25 = vector.extract_strided_slice %24 {offsets = [0, 0, 0], sizes = [8, 8, 128], strides = [1, 1, 1]} : vector<8x8x256xf32> to vector<8x8x128xf32>
    %26 = vector.extract_strided_slice %24 {offsets = [0, 0, 128], sizes = [8, 8, 128], strides = [1, 1, 1]} : vector<8x8x256xf32> to vector<8x8x128xf32>
    %27 = arith.maximumf %25, %26 : vector<8x8x128xf32>
    %28 = arith.truncf %27 : vector<8x8x128xf32> to vector<8x8x128xbf16>
    %29 = vector.extract_strided_slice %28 {offsets = [0, 0, 0], sizes = [1, 8, 128], strides = [1, 1, 1]} : vector<8x8x128xbf16> to vector<1x8x128xbf16>
    %30 = vector.shape_cast %29 : vector<1x8x128xbf16> to vector<8x128xbf16>
    %c16 = arith.constant 16 : index
    %c0_14 = arith.constant 0 : index
    %31 = vector.load %arg8[%c16, %c0_14] : memref<89x128xbf16, #tpu.memory_space<vmem>>, vector<8x128xbf16>
    tpu.vector_store %arg8[%c16, %c0_14], %30 {strides = array<i32>} : memref<89x128xbf16, #tpu.memory_space<vmem>>, vector<8x128xbf16>,
    %32 = vector.extract_strided_slice %28 {offsets = [1, 0, 0], sizes = [1, 8, 128], strides = [1, 1, 1]} : vector<8x8x128xbf16> to vector<1x8x128xbf16>
    %33 = vector.shape_cast %32 : vector<1x8x128xbf16> to vector<8x128xbf16>
    %c24 = arith.constant 24 : index
    %c0_15 = arith.constant 0 : index
    %34 = vector.load %arg8[%c24, %c0_15] : memref<89x128xbf16, #tpu.memory_space<vmem>>, vector<8x128xbf16>
    tpu.vector_store %arg8[%c24, %c0_15], %33 {strides = array<i32>} : memref<89x128xbf16, #tpu.memory_space<vmem>>, vector<8x128xbf16>,
    %35 = vector.extract_strided_slice %28 {offsets = [2, 0, 0], sizes = [1, 8, 128], strides = [1, 1, 1]} : vector<8x8x128xbf16> to vector<1x8x128xbf16>
    %36 = vector.shape_cast %35 : vector<1x8x128xbf16> to vector<8x128xbf16>
    %c32 = arith.constant 32 : index
    %c0_16 = arith.constant 0 : index
    %37 = vector.load %arg8[%c32, %c0_16] : memref<89x128xbf16, #tpu.memory_space<vmem>>, vector<8x128xbf16>
    tpu.vector_store %arg8[%c32, %c0_16], %36 {strides = array<i32>} : memref<89x128xbf16, #tpu.memory_space<vmem>>, vector<8x128xbf16>,
    %38 = vector.extract_strided_slice %28 {offsets = [3, 0, 0], sizes = [1, 8, 128], strides = [1, 1, 1]} : vector<8x8x128xbf16> to vector<1x8x128xbf16>
    %39 = vector.shape_cast %38 : vector<1x8x128xbf16> to vector<8x128xbf16>
    %c40 = arith.constant 40 : index
    %c0_17 = arith.constant 0 : index
    %40 = vector.load %arg8[%c40, %c0_17] : memref<89x128xbf16, #tpu.memory_space<vmem>>, vector<8x128xbf16>
    tpu.vector_store %arg8[%c40, %c0_17], %39 {strides = array<i32>} : memref<89x128xbf16, #tpu.memory_space<vmem>>, vector<8x128xbf16>,
    %41 = vector.extract_strided_slice %28 {offsets = [4, 0, 0], sizes = [1, 8, 128], strides = [1, 1, 1]} : vector<8x8x128xbf16> to vector<1x8x128xbf16>
    %42 = vector.shape_cast %41 : vector<1x8x128xbf16> to vector<8x128xbf16>
    %c48 = arith.constant 48 : index
    %c0_18 = arith.constant 0 : index
    %43 = vector.load %arg8[%c48, %c0_18] : memref<89x128xbf16, #tpu.memory_space<vmem>>, vector<8x128xbf16>
    tpu.vector_store %arg8[%c48, %c0_18], %42 {strides = array<i32>} : memref<89x128xbf16, #tpu.memory_space<vmem>>, vector<8x128xbf16>,
    %44 = vector.extract_strided_slice %28 {offsets = [5, 0, 0], sizes = [1, 8, 128], strides = [1, 1, 1]} : vector<8x8x128xbf16> to vector<1x8x128xbf16>
    %45 = vector.shape_cast %44 : vector<1x8x128xbf16> to vector<8x128xbf16>
    %c56 = arith.constant 56 : index
    %c0_19 = arith.constant 0 : index
    %46 = vector.load %arg8[%c56, %c0_19] : memref<89x128xbf16, #tpu.memory_space<vmem>>, vector<8x128xbf16>
    tpu.vector_store %arg8[%c56, %c0_19], %45 {strides = array<i32>} : memref<89x128xbf16, #tpu.memory_space<vmem>>, vector<8x128xbf16>,
    %47 = vector.extract_strided_slice %28 {offsets = [6, 0, 0], sizes = [1, 8, 128], strides = [1, 1, 1]} : vector<8x8x128xbf16> to vector<1x8x128xbf16>
    %48 = vector.shape_cast %47 : vector<1x8x128xbf16> to vector<8x128xbf16>
    %c64 = arith.constant 64 : index
    %c0_20 = arith.constant 0 : index
    %49 = vector.load %arg8[%c64, %c0_20] : memref<89x128xbf16, #tpu.memory_space<vmem>>, vector<8x128xbf16>
    tpu.vector_store %arg8[%c64, %c0_20], %48 {strides = array<i32>} : memref<89x128xbf16, #tpu.memory_space<vmem>>, vector<8x128xbf16>,
    %50 = vector.extract_strided_slice %28 {offsets = [7, 0, 0], sizes = [1, 8, 128], strides = [1, 1, 1]} : vector<8x8x128xbf16> to vector<1x8x128xbf16>
    %51 = vector.shape_cast %50 : vector<1x8x128xbf16> to vector<8x128xbf16>
    %c72 = arith.constant 72 : index
    %c0_21 = arith.constant 0 : index
    %52 = vector.load %arg8[%c72, %c0_21] : memref<89x128xbf16, #tpu.memory_space<vmem>>, vector<8x128xbf16>
    tpu.vector_store %arg8[%c72, %c0_21], %51 {strides = array<i32>} : memref<89x128xbf16, #tpu.memory_space<vmem>>, vector<8x128xbf16>,
    %53 = tpu.iota {dimensions = array<i32: 0>} : vector<64x1xi32>
    %54 = arith.sitofp %53 : vector<64x1xi32> to vector<64x1xf32>
    %cst_22 = arith.constant 5.000000e-01 : f32
    %55 = vector.broadcast %cst_22 : f32 to vector<64x1xf32>
    %56 = arith.addf %54, %55 : vector<64x1xf32>
    %cst_23 = arith.constant 1.250000e-01 : f32
    %57 = vector.broadcast %cst_23 : f32 to vector<64x1xf32>
    %58 = arith.mulf %56, %57 : vector<64x1xf32>
    %59 = math.floor %58 : vector<64x1xf32>
    %cst_24 = arith.constant 8.000000e+00 : f32
    %60 = vector.broadcast %cst_24 : f32 to vector<64x1xf32>
    %61 = arith.mulf %59, %60 : vector<64x1xf32>
    %62 = arith.subf %54, %61 : vector<64x1xf32>
    %c7 = arith.constant 7 : index
    %c0_25 = arith.constant 0 : index
    %63 = vector.load %arg8[%c7, %c0_25] : memref<89x128xbf16, #tpu.memory_space<vmem>>, vector<64x128xbf16>
    %cst_26 = arith.constant 1.000000e+00 : f32
    %64 = vector.broadcast %cst_26 : f32 to vector<64x1xf32>
    %65 = arith.cmpf oge, %62, %64 : vector<64x1xf32>
    %cst_27 = arith.constant 0.000000e+00 : bf16
    %66 = vector.broadcast %cst_27 : bf16 to vector<64x128xbf16>
    %67 = vector.shape_cast %65 : vector<64x1xi1> to vector<64x1xi1>
    %68 = vector.broadcast %67 : vector<64x1xi1> to vector<64x128xi1>
    %69 = arith.select %68, %63, %66 : vector<64x128xi1>, vector<64x128xbf16>
    %c0_28 = arith.constant 0 : index
    %c0_29 = arith.constant 0 : index
    %c0_30 = arith.constant 0 : index
    %70 = vector.load %arg4[%c0_28, %c0_29, %c0_30] : memref<9x128x128xbf16, #tpu.memory_space<vmem>>, vector<1x128x128xbf16>
    %71 = vector.shape_cast %70 : vector<1x128x128xbf16> to vector<128x128xbf16>
    %cst_31 = arith.constant dense<0.000000e+00> : vector<64x128xf32>
    %72 = tpu.matmul %69, %71, %cst_31 {dimension_numbers = #tpu.dot_dimension_numbers<[1], [0], [0], [1], [0, 0, 1, 1], [], []>} : vector<64x128xbf16>, vector<128x128xbf16>, vector<64x128xf32> -> vector<64x128xf32>
    %c8 = arith.constant 8 : index
    %c0_32 = arith.constant 0 : index
    %73 = vector.load %arg8[%c8, %c0_32] : memref<89x128xbf16, #tpu.memory_space<vmem>>, vector<64x128xbf16>
    %c1 = arith.constant 1 : index
    %c0_33 = arith.constant 0 : index
    %c0_34 = arith.constant 0 : index
    %74 = vector.load %arg4[%c1, %c0_33, %c0_34] : memref<9x128x128xbf16, #tpu.memory_space<vmem>>, vector<1x128x128xbf16>
    %75 = vector.shape_cast %74 : vector<1x128x128xbf16> to vector<128x128xbf16>
    %cst_35 = arith.constant dense<0.000000e+00> : vector<64x128xf32>
    %76 = tpu.matmul %73, %75, %cst_35 {dimension_numbers = #tpu.dot_dimension_numbers<[1], [0], [0], [1], [0, 0, 1, 1], [], []>} : vector<64x128xbf16>, vector<128x128xbf16>, vector<64x128xf32> -> vector<64x128xf32>
    %77 = arith.addf %72, %76 : vector<64x128xf32>
    %c9 = arith.constant 9 : index
    %c0_36 = arith.constant 0 : index
    %78 = vector.load %arg8[%c9, %c0_36] : memref<89x128xbf16, #tpu.memory_space<vmem>>, vector<64x128xbf16>
    %cst_37 = arith.constant 7.000000e+00 : f32
    %79 = vector.broadcast %cst_37 : f32 to vector<64x1xf32>
    %80 = arith.cmpf olt, %62, %79 : vector<64x1xf32>
    %cst_38 = arith.constant 0.000000e+00 : bf16
    %81 = vector.broadcast %cst_38 : bf16 to vector<64x128xbf16>
    %82 = vector.shape_cast %80 : vector<64x1xi1> to vector<64x1xi1>
    %83 = vector.broadcast %82 : vector<64x1xi1> to vector<64x128xi1>
    %84 = arith.select %83, %78, %81 : vector<64x128xi1>, vector<64x128xbf16>
    %c2 = arith.constant 2 : index
    %c0_39 = arith.constant 0 : index
    %c0_40 = arith.constant 0 : index
    %85 = vector.load %arg4[%c2, %c0_39, %c0_40] : memref<9x128x128xbf16, #tpu.memory_space<vmem>>, vector<1x128x128xbf16>
    %86 = vector.shape_cast %85 : vector<1x128x128xbf16> to vector<128x128xbf16>
    %cst_41 = arith.constant dense<0.000000e+00> : vector<64x128xf32>
    %87 = tpu.matmul %84, %86, %cst_41 {dimension_numbers = #tpu.dot_dimension_numbers<[1], [0], [0], [1], [0, 0, 1, 1], [], []>} : vector<64x128xbf16>, vector<128x128xbf16>, vector<64x128xf32> -> vector<64x128xf32>
    %88 = arith.addf %77, %87 : vector<64x128xf32>
    %c15 = arith.constant 15 : index
    %c0_42 = arith.constant 0 : index
    %89 = vector.load %arg8[%c15, %c0_42] : memref<89x128xbf16, #tpu.memory_space<vmem>>, vector<64x128xbf16>
    %cst_43 = arith.constant 1.000000e+00 : f32
    %90 = vector.broadcast %cst_43 : f32 to vector<64x1xf32>
    %91 = arith.cmpf oge, %62, %90 : vector<64x1xf32>
    %cst_44 = arith.constant 0.000000e+00 : bf16
    %92 = vector.broadcast %cst_44 : bf16 to vector<64x128xbf16>
    %93 = vector.shape_cast %91 : vector<64x1xi1> to vector<64x1xi1>
    %94 = vector.broadcast %93 : vector<64x1xi1> to vector<64x128xi1>
    %95 = arith.select %94, %89, %92 : vector<64x128xi1>, vector<64x128xbf16>
    %c3 = arith.constant 3 : index
    %c0_45 = arith.constant 0 : index
    %c0_46 = arith.constant 0 : index
    %96 = vector.load %arg4[%c3, %c0_45, %c0_46] : memref<9x128x128xbf16, #tpu.memory_space<vmem>>, vector<1x128x128xbf16>
    %97 = vector.shape_cast %96 : vector<1x128x128xbf16> to vector<128x128xbf16>
    %cst_47 = arith.constant dense<0.000000e+00> : vector<64x128xf32>
    %98 = tpu.matmul %95, %97, %cst_47 {dimension_numbers = #tpu.dot_dimension_numbers<[1], [0], [0], [1], [0, 0, 1, 1], [], []>} : vector<64x128xbf16>, vector<128x128xbf16>, vector<64x128xf32> -> vector<64x128xf32>
    %99 = arith.addf %88, %98 : vector<64x128xf32>
    %c16_48 = arith.constant 16 : index
    %c0_49 = arith.constant 0 : index
    %100 = vector.load %arg8[%c16_48, %c0_49] : memref<89x128xbf16, #tpu.memory_space<vmem>>, vector<64x128xbf16>
    %c4 = arith.constant 4 : index
    %c0_50 = arith.constant 0 : index
    %c0_51 = arith.constant 0 : index
    %101 = vector.load %arg4[%c4, %c0_50, %c0_51] : memref<9x128x128xbf16, #tpu.memory_space<vmem>>, vector<1x128x128xbf16>
    %102 = vector.shape_cast %101 : vector<1x128x128xbf16> to vector<128x128xbf16>
    %cst_52 = arith.constant dense<0.000000e+00> : vector<64x128xf32>
    %103 = tpu.matmul %100, %102, %cst_52 {dimension_numbers = #tpu.dot_dimension_numbers<[1], [0], [0], [1], [0, 0, 1, 1], [], []>} : vector<64x128xbf16>, vector<128x128xbf16>, vector<64x128xf32> -> vector<64x128xf32>
    %104 = arith.addf %99, %103 : vector<64x128xf32>
    %c17 = arith.constant 17 : index
    %c0_53 = arith.constant 0 : index
    %105 = vector.load %arg8[%c17, %c0_53] : memref<89x128xbf16, #tpu.memory_space<vmem>>, vector<64x128xbf16>
    %cst_54 = arith.constant 7.000000e+00 : f32
    %106 = vector.broadcast %cst_54 : f32 to vector<64x1xf32>
    %107 = arith.cmpf olt, %62, %106 : vector<64x1xf32>
    %cst_55 = arith.constant 0.000000e+00 : bf16
    %108 = vector.broadcast %cst_55 : bf16 to vector<64x128xbf16>
    %109 = vector.shape_cast %107 : vector<64x1xi1> to vector<64x1xi1>
    %110 = vector.broadcast %109 : vector<64x1xi1> to vector<64x128xi1>
    %111 = arith.select %110, %105, %108 : vector<64x128xi1>, vector<64x128xbf16>
    %c5 = arith.constant 5 : index
    %c0_56 = arith.constant 0 : index
    %c0_57 = arith.constant 0 : index
    %112 = vector.load %arg4[%c5, %c0_56, %c0_57] : memref<9x128x128xbf16, #tpu.memory_space<vmem>>, vector<1x128x128xbf16>
    %113 = vector.shape_cast %112 : vector<1x128x128xbf16> to vector<128x128xbf16>
    %cst_58 = arith.constant dense<0.000000e+00> : vector<64x128xf32>
    %114 = tpu.matmul %111, %113, %cst_58 {dimension_numbers = #tpu.dot_dimension_numbers<[1], [0], [0], [1], [0, 0, 1, 1], [], []>} : vector<64x128xbf16>, vector<128x128xbf16>, vector<64x128xf32> -> vector<64x128xf32>
    %115 = arith.addf %104, %114 : vector<64x128xf32>
    %c23 = arith.constant 23 : index
    %c0_59 = arith.constant 0 : index
    %116 = vector.load %arg8[%c23, %c0_59] : memref<89x128xbf16, #tpu.memory_space<vmem>>, vector<64x128xbf16>
    %cst_60 = arith.constant 1.000000e+00 : f32
    %117 = vector.broadcast %cst_60 : f32 to vector<64x1xf32>
    %118 = arith.cmpf oge, %62, %117 : vector<64x1xf32>
    %cst_61 = arith.constant 0.000000e+00 : bf16
    %119 = vector.broadcast %cst_61 : bf16 to vector<64x128xbf16>
    %120 = vector.shape_cast %118 : vector<64x1xi1> to vector<64x1xi1>
    %121 = vector.broadcast %120 : vector<64x1xi1> to vector<64x128xi1>
    %122 = arith.select %121, %116, %119 : vector<64x128xi1>, vector<64x128xbf16>
    %c6 = arith.constant 6 : index
    %c0_62 = arith.constant 0 : index
    %c0_63 = arith.constant 0 : index
    %123 = vector.load %arg4[%c6, %c0_62, %c0_63] : memref<9x128x128xbf16, #tpu.memory_space<vmem>>, vector<1x128x128xbf16>
    %124 = vector.shape_cast %123 : vector<1x128x128xbf16> to vector<128x128xbf16>
    %cst_64 = arith.constant dense<0.000000e+00> : vector<64x128xf32>
    %125 = tpu.matmul %122, %124, %cst_64 {dimension_numbers = #tpu.dot_dimension_numbers<[1], [0], [0], [1], [0, 0, 1, 1], [], []>} : vector<64x128xbf16>, vector<128x128xbf16>, vector<64x128xf32> -> vector<64x128xf32>
    %126 = arith.addf %115, %125 : vector<64x128xf32>
    %c24_65 = arith.constant 24 : index
    %c0_66 = arith.constant 0 : index
    %127 = vector.load %arg8[%c24_65, %c0_66] : memref<89x128xbf16, #tpu.memory_space<vmem>>, vector<64x128xbf16>
    %c7_67 = arith.constant 7 : index
    %c0_68 = arith.constant 0 : index
    %c0_69 = arith.constant 0 : index
    %128 = vector.load %arg4[%c7_67, %c0_68, %c0_69] : memref<9x128x128xbf16, #tpu.memory_space<vmem>>, vector<1x128x128xbf16>
    %129 = vector.shape_cast %128 : vector<1x128x128xbf16> to vector<128x128xbf16>
    %cst_70 = arith.constant dense<0.000000e+00> : vector<64x128xf32>
    %130 = tpu.matmul %127, %129, %cst_70 {dimension_numbers = #tpu.dot_dimension_numbers<[1], [0], [0], [1], [0, 0, 1, 1], [], []>} : vector<64x128xbf16>, vector<128x128xbf16>, vector<64x128xf32> -> vector<64x128xf32>
    %131 = arith.addf %126, %130 : vector<64x128xf32>
    %c25 = arith.constant 25 : index
    %c0_71 = arith.constant 0 : index
    %132 = vector.load %arg8[%c25, %c0_71] : memref<89x128xbf16, #tpu.memory_space<vmem>>, vector<64x128xbf16>
    %cst_72 = arith.constant 7.000000e+00 : f32
    %133 = vector.broadcast %cst_72 : f32 to vector<64x1xf32>
    %134 = arith.cmpf olt, %62, %133 : vector<64x1xf32>
    %cst_73 = arith.constant 0.000000e+00 : bf16
    %135 = vector.broadcast %cst_73 : bf16 to vector<64x128xbf16>
    %136 = vector.shape_cast %134 : vector<64x1xi1> to vector<64x1xi1>
    %137 = vector.broadcast %136 : vector<64x1xi1> to vector<64x128xi1>
    %138 = arith.select %137, %132, %135 : vector<64x128xi1>, vector<64x128xbf16>
    %c8_74 = arith.constant 8 : index
    %c0_75 = arith.constant 0 : index
    %c0_76 = arith.constant 0 : index
    %139 = vector.load %arg4[%c8_74, %c0_75, %c0_76] : memref<9x128x128xbf16, #tpu.memory_space<vmem>>, vector<1x128x128xbf16>
    %140 = vector.shape_cast %139 : vector<1x128x128xbf16> to vector<128x128xbf16>
    %cst_77 = arith.constant dense<0.000000e+00> : vector<64x128xf32>
    %141 = tpu.matmul %138, %140, %cst_77 {dimension_numbers = #tpu.dot_dimension_numbers<[1], [0], [0], [1], [0, 0, 1, 1], [], []>} : vector<64x128xbf16>, vector<128x128xbf16>, vector<64x128xf32> -> vector<64x128xf32>
    %142 = arith.addf %131, %141 : vector<64x128xf32>
    %c0_78 = arith.constant 0 : index
    %c0_79 = arith.constant 0 : index
    %143 = vector.load %arg5[%c0_78, %c0_79] : memref<1x128xf32, #tpu.memory_space<vmem>>, vector<1x128xf32>
    %144 = vector.broadcast %143 : vector<1x128xf32> to vector<64x128xf32>
    %145 = arith.addf %142, %144 : vector<64x128xf32>
    %146 = arith.truncf %145 : vector<64x128xf32> to vector<64x128xbf16>
    %c0_80 = arith.constant 0 : index
    %c0_81 = arith.constant 0 : index
    %c0_82 = arith.constant 0 : index
    %147 = vector.load %arg6[%c0_80, %c0_81, %c0_82] : memref<1x64x128xbf16, #tpu.memory_space<vmem>>, vector<1x64x128xbf16>
    %148 = vector.shape_cast %147 : vector<1x64x128xbf16> to vector<64x128xbf16>
    %149 = vector.shape_cast %146 : vector<64x128xbf16> to vector<1x64x128xbf16>
    tpu.vector_store %arg6[%c0_80, %c0_81, %c0_82], %149 {strides = array<i32>} : memref<1x64x128xbf16, #tpu.memory_space<vmem>>, vector<1x64x128xbf16>,
    %cst_83 = arith.constant dense<0.000000e+00> : vector<128xf32>
    %150 = vector.multi_reduction <add>, %145, %cst_83 [0] : vector<64x128xf32> to vector<128xf32>
    %151 = vector.shape_cast %150 : vector<128xf32> to vector<1x128xf32>
    %152 = arith.mulf %145, %145 : vector<64x128xf32>
    %cst_84 = arith.constant dense<0.000000e+00> : vector<128xf32>
    %153 = vector.multi_reduction <add>, %152, %cst_84 [0] : vector<64x128xf32> to vector<128xf32>
    %154 = vector.shape_cast %153 : vector<128xf32> to vector<1x128xf32>
    %155 = vector.shape_cast %151 : vector<1x128xf32> to vector<1x128xf32>
    %156 = vector.broadcast %155 : vector<1x128xf32> to vector<8x128xf32>
    %c0_85 = arith.constant 0 : index
    %c0_86 = arith.constant 0 : index
    %c0_87 = arith.constant 0 : index
    %c0_88 = arith.constant 0 : index
    %157 = vector.load %arg7[%c0_85, %c0_86, %c0_87, %c0_88] : memref<1x2x8x128xf32, #tpu.memory_space<vmem>>, vector<1x1x8x128xf32>
    %158 = vector.shape_cast %157 : vector<1x1x8x128xf32> to vector<8x128xf32>
    %159 = vector.shape_cast %156 : vector<8x128xf32> to vector<1x1x8x128xf32>
    tpu.vector_store %arg7[%c0_85, %c0_86, %c0_87, %c0_88], %159 {strides = array<i32>} : memref<1x2x8x128xf32, #tpu.memory_space<vmem>>, vector<1x1x8x128xf32>,
    %160 = vector.shape_cast %154 : vector<1x128xf32> to vector<1x128xf32>
    %161 = vector.broadcast %160 : vector<1x128xf32> to vector<8x128xf32>
    %c0_89 = arith.constant 0 : index
    %c1_90 = arith.constant 1 : index
    %c0_91 = arith.constant 0 : index
    %c0_92 = arith.constant 0 : index
    %162 = vector.load %arg7[%c0_89, %c1_90, %c0_91, %c0_92] : memref<1x2x8x128xf32, #tpu.memory_space<vmem>>, vector<1x1x8x128xf32>
    %163 = vector.shape_cast %162 : vector<1x1x8x128xf32> to vector<8x128xf32>
    %164 = vector.shape_cast %161 : vector<8x128xf32> to vector<1x1x8x128xf32>
    tpu.vector_store %arg7[%c0_89, %c1_90, %c0_91, %c0_92], %164 {strides = array<i32>} : memref<1x2x8x128xf32, #tpu.memory_space<vmem>>, vector<1x1x8x128xf32>,
    return
  }
  func.func @transform_0(%arg0: i32) -> (i32, i32, i32, i32, i32) {
    %c0_i32 = arith.constant 0 : i32
    %c0_i32_0 = arith.constant 0 : i32
    %c0_i32_1 = arith.constant 0 : i32
    %c0_i32_2 = arith.constant 0 : i32
    %c0_i32_3 = arith.constant 0 : i32
    return %arg0, %c0_i32, %c0_i32_0, %c0_i32_1, %c0_i32_2 : i32, i32, i32, i32, i32
  }
  func.func @transform_1(%arg0: i32) -> (i32, i32, i32) {
    %c0_i32 = arith.constant 0 : i32
    %c0_i32_0 = arith.constant 0 : i32
    %c0_i32_1 = arith.constant 0 : i32
    %c0_i32_2 = arith.constant 0 : i32
    return %c0_i32, %c0_i32_0, %c0_i32_1 : i32, i32, i32
  }
  func.func @transform_2(%arg0: i32) -> (i32, i32, i32) {
    %c0_i32 = arith.constant 0 : i32
    %c0_i32_0 = arith.constant 0 : i32
    %c0_i32_1 = arith.constant 0 : i32
    %c0_i32_2 = arith.constant 0 : i32
    return %c0_i32, %c0_i32_0, %c0_i32_1 : i32, i32, i32
  }
  func.func @transform_3(%arg0: i32) -> (i32, i32, i32) {
    %c0_i32 = arith.constant 0 : i32
    %c0_i32_0 = arith.constant 0 : i32
    %c0_i32_1 = arith.constant 0 : i32
    %c0_i32_2 = arith.constant 0 : i32
    return %c0_i32, %c0_i32_0, %c0_i32_1 : i32, i32, i32
  }
  func.func @transform_4(%arg0: i32) -> (i32, i32) {
    %c0_i32 = arith.constant 0 : i32
    %c0_i32_0 = arith.constant 0 : i32
    %c0_i32_1 = arith.constant 0 : i32
    return %c0_i32, %c0_i32_0 : i32, i32
  }
  func.func @transform_5(%arg0: i32) -> (i32, i32, i32) {
    %c0_i32 = arith.constant 0 : i32
    %c0_i32_0 = arith.constant 0 : i32
    %c0_i32_1 = arith.constant 0 : i32
    return %arg0, %c0_i32, %c0_i32_0 : i32, i32, i32
  }
  func.func @transform_6(%arg0: i32) -> (i32, i32, i32, i32) {
    %c0_i32 = arith.constant 0 : i32
    %c0_i32_0 = arith.constant 0 : i32
    %c0_i32_1 = arith.constant 0 : i32
    %c0_i32_2 = arith.constant 0 : i32
    return %arg0, %c0_i32, %c0_i32_0, %c0_i32_1 : i32, i32, i32, i32
  }
}

module attributes {stable_mosaic.version = 11 : i64} {
  func.func @kernel(%arg0: i32, %arg1: memref<1x4x2x4x256xbf16, #tpu.memory_space<vmem>>, %arg2: memref<1x1x256xf32, #tpu.memory_space<vmem>>, %arg3: memref<1x1x256xf32, #tpu.memory_space<vmem>>, %arg4: memref<128x128xbf16, #tpu.memory_space<vmem>>, %arg5: memref<128x128xbf16, #tpu.memory_space<vmem>>, %arg6: memref<1x16x128xbf16, #tpu.memory_space<vmem>>, %arg7: memref<1x2x8x128xf32, #tpu.memory_space<vmem>>, %arg8: memref<16x128xbf16, #tpu.memory_space<vmem>>) attributes {dimension_semantics = [#tpu.dimension_semantics<parallel>], iteration_bounds = array<i64: 2>, scalar_prefetch = 0 : i64, scratch_operands = 1 : i64, tpu.core_type = #tpu.core_type<tc>, window_params = [{transform_indices = @transform_0, window_bounds = array<i64: 1, 4, 2, 4, 256>}, {pipeline_mode = #tpu.pipeline_mode<synchronous>, transform_indices = @transform_1, window_bounds = array<i64: 1, 1, 256>}, {pipeline_mode = #tpu.pipeline_mode<synchronous>, transform_indices = @transform_2, window_bounds = array<i64: 1, 1, 256>}, {pipeline_mode = #tpu.pipeline_mode<synchronous>, transform_indices = @transform_3, window_bounds = array<i64: 128, 128>}, {pipeline_mode = #tpu.pipeline_mode<synchronous>, transform_indices = @transform_4, window_bounds = array<i64: 128, 128>}, {transform_indices = @transform_5, window_bounds = array<i64: 1, 16, 128>}, {transform_indices = @transform_6, window_bounds = array<i64: 1, 2, 8, 128>}]} {
    %cst = arith.constant 0.000000e+00 : bf16
    %0 = vector.broadcast %cst : bf16 to vector<16x128xbf16>
    %c0 = arith.constant 0 : index
    %c0_0 = arith.constant 0 : index
    %1 = vector.load %arg8[%c0, %c0_0] : memref<16x128xbf16, #tpu.memory_space<vmem>>, vector<16x128xbf16>
    tpu.vector_store %arg8[%c0, %c0_0], %0 {strides = array<i32>} : memref<16x128xbf16, #tpu.memory_space<vmem>>, vector<16x128xbf16>,
    %c0_1 = arith.constant 0 : index
    %c0_2 = arith.constant 0 : index
    %c0_3 = arith.constant 0 : index
    %c0_4 = arith.constant 0 : index
    %c0_5 = arith.constant 0 : index
    %2 = vector.load %arg1[%c0_1, %c0_2, %c0_3, %c0_4, %c0_5] : memref<1x4x2x4x256xbf16, #tpu.memory_space<vmem>>, vector<1x4x2x4x256xbf16>
    %3 = vector.shape_cast %2 : vector<1x4x2x4x256xbf16> to vector<4x2x4x256xbf16>
    %c0_6 = arith.constant 0 : index
    %c0_7 = arith.constant 0 : index
    %c0_8 = arith.constant 0 : index
    %4 = vector.load %arg2[%c0_6, %c0_7, %c0_8] : memref<1x1x256xf32, #tpu.memory_space<vmem>>, vector<1x1x256xf32>
    %c0_9 = arith.constant 0 : index
    %c0_10 = arith.constant 0 : index
    %c0_11 = arith.constant 0 : index
    %5 = vector.load %arg3[%c0_9, %c0_10, %c0_11] : memref<1x1x256xf32, #tpu.memory_space<vmem>>, vector<1x1x256xf32>
    %6 = vector.extract_strided_slice %3 {offsets = [0, 0, 0, 0], sizes = [4, 1, 4, 256], strides = [1, 1, 1, 1]} : vector<4x2x4x256xbf16> to vector<4x1x4x256xbf16>
    %7 = vector.shape_cast %6 : vector<4x1x4x256xbf16> to vector<4x4x256xbf16>
    %8 = arith.extf %7 : vector<4x4x256xbf16> to vector<4x4x256xf32>
    %9 = vector.broadcast %4 : vector<1x1x256xf32> to vector<4x4x256xf32>
    %10 = arith.mulf %8, %9 : vector<4x4x256xf32>
    %11 = vector.broadcast %5 : vector<1x1x256xf32> to vector<4x4x256xf32>
    %12 = arith.addf %10, %11 : vector<4x4x256xf32>
    %cst_12 = arith.constant 0.000000e+00 : f32
    %13 = vector.broadcast %cst_12 : f32 to vector<4x4x256xf32>
    %14 = arith.maximumf %12, %13 : vector<4x4x256xf32>
    %15 = vector.extract_strided_slice %3 {offsets = [0, 1, 0, 0], sizes = [4, 1, 4, 256], strides = [1, 1, 1, 1]} : vector<4x2x4x256xbf16> to vector<4x1x4x256xbf16>
    %16 = vector.shape_cast %15 : vector<4x1x4x256xbf16> to vector<4x4x256xbf16>
    %17 = arith.extf %16 : vector<4x4x256xbf16> to vector<4x4x256xf32>
    %18 = vector.broadcast %4 : vector<1x1x256xf32> to vector<4x4x256xf32>
    %19 = arith.mulf %17, %18 : vector<4x4x256xf32>
    %20 = vector.broadcast %5 : vector<1x1x256xf32> to vector<4x4x256xf32>
    %21 = arith.addf %19, %20 : vector<4x4x256xf32>
    %cst_13 = arith.constant 0.000000e+00 : f32
    %22 = vector.broadcast %cst_13 : f32 to vector<4x4x256xf32>
    %23 = arith.maximumf %21, %22 : vector<4x4x256xf32>
    %24 = arith.maximumf %14, %23 : vector<4x4x256xf32>
    %25 = vector.extract_strided_slice %24 {offsets = [0, 0, 0], sizes = [4, 4, 128], strides = [1, 1, 1]} : vector<4x4x256xf32> to vector<4x4x128xf32>
    %26 = vector.extract_strided_slice %24 {offsets = [0, 0, 128], sizes = [4, 4, 128], strides = [1, 1, 1]} : vector<4x4x256xf32> to vector<4x4x128xf32>
    %27 = arith.maximumf %25, %26 : vector<4x4x128xf32>
    %28 = arith.truncf %27 : vector<4x4x128xf32> to vector<4x4x128xbf16>
    %29 = vector.extract_strided_slice %28 {offsets = [0, 0, 0], sizes = [1, 4, 128], strides = [1, 1, 1]} : vector<4x4x128xbf16> to vector<1x4x128xbf16>
    %30 = vector.shape_cast %29 : vector<1x4x128xbf16> to vector<4x128xbf16>
    %c0_14 = arith.constant 0 : index
    %c0_15 = arith.constant 0 : index
    %31 = vector.load %arg8[%c0_14, %c0_15] : memref<16x128xbf16, #tpu.memory_space<vmem>>, vector<4x128xbf16>
    tpu.vector_store %arg8[%c0_14, %c0_15], %30 {strides = array<i32>} : memref<16x128xbf16, #tpu.memory_space<vmem>>, vector<4x128xbf16>,
    %32 = vector.extract_strided_slice %28 {offsets = [1, 0, 0], sizes = [1, 4, 128], strides = [1, 1, 1]} : vector<4x4x128xbf16> to vector<1x4x128xbf16>
    %33 = vector.shape_cast %32 : vector<1x4x128xbf16> to vector<4x128xbf16>
    %c4 = arith.constant 4 : index
    %c0_16 = arith.constant 0 : index
    %34 = vector.load %arg8[%c4, %c0_16] : memref<16x128xbf16, #tpu.memory_space<vmem>>, vector<4x128xbf16>
    tpu.vector_store %arg8[%c4, %c0_16], %33 {strides = array<i32>} : memref<16x128xbf16, #tpu.memory_space<vmem>>, vector<4x128xbf16>,
    %35 = vector.extract_strided_slice %28 {offsets = [2, 0, 0], sizes = [1, 4, 128], strides = [1, 1, 1]} : vector<4x4x128xbf16> to vector<1x4x128xbf16>
    %36 = vector.shape_cast %35 : vector<1x4x128xbf16> to vector<4x128xbf16>
    %c8 = arith.constant 8 : index
    %c0_17 = arith.constant 0 : index
    %37 = vector.load %arg8[%c8, %c0_17] : memref<16x128xbf16, #tpu.memory_space<vmem>>, vector<4x128xbf16>
    tpu.vector_store %arg8[%c8, %c0_17], %36 {strides = array<i32>} : memref<16x128xbf16, #tpu.memory_space<vmem>>, vector<4x128xbf16>,
    %38 = vector.extract_strided_slice %28 {offsets = [3, 0, 0], sizes = [1, 4, 128], strides = [1, 1, 1]} : vector<4x4x128xbf16> to vector<1x4x128xbf16>
    %39 = vector.shape_cast %38 : vector<1x4x128xbf16> to vector<4x128xbf16>
    %c12 = arith.constant 12 : index
    %c0_18 = arith.constant 0 : index
    %40 = vector.load %arg8[%c12, %c0_18] : memref<16x128xbf16, #tpu.memory_space<vmem>>, vector<4x128xbf16>
    tpu.vector_store %arg8[%c12, %c0_18], %39 {strides = array<i32>} : memref<16x128xbf16, #tpu.memory_space<vmem>>, vector<4x128xbf16>,
    %c0_19 = arith.constant 0 : index
    %c0_20 = arith.constant 0 : index
    %41 = vector.load %arg8[%c0_19, %c0_20] : memref<16x128xbf16, #tpu.memory_space<vmem>>, vector<16x128xbf16>
    %c0_21 = arith.constant 0 : index
    %c0_22 = arith.constant 0 : index
    %42 = vector.load %arg4[%c0_21, %c0_22] : memref<128x128xbf16, #tpu.memory_space<vmem>>, vector<128x128xbf16>
    %cst_23 = arith.constant dense<0.000000e+00> : vector<16x128xf32>
    %43 = tpu.matmul %41, %42, %cst_23 {dimension_numbers = #tpu.dot_dimension_numbers<[1], [0], [0], [1], [0, 0, 1, 1], [], []>} : vector<16x128xbf16>, vector<128x128xbf16>, vector<16x128xf32> -> vector<16x128xf32>
    %44 = arith.extf %41 : vector<16x128xbf16> to vector<16x128xf32>
    %cst_24 = arith.constant dense<0.000000e+00> : vector<128xf32>
    %45 = vector.multi_reduction <add>, %44, %cst_24 [0] : vector<16x128xf32> to vector<128xf32>
    %46 = vector.shape_cast %45 : vector<128xf32> to vector<1x128xf32>
    %cst_25 = arith.constant 6.250000e-02 : f32
    %47 = vector.broadcast %cst_25 : f32 to vector<1x128xf32>
    %48 = arith.mulf %46, %47 : vector<1x128xf32>
    %49 = arith.truncf %48 : vector<1x128xf32> to vector<1x128xbf16>
    %c0_26 = arith.constant 0 : index
    %c0_27 = arith.constant 0 : index
    %50 = vector.load %arg5[%c0_26, %c0_27] : memref<128x128xbf16, #tpu.memory_space<vmem>>, vector<128x128xbf16>
    %cst_28 = arith.constant dense<0.000000e+00> : vector<1x128xf32>
    %51 = tpu.matmul %49, %50, %cst_28 {dimension_numbers = #tpu.dot_dimension_numbers<[1], [0], [0], [1], [0, 0, 1, 1], [], []>} : vector<1x128xbf16>, vector<128x128xbf16>, vector<1x128xf32> -> vector<1x128xf32>
    %52 = vector.broadcast %51 : vector<1x128xf32> to vector<16x128xf32>
    %53 = arith.addf %43, %52 : vector<16x128xf32>
    %54 = arith.truncf %53 : vector<16x128xf32> to vector<16x128xbf16>
    %c0_29 = arith.constant 0 : index
    %c0_30 = arith.constant 0 : index
    %c0_31 = arith.constant 0 : index
    %55 = vector.load %arg6[%c0_29, %c0_30, %c0_31] : memref<1x16x128xbf16, #tpu.memory_space<vmem>>, vector<1x16x128xbf16>
    %56 = vector.shape_cast %55 : vector<1x16x128xbf16> to vector<16x128xbf16>
    %57 = vector.shape_cast %54 : vector<16x128xbf16> to vector<1x16x128xbf16>
    tpu.vector_store %arg6[%c0_29, %c0_30, %c0_31], %57 {strides = array<i32>} : memref<1x16x128xbf16, #tpu.memory_space<vmem>>, vector<1x16x128xbf16>,
    %cst_32 = arith.constant dense<0.000000e+00> : vector<128xf32>
    %58 = vector.multi_reduction <add>, %53, %cst_32 [0] : vector<16x128xf32> to vector<128xf32>
    %59 = vector.shape_cast %58 : vector<128xf32> to vector<1x128xf32>
    %60 = arith.mulf %53, %53 : vector<16x128xf32>
    %cst_33 = arith.constant dense<0.000000e+00> : vector<128xf32>
    %61 = vector.multi_reduction <add>, %60, %cst_33 [0] : vector<16x128xf32> to vector<128xf32>
    %62 = vector.shape_cast %61 : vector<128xf32> to vector<1x128xf32>
    %63 = vector.shape_cast %59 : vector<1x128xf32> to vector<1x128xf32>
    %64 = vector.broadcast %63 : vector<1x128xf32> to vector<8x128xf32>
    %c0_34 = arith.constant 0 : index
    %c0_35 = arith.constant 0 : index
    %c0_36 = arith.constant 0 : index
    %c0_37 = arith.constant 0 : index
    %65 = vector.load %arg7[%c0_34, %c0_35, %c0_36, %c0_37] : memref<1x2x8x128xf32, #tpu.memory_space<vmem>>, vector<1x1x8x128xf32>
    %66 = vector.shape_cast %65 : vector<1x1x8x128xf32> to vector<8x128xf32>
    %67 = vector.shape_cast %64 : vector<8x128xf32> to vector<1x1x8x128xf32>
    tpu.vector_store %arg7[%c0_34, %c0_35, %c0_36, %c0_37], %67 {strides = array<i32>} : memref<1x2x8x128xf32, #tpu.memory_space<vmem>>, vector<1x1x8x128xf32>,
    %68 = vector.shape_cast %62 : vector<1x128xf32> to vector<1x128xf32>
    %69 = vector.broadcast %68 : vector<1x128xf32> to vector<8x128xf32>
    %c0_38 = arith.constant 0 : index
    %c1 = arith.constant 1 : index
    %c0_39 = arith.constant 0 : index
    %c0_40 = arith.constant 0 : index
    %70 = vector.load %arg7[%c0_38, %c1, %c0_39, %c0_40] : memref<1x2x8x128xf32, #tpu.memory_space<vmem>>, vector<1x1x8x128xf32>
    %71 = vector.shape_cast %70 : vector<1x1x8x128xf32> to vector<8x128xf32>
    %72 = vector.shape_cast %69 : vector<8x128xf32> to vector<1x1x8x128xf32>
    tpu.vector_store %arg7[%c0_38, %c1, %c0_39, %c0_40], %72 {strides = array<i32>} : memref<1x2x8x128xf32, #tpu.memory_space<vmem>>, vector<1x1x8x128xf32>,
    return
  }
  func.func @transform_0(%arg0: i32) -> (i32, i32, i32, i32, i32) {
    %c0_i32 = arith.constant 0 : i32
    %c0_i32_0 = arith.constant 0 : i32
    %c0_i32_1 = arith.constant 0 : i32
    %c0_i32_2 = arith.constant 0 : i32
    %c0_i32_3 = arith.constant 0 : i32
    return %arg0, %c0_i32, %c0_i32_0, %c0_i32_1, %c0_i32_2 : i32, i32, i32, i32, i32
  }
  func.func @transform_1(%arg0: i32) -> (i32, i32, i32) {
    %c0_i32 = arith.constant 0 : i32
    %c0_i32_0 = arith.constant 0 : i32
    %c0_i32_1 = arith.constant 0 : i32
    %c0_i32_2 = arith.constant 0 : i32
    return %c0_i32, %c0_i32_0, %c0_i32_1 : i32, i32, i32
  }
  func.func @transform_2(%arg0: i32) -> (i32, i32, i32) {
    %c0_i32 = arith.constant 0 : i32
    %c0_i32_0 = arith.constant 0 : i32
    %c0_i32_1 = arith.constant 0 : i32
    %c0_i32_2 = arith.constant 0 : i32
    return %c0_i32, %c0_i32_0, %c0_i32_1 : i32, i32, i32
  }
  func.func @transform_3(%arg0: i32) -> (i32, i32) {
    %c0_i32 = arith.constant 0 : i32
    %c0_i32_0 = arith.constant 0 : i32
    %c0_i32_1 = arith.constant 0 : i32
    return %c0_i32, %c0_i32_0 : i32, i32
  }
  func.func @transform_4(%arg0: i32) -> (i32, i32) {
    %c0_i32 = arith.constant 0 : i32
    %c0_i32_0 = arith.constant 0 : i32
    %c0_i32_1 = arith.constant 0 : i32
    return %c0_i32, %c0_i32_0 : i32, i32
  }
  func.func @transform_5(%arg0: i32) -> (i32, i32, i32) {
    %c0_i32 = arith.constant 0 : i32
    %c0_i32_0 = arith.constant 0 : i32
    %c0_i32_1 = arith.constant 0 : i32
    return %arg0, %c0_i32, %c0_i32_0 : i32, i32, i32
  }
  func.func @transform_6(%arg0: i32) -> (i32, i32, i32, i32) {
    %c0_i32 = arith.constant 0 : i32
    %c0_i32_0 = arith.constant 0 : i32
    %c0_i32_1 = arith.constant 0 : i32
    %c0_i32_2 = arith.constant 0 : i32
    return %arg0, %c0_i32, %c0_i32_0, %c0_i32_1 : i32, i32, i32, i32
  }
}

module attributes {stable_mosaic.version = 11 : i64} {
  func.func @kernel(%arg0: i32, %arg1: memref<2x16x128xbf16, #tpu.memory_space<vmem>>, %arg2: memref<1x1x128xf32, #tpu.memory_space<vmem>>, %arg3: memref<1x1x128xf32, #tpu.memory_space<vmem>>, %arg4: memref<128x256xbf16, #tpu.memory_space<vmem>>, %arg5: memref<1x256xf32, #tpu.memory_space<vmem>>, %arg6: memref<2x256xf32, #tpu.memory_space<vmem>>) attributes {dimension_semantics = [#tpu.dimension_semantics<arbitrary>], iteration_bounds = array<i64: 1>, scalar_prefetch = 0 : i64, scratch_operands = 0 : i64, tpu.core_type = #tpu.core_type<tc>, window_params = [{pipeline_mode = #tpu.pipeline_mode<synchronous>, transform_indices = @transform_0, window_bounds = array<i64: 2, 16, 128>}, {pipeline_mode = #tpu.pipeline_mode<synchronous>, transform_indices = @transform_1, window_bounds = array<i64: 1, 1, 128>}, {pipeline_mode = #tpu.pipeline_mode<synchronous>, transform_indices = @transform_2, window_bounds = array<i64: 1, 1, 128>}, {pipeline_mode = #tpu.pipeline_mode<synchronous>, transform_indices = @transform_3, window_bounds = array<i64: 128, 256>}, {pipeline_mode = #tpu.pipeline_mode<synchronous>, transform_indices = @transform_4, window_bounds = array<i64: 1, 256>}, {pipeline_mode = #tpu.pipeline_mode<synchronous>, transform_indices = @transform_5, window_bounds = array<i64: 2, 256>}]} {
    %c0 = arith.constant 0 : index
    %c0_0 = arith.constant 0 : index
    %c0_1 = arith.constant 0 : index
    %0 = vector.load %arg1[%c0, %c0_0, %c0_1] : memref<2x16x128xbf16, #tpu.memory_space<vmem>>, vector<2x16x128xbf16>
    %1 = arith.extf %0 : vector<2x16x128xbf16> to vector<2x16x128xf32>
    %c0_2 = arith.constant 0 : index
    %c0_3 = arith.constant 0 : index
    %c0_4 = arith.constant 0 : index
    %2 = vector.load %arg2[%c0_2, %c0_3, %c0_4] : memref<1x1x128xf32, #tpu.memory_space<vmem>>, vector<1x1x128xf32>
    %3 = vector.broadcast %2 : vector<1x1x128xf32> to vector<2x16x128xf32>
    %4 = arith.mulf %1, %3 : vector<2x16x128xf32>
    %c0_5 = arith.constant 0 : index
    %c0_6 = arith.constant 0 : index
    %c0_7 = arith.constant 0 : index
    %5 = vector.load %arg3[%c0_5, %c0_6, %c0_7] : memref<1x1x128xf32, #tpu.memory_space<vmem>>, vector<1x1x128xf32>
    %6 = vector.broadcast %5 : vector<1x1x128xf32> to vector<2x16x128xf32>
    %7 = arith.addf %4, %6 : vector<2x16x128xf32>
    %cst = arith.constant 0.000000e+00 : f32
    %8 = vector.broadcast %cst : f32 to vector<2x16x128xf32>
    %9 = arith.maximumf %7, %8 : vector<2x16x128xf32>
    %cst_8 = arith.constant dense<0.000000e+00> : vector<2x128xf32>
    %10 = vector.multi_reduction <add>, %9, %cst_8 [1] : vector<2x16x128xf32> to vector<2x128xf32>
    %cst_9 = arith.constant 6.250000e-02 : f32
    %11 = vector.broadcast %cst_9 : f32 to vector<2x128xf32>
    %12 = arith.mulf %10, %11 : vector<2x128xf32>
    %13 = arith.truncf %12 : vector<2x128xf32> to vector<2x128xbf16>
    %c0_10 = arith.constant 0 : index
    %c0_11 = arith.constant 0 : index
    %14 = vector.load %arg4[%c0_10, %c0_11] : memref<128x256xbf16, #tpu.memory_space<vmem>>, vector<128x256xbf16>
    %cst_12 = arith.constant dense<0.000000e+00> : vector<2x256xf32>
    %15 = tpu.matmul %13, %14, %cst_12 {dimension_numbers = #tpu.dot_dimension_numbers<[1], [0], [0], [1], [0, 0, 1, 1], [], []>} : vector<2x128xbf16>, vector<128x256xbf16>, vector<2x256xf32> -> vector<2x256xf32>
    %c0_13 = arith.constant 0 : index
    %c0_14 = arith.constant 0 : index
    %16 = vector.load %arg5[%c0_13, %c0_14] : memref<1x256xf32, #tpu.memory_space<vmem>>, vector<1x256xf32>
    %17 = vector.broadcast %16 : vector<1x256xf32> to vector<2x256xf32>
    %18 = arith.addf %15, %17 : vector<2x256xf32>
    %c0_15 = arith.constant 0 : index
    %c0_16 = arith.constant 0 : index
    %19 = vector.load %arg6[%c0_15, %c0_16] : memref<2x256xf32, #tpu.memory_space<vmem>>, vector<2x256xf32>
    tpu.vector_store %arg6[%c0_15, %c0_16], %18 {strides = array<i32>} : memref<2x256xf32, #tpu.memory_space<vmem>>, vector<2x256xf32>,
    return
  }
  func.func @transform_0(%arg0: i32) -> (i32, i32, i32) {
    %c0_i32 = arith.constant 0 : i32
    %c0_i32_0 = arith.constant 0 : i32
    %c0_i32_1 = arith.constant 0 : i32
    %c0_i32_2 = arith.constant 0 : i32
    return %c0_i32, %c0_i32_0, %c0_i32_1 : i32, i32, i32
  }
  func.func @transform_1(%arg0: i32) -> (i32, i32, i32) {
    %c0_i32 = arith.constant 0 : i32
    %c0_i32_0 = arith.constant 0 : i32
    %c0_i32_1 = arith.constant 0 : i32
    %c0_i32_2 = arith.constant 0 : i32
    return %c0_i32, %c0_i32_0, %c0_i32_1 : i32, i32, i32
  }
  func.func @transform_2(%arg0: i32) -> (i32, i32, i32) {
    %c0_i32 = arith.constant 0 : i32
    %c0_i32_0 = arith.constant 0 : i32
    %c0_i32_1 = arith.constant 0 : i32
    %c0_i32_2 = arith.constant 0 : i32
    return %c0_i32, %c0_i32_0, %c0_i32_1 : i32, i32, i32
  }
  func.func @transform_3(%arg0: i32) -> (i32, i32) {
    %c0_i32 = arith.constant 0 : i32
    %c0_i32_0 = arith.constant 0 : i32
    %c0_i32_1 = arith.constant 0 : i32
    return %c0_i32, %c0_i32_0 : i32, i32
  }
  func.func @transform_4(%arg0: i32) -> (i32, i32) {
    %c0_i32 = arith.constant 0 : i32
    %c0_i32_0 = arith.constant 0 : i32
    %c0_i32_1 = arith.constant 0 : i32
    return %c0_i32, %c0_i32_0 : i32, i32
  }
  func.func @transform_5(%arg0: i32) -> (i32, i32) {
    %c0_i32 = arith.constant 0 : i32
    %c0_i32_0 = arith.constant 0 : i32
    %c0_i32_1 = arith.constant 0 : i32
    return %c0_i32, %c0_i32_0 : i32, i32
  }
}

</mosaic_0001>

<llo_original>
// kernel: foodnet_aspp_forward.4
$region0: #{foodnet_aspp_forward.4}
  #allocation0 [shape = 'u32[]', space=smem, size = 0x4, offset = 0x4, fixed_abs, tag = 'smem constant byte address 0x4 - core index']
  #allocation1 [shape = 'u32[144,128]{1,0:T(1,128)}', space=vmem, size = 0x12000, scoped, tag = 'internal scratch']
  %s0 = inlined_call_operand.vmem [shape: bf16[2,256,32], index: 0, kind: input, shape index: {}]
  %s1 = inlined_call_operand.vmem [shape: bf16[32,128], index: 1, kind: input, shape index: {}]
  %s2 = inlined_call_operand.vmem [shape: f32[1,128], index: 2, kind: input, shape index: {}]
  %s3 = inlined_call_operand.vmem [shape: bf16[2,256,128], index: 3, kind: output, shape index: {0}]
  %s4 = inlined_call_operand.vmem [shape: f32[2,2,8,128], index: 4, kind: output, shape index: {1}]
  %5 = xla_tuple %s3, %s4
  %s6 = sld [smem:[#allocation0]]
  $region53: #{foodnet_aspp_forward.4} parent=0
    _
  %s8 = ssub.s32 1, %s6
  %s9 = scalar_select 0, %s8, %s6
  loop: start=0, step=1, limit=4
  $region2: #{foodnet_aspp_forward.4} parent=0 // loop_pre_header
    _
  $region3: #{foodnet_aspp_forward.4} parent=0 // loop_header
    %s11 = sphi 0, %s15
    %p12 = scmp.ge.s32.totalorder %s11, 4
    %s21 = sphi 0, %s23
    %s24 = sphi 0, %s21
    %s25 = sphi 0, %s24
    %s41 = sphi 0, %s25
    %s45 = sphi 0, %s45
    %s47 = sphi 0, %s45
    %s48 = sphi 0, %s47
    %s62 = sphi 0, %s48
    %s66 = sphi 0, %s66
    %s68 = sphi 0, %s66
    %s69 = sphi 0, %s68
    %s83 = sphi 0, %s69
    %s89 = sphi 0, %s91
    %s92 = sphi 0, %s89
    %s93 = sphi 0, %s92
    %s109 = sphi 0, %s93
    %s115 = sphi 0, %s117
    %s118 = sphi 0, %s115
    %s119 = sphi 0, %s118
    %s135 = sphi 0, %s119
  $region4: #{foodnet_aspp_forward.4} parent=0 // loop_header_branch
    %14 = sbr.rel (%p12) target = $region8
  $region5: #{foodnet_aspp_forward.4} parent=0 // loop_body
    %s16 = ssub.s32 %s11, 1
    %s17 = ssub.s32 %s11, 2
    %s18 = sadd.s32 %s11, 1
    %s19 = ssub.s32 %s11, %s18
    %p20 = scmp.eq.s32.totalorder %s19, 0
    %s22 = sadd.s32 %s21, 1
    %s23 = scalar_select %p20, %s21, %s22
    %p26 = pneg %p20
    %p27 = scmp.eq.s32.totalorder %s11, 1
    %p28 = por %p26, %p27
    %p29 = scmp.ne.s32.totalorder %s21, %s24
    %p30 = scmp.eq.s32.totalorder %s11, 0
    %p31 = por %p29, %p30
    %p32 = scmp.ne.s32.totalorder %s21, %s24
    %p33 = scmp.eq.s32.totalorder %s16, 1
    %p34 = por %p32, %p33
    %p35 = scmp.ne.s32.totalorder %s24, %s25
    %p36 = scmp.eq.s32.totalorder %s16, 0
    %p37 = por %p35, %p36
    %p38 = scmp.ne.s32.totalorder %s24, %s25
    %p39 = scmp.eq.s32.totalorder %s17, 1
    %p40 = por %p38, %p39
    %p42 = scmp.ne.s32.totalorder %s25, %s41
    %p43 = scmp.eq.s32.totalorder %s17, 0
    %p44 = por %p42, %p43
    %s46 = sadd.s32 %s45, 1
    %p49 = scmp.eq.s32.totalorder %s11, 1
    %p50 = scmp.ne.s32.totalorder %s45, %s47
    %p51 = scmp.eq.s32.totalorder %s11, 0
    %p52 = por %p50, %p51
    %p53 = scmp.ne.s32.totalorder %s45, %s47
    %p54 = scmp.eq.s32.totalorder %s16, 1
    %p55 = por %p53, %p54
    %p56 = scmp.ne.s32.totalorder %s47, %s48
    %p57 = scmp.eq.s32.totalorder %s16, 0
    %p58 = por %p56, %p57
    %p59 = scmp.ne.s32.totalorder %s47, %s48
    %p60 = scmp.eq.s32.totalorder %s17, 1
    %p61 = por %p59, %p60
    %p63 = scmp.ne.s32.totalorder %s48, %s62
    %p64 = scmp.eq.s32.totalorder %s17, 0
    %p65 = por %p63, %p64
    %s67 = sadd.s32 %s66, 1
    %p70 = scmp.eq.s32.totalorder %s11, 1
    %p71 = scmp.ne.s32.totalorder %s66, %s68
    %p72 = scmp.eq.s32.totalorder %s11, 0
    %p73 = por %p71, %p72
    %p74 = scmp.ne.s32.totalorder %s66, %s68
    %p75 = scmp.eq.s32.totalorder %s16, 1
    %p76 = por %p74, %p75
    %p77 = scmp.ne.s32.totalorder %s68, %s69
    %p78 = scmp.eq.s32.totalorder %s16, 0
    %p79 = por %p77, %p78
    %p80 = scmp.ne.s32.totalorder %s68, %s69
    %p81 = scmp.eq.s32.totalorder %s17, 1
    %p82 = por %p80, %p81
    %p84 = scmp.ne.s32.totalorder %s69, %s83
    %p85 = scmp.eq.s32.totalorder %s17, 0
    %p86 = por %p84, %p85
    %s87 = ssub.s32 %s11, %s18
    %p88 = scmp.eq.s32.totalorder %s87, 0
    %s90 = sadd.s32 %s89, 1
    %s91 = scalar_select %p88, %s89, %s90
    %p94 = pneg %p88
    %p95 = scmp.eq.s32.totalorder %s11, 1
    %p96 = por %p94, %p95
    %p97 = scmp.ne.s32.totalorder %s89, %s92
    %p98 = scmp.eq.s32.totalorder %s11, 0
    %p99 = por %p97, %p98
    %p100 = scmp.ne.s32.totalorder %s89, %s92
    %p101 = scmp.eq.s32.totalorder %s16, 1
    %p102 = por %p100, %p101
    %p103 = scmp.ne.s32.totalorder %s92, %s93
    %p104 = scmp.eq.s32.totalorder %s16, 0
    %p105 = por %p103, %p104
    %p106 = scmp.ne.s32.totalorder %s92, %s93
    %p107 = scmp.eq.s32.totalorder %s17, 1
    %p108 = por %p106, %p107
    %p110 = scmp.ne.s32.totalorder %s93, %s109
    %p111 = scmp.eq.s32.totalorder %s17, 0
    %p112 = por %p110, %p111
    %s113 = ssub.s32 %s11, %s18
    %p114 = scmp.eq.s32.totalorder %s113, 0
    %s116 = sadd.s32 %s115, 1
    %s117 = scalar_select %p114, %s115, %s116
    %p120 = pneg %p114
    %p121 = scmp.eq.s32.totalorder %s11, 1
    %p122 = por %p120, %p121
    %p123 = scmp.ne.s32.totalorder %s115, %s118
    %p124 = scmp.eq.s32.totalorder %s11, 0
    %p125 = por %p123, %p124
    %p126 = scmp.ne.s32.totalorder %s115, %s118
    %p127 = scmp.eq.s32.totalorder %s16, 1
    %p128 = por %p126, %p127
    %p129 = scmp.ne.s32.totalorder %s118, %s119
    %p130 = scmp.eq.s32.totalorder %s16, 0
    %p131 = por %p129, %p130
    %p132 = scmp.ne.s32.totalorder %s118, %s119
    %p133 = scmp.eq.s32.totalorder %s17, 1
    %p134 = por %p132, %p133
    %p136 = scmp.ne.s32.totalorder %s119, %s135
    %p137 = scmp.eq.s32.totalorder %s17, 0
    %p138 = por %p136, %p137
    %p139 = scmp.le.s32.totalorder 1, %s11
    %p140 = scmp.lt.s32.totalorder %s11, 3
    %p141 = pnand %p139, %p140
    %p142 = pneg %p141
    // Predicated region
    $region9: #{foodnet_aspp_forward.4} parent=5 // pred_check
      _
    $region10: #{foodnet_aspp_forward.4} parent=5 // pred_check_branch
      %144 = sbr.rel (%p141) target = $region12
    $region11: #{foodnet_aspp_forward.4} parent=5 // pred_region
      %s145 = ssub.s32 %s11, 1
      // Predicated region
      $region13: #{foodnet_aspp_forward.4} parent=11 // pred_check
        %p146 = pneg %p58
      $region14: #{foodnet_aspp_forward.4} parent=11 // pred_check_branch
        %148 = sbr.rel (%p146) target = $region16
      $region15: #{foodnet_aspp_forward.4} parent=11 // pred_region
        _
      $region16: #{foodnet_aspp_forward.4} parent=11 // pred_fallthru
        _
      // Predicated region
      $region17: #{foodnet_aspp_forward.4} parent=11 // pred_check
        %p149 = pneg %p79
      $region18: #{foodnet_aspp_forward.4} parent=11 // pred_check_branch
        %151 = sbr.rel (%p149) target = $region20
      $region19: #{foodnet_aspp_forward.4} parent=11 // pred_region
        _
      $region20: #{foodnet_aspp_forward.4} parent=11 // pred_fallthru
        _
    $region12: #{foodnet_aspp_forward.4} parent=5 // pred_fallthru
      _
    %p152 = scmp.lt.s32.totalorder %s11, 2
    // Predicated region
    $region21: #{foodnet_aspp_forward.4} parent=5 // pred_check
      %p153 = pneg %p152
    $region22: #{foodnet_aspp_forward.4} parent=5 // pred_check_branch
      %155 = sbr.rel (%p153) target = $region24
    $region23: #{foodnet_aspp_forward.4} parent=5 // pred_region
      // Predicated region
      $region25: #{foodnet_aspp_forward.4} parent=23 // pred_check
        %p156 = pneg %p31
      $region26: #{foodnet_aspp_forward.4} parent=23 // pred_check_branch
        %158 = sbr.rel (%p156) target = $region28
      $region27: #{foodnet_aspp_forward.4} parent=23 // pred_region
        %p159 = scmp.lt.s32.totalorder %s11, 1
        %s160 = scalar_select %p159, %s11, 1
        %s161 = smul.addr %s160, 32
        %s162 = smul.addr %s161, 4
        %s163 = scalar_lea.vmem %s0, %s162
      $region28: #{foodnet_aspp_forward.4} parent=23 // pred_fallthru
        _
    $region24: #{foodnet_aspp_forward.4} parent=5 // pred_fallthru
      _
    %p164 = scmp.le.s32.totalorder 1, %s11
    %p165 = scmp.lt.s32.totalorder %s11, 3
    %p166 = pnand %p164, %p165
    %p167 = pneg %p166
    // Predicated region
    $region29: #{foodnet_aspp_forward.4} parent=5 // pred_check
      _
    $region30: #{foodnet_aspp_forward.4} parent=5 // pred_check_branch
      %169 = sbr.rel (%p166) target = $region32
    $region31: #{foodnet_aspp_forward.4} parent=5 // pred_region
      %s170 = ssub.s32 %s11, 1
      %p171 = scmp.lt.s32.totalorder %s16, 1
      %s172 = scalar_select %p171, %s16, 1
      %s173 = smul.addr %s172, 32
      %s174 = smul.addr %s173, 4
      %s175 = scalar_lea.vmem %s0, %s174
      %p176 = pneg %p37
      %p177 = pneg %p34
      %p178 = pneg %p58
      %p179 = pneg %p55
      %p180 = pneg %p79
      %p181 = pneg %p76
      %p182 = pneg %p105
      %p183 = pneg %p102
      %p184 = scmp.lt.s32.totalorder %s16, 1
      %s185 = scalar_select %p184, %s16, 1
      %s186 = smul.addr %s185, 32
      %s187 = smul.addr %s186, 4
      %s188 = scalar_lea.vmem %s3, %s187
      %p189 = pneg %p131
      %p190 = pneg %p128
      %p191 = scmp.lt.s32.totalorder %s16, 1
      %s192 = scalar_select %p191, %s16, 1
      %s193 = smul.addr %s192, 2
      %s194 = smul.addr %s193, 8
      %s195 = scalar_lea.vmem %s4, %s194
      %p196 = scmp.lt.s32.totalorder %s16, 1
      %s197 = scalar_select %p196, %s16, 1
      %s198 = smul.addr %s197, 32
      %s199 = smul.addr %s198, 4
      %s200 = scalar_lea.vmem %s0, %s199
      %p201 = scmp.lt.s32.totalorder %s16, 1
      %s202 = scalar_select %p201, %s16, 1
      %s203 = smul.addr %s202, 32
      %s204 = smul.addr %s203, 4
      %s205 = scalar_lea.vmem %s3, %s204
      %p206 = scmp.lt.s32.totalorder %s16, 1
      %s207 = scalar_select %p206, %s16, 1
      %s208 = smul.addr %s207, 2
      %s209 = smul.addr %s208, 8
      %s210 = scalar_lea.vmem %s4, %s209
      %v212 = vld [vmem:[%s200] sm:$0xf]
      %v213 = vld [vmem:[%s200 + $0x4] sm:$0xf]
      %v214 = vld [vmem:[%s200 + $0x8] sm:$0xf]
      %v215 = vld [vmem:[%s200 + $0xc] sm:$0xf]
      %v216 = vld [vmem:[%s200 + $0x10] sm:$0xf]
      %v217 = vld [vmem:[%s200 + $0x14] sm:$0xf]
      %v218 = vld [vmem:[%s200 + $0x18] sm:$0xf]
      %v219 = vld [vmem:[%s200 + $0x1c] sm:$0xf]
      %v220 = vld [vmem:[%s200 + $0x20] sm:$0xf]
      %v221 = vld [vmem:[%s200 + $0x24] sm:$0xf]
      %v222 = vld [vmem:[%s200 + $0x28] sm:$0xf]
      %v223 = vld [vmem:[%s200 + $0x2c] sm:$0xf]
      %v224 = vld [vmem:[%s200 + $0x30] sm:$0xf]
      %v225 = vld [vmem:[%s200 + $0x34] sm:$0xf]
      %v226 = vld [vmem:[%s200 + $0x38] sm:$0xf]
      %v227 = vld [vmem:[%s200 + $0x3c] sm:$0xf]
      %v228 = vld [vmem:[%s200 + $0x40] sm:$0xf]
      %v229 = vld [vmem:[%s200 + $0x44] sm:$0xf]
      %v230 = vld [vmem:[%s200 + $0x48] sm:$0xf]
      %v231 = vld [vmem:[%s200 + $0x4c] sm:$0xf]
      %v232 = vld [vmem:[%s200 + $0x50] sm:$0xf]
      %v233 = vld [vmem:[%s200 + $0x54] sm:$0xf]
      %v234 = vld [vmem:[%s200 + $0x58] sm:$0xf]
      %v235 = vld [vmem:[%s200 + $0x5c] sm:$0xf]
      %v236 = vld [vmem:[%s200 + $0x60] sm:$0xf]
      %v237 = vld [vmem:[%s200 + $0x64] sm:$0xf]
      %v238 = vld [vmem:[%s200 + $0x68] sm:$0xf]
      %v239 = vld [vmem:[%s200 + $0x6c] sm:$0xf]
      %v240 = vld [vmem:[%s200 + $0x70] sm:$0xf]
      %v241 = vld [vmem:[%s200 + $0x74] sm:$0xf]
      %v242 = vld [vmem:[%s200 + $0x78] sm:$0xf]
      %v243 = vld [vmem:[%s200 + $0x7c] sm:$0xf]
      %v244 = vld [vmem:[%s1] sm:$0xf]
      %v245 = vld [vmem:[%s1 + $0x4] sm:$0xf]
      %v246 = vld [vmem:[%s1 + $0x8] sm:$0xf]
      %v247 = vld [vmem:[%s1 + $0xc] sm:$0xf]
      %v248 = vld [vmem:[%s2] sm:$0x1]
      %v250 = vlaneseq
      %v251 = vshrl.u32 %v250, 7
      %v252 = vsub.s32 0, %v251
      %v253 = vrot.slane %v248, %v252
      %v287 = vunpack.c.l.b16 %v212
      %v288 = vunpack.c.l.b16 %v213
      %v289 = vunpack.c.l.b16 %v214
      %v290 = vunpack.c.l.b16 %v215
      %v291 = vunpack.c.l.b16 %v216
      %v292 = vunpack.c.l.b16 %v217
      %v293 = vunpack.c.l.b16 %v218
      %v294 = vunpack.c.l.b16 %v219
      %v295 = vunpack.c.l.b16 %v220
      %v296 = vunpack.c.l.b16 %v221
      %v297 = vunpack.c.l.b16 %v222
      %v298 = vunpack.c.l.b16 %v223
      %v299 = vunpack.c.l.b16 %v224
      %v300 = vunpack.c.l.b16 %v225
      %v301 = vunpack.c.l.b16 %v226
      %v302 = vunpack.c.l.b16 %v227
      %v303 = vunpack.c.l.b16 %v228
      %v304 = vunpack.c.l.b16 %v229
      %v305 = vunpack.c.l.b16 %v230
      %v306 = vunpack.c.l.b16 %v231
      %v307 = vunpack.c.l.b16 %v232
      %v308 = vunpack.c.l.b16 %v233
      %v309 = vunpack.c.l.b16 %v234
      %v310 = vunpack.c.l.b16 %v235
      %v311 = vunpack.c.l.b16 %v236
      %v312 = vunpack.c.l.b16 %v237
      %v313 = vunpack.c.l.b16 %v238
      %v314 = vunpack.c.l.b16 %v239
      %v315 = vunpack.c.l.b16 %v240
      %v316 = vunpack.c.l.b16 %v241
      %v317 = vunpack.c.l.b16 %v242
      %v318 = vunpack.c.l.b16 %v243
      %v319 = vpack.c.b16 %v288, %v287
      %v320 = vpack.c.b16 %v290, %v289
      %v321 = vpack.c.b16 %v292, %v291
      %v322 = vpack.c.b16 %v294, %v293
      %v323 = vpack.c.b16 %v296, %v295
      %v324 = vpack.c.b16 %v298, %v297
      %v325 = vpack.c.b16 %v300, %v299
      %v326 = vpack.c.b16 %v302, %v301
      %v327 = vpack.c.b16 %v304, %v303
      %v328 = vpack.c.b16 %v306, %v305
      %v329 = vpack.c.b16 %v308, %v307
      %v330 = vpack.c.b16 %v310, %v309
      %v331 = vpack.c.b16 %v312, %v311
      %v332 = vpack.c.b16 %v314, %v313
      %v333 = vpack.c.b16 %v316, %v315
      %v334 = vpack.c.b16 %v318, %v317
      %v339 = vunpack.c.l.b16 %v244
      %v340 = vunpack.c.l.b16 %v245
      %v341 = vunpack.c.l.b16 %v246
      %v342 = vunpack.c.l.b16 %v247
      %v343 = vpack.c.b16 %v340, %v339
      %v344 = vpack.c.b16 %v342, %v341
      %vm347 = vcmask 261120
      %v349 = vsel %vm347, %v319, 0
      %v352 = vsel %vm347, %v320, 0
      %v355 = vsel %vm347, %v321, 0
      %v358 = vsel %vm347, %v322, 0
      %v361 = vsel %vm347, %v323, 0
      %v364 = vsel %vm347, %v324, 0
      %v367 = vsel %vm347, %v325, 0
      %v370 = vsel %vm347, %v326, 0
      %v373 = vsel %vm347, %v327, 0
      %v376 = vsel %vm347, %v328, 0
      %v379 = vsel %vm347, %v329, 0
      %v382 = vsel %vm347, %v330, 0
      %v385 = vsel %vm347, %v331, 0
      %v388 = vsel %vm347, %v332, 0
      %v391 = vsel %vm347, %v333, 0
      %v394 = vsel %vm347, %v334, 0
      %396 = vmatprep.subr.bf16.mxu0 0
      %397 = vmatpush1.bf16.msra.mxu0 %v343
      %398 = vmatprep.subr.bf16.mxu0 0
      %399 = vmatpush1.bf16.msra.mxu0 %v344
      %400 = vmatprep.subr.bf16.mxu0 0
      %401 = vmatpush1.bf16.msra.mxu0 0
      %402 = vmatprep.subr.bf16.mxu0 0
      %403 = vmatpush1.bf16.msra.mxu0 0
      %404 = vmatprep.subr.bf16.mxu0 0
      %405 = vmatpush1.bf16.msra.mxu0 0
      %406 = vmatprep.subr.bf16.mxu0 0
      %407 = vmatpush1.bf16.msra.mxu0 0
      %408 = vmatprep.subr.bf16.mxu0 0
      %409 = vmatpush1.bf16.msra.mxu0 0
      %410 = vmatprep.subr.bf16.mxu0 0
      %411 = vmatpush1.bf16.msra.mxu0 0
      %412 = vmatprep.subr.bf16.mxu0 0
      %413 = vmatpush1.bf16.msra.mxu0 0
      %414 = vmatprep.subr.bf16.mxu0 0
      %415 = vmatpush1.bf16.msra.mxu0 0
      %416 = vmatprep.subr.bf16.mxu0 0
      %417 = vmatpush1.bf16.msra.mxu0 0
      %418 = vmatprep.subr.bf16.mxu0 0
      %419 = vmatpush1.bf16.msra.mxu0 0
      %420 = vmatprep.subr.bf16.mxu0 0
      %421 = vmatpush1.bf16.msra.mxu0 0
      %422 = vmatprep.subr.bf16.mxu0 0
      %423 = vmatpush1.bf16.msra.mxu0 0
      %424 = vmatprep.subr.bf16.mxu0 0
      %425 = vmatpush1.bf16.msra.mxu0 0
      %426 = vmatprep.subr.bf16.mxu0 0
      %427 = vmatpush1.bf16.msra.mxu0 0
      %428 = vmatprep.mubr.bf16.mxu0 0
      %429 = vmatmul.mubr.bf16.gmra.mrb[0].mxu0 %v349
      %v430 = vpop.f32.mrb[0].mxu0
      %v431 = vadd.f32 %v253, %v430
      %v432 = vpop.f32.mrb[0].mxu0
      %v433 = vpop.f32.mrb[0].mxu0
      %v434 = vadd.f32 %v253, %v433
      %v435 = vpop.f32.mrb[0].mxu0
      %436 = vmatprep.mubr.bf16.mxu0 0
      %437 = vmatmul.mubr.bf16.gmra.mrb[0].mxu0 %v352
      %v438 = vpop.f32.mrb[0].mxu0
      %v439 = vadd.f32 %v253, %v438
      %v440 = vpop.f32.mrb[0].mxu0
      %v441 = vpop.f32.mrb[0].mxu0
      %v442 = vadd.f32 %v253, %v441
      %v443 = vpop.f32.mrb[0].mxu0
      %444 = vmatprep.mubr.bf16.mxu0 0
      %445 = vmatmul.mubr.bf16.gmra.mrb[0].mxu0 %v355
      %v446 = vpop.f32.mrb[0].mxu0
      %v447 = vadd.f32 %v253, %v446
      %v448 = vpop.f32.mrb[0].mxu0
      %v449 = vpop.f32.mrb[0].mxu0
      %v450 = vadd.f32 %v253, %v449
      %v451 = vpop.f32.mrb[0].mxu0
      %452 = vmatprep.mubr.bf16.mxu0 0
      %453 = vmatmul.mubr.bf16.gmra.mrb[0].mxu0 %v358
      %v454 = vpop.f32.mrb[0].mxu0
      %v455 = vadd.f32 %v253, %v454
      %v456 = vpop.f32.mrb[0].mxu0
      %v457 = vpop.f32.mrb[0].mxu0
      %v458 = vadd.f32 %v253, %v457
      %v459 = vpop.f32.mrb[0].mxu0
      %460 = vmatprep.mubr.bf16.mxu0 0
      %461 = vmatmul.mubr.bf16.gmra.mrb[0].mxu0 %v361
      %v462 = vpop.f32.mrb[0].mxu0
      %v463 = vadd.f32 %v253, %v462
      %v464 = vpop.f32.mrb[0].mxu0
      %v465 = vpop.f32.mrb[0].mxu0
      %v466 = vadd.f32 %v253, %v465
      %v467 = vpop.f32.mrb[0].mxu0
      %468 = vmatprep.mubr.bf16.mxu0 0
      %469 = vmatmul.mubr.bf16.gmra.mrb[0].mxu0 %v364
      %v470 = vpop.f32.mrb[0].mxu0
      %v471 = vadd.f32 %v253, %v470
      %v472 = vpop.f32.mrb[0].mxu0
      %v473 = vpop.f32.mrb[0].mxu0
      %v474 = vadd.f32 %v253, %v473
      %v475 = vpop.f32.mrb[0].mxu0
      %476 = vmatprep.mubr.bf16.mxu0 0
      %477 = vmatmul.mubr.bf16.gmra.mrb[0].mxu0 %v367
      %v478 = vpop.f32.mrb[0].mxu0
      %v479 = vadd.f32 %v253, %v478
      %v480 = vpop.f32.mrb[0].mxu0
      %v481 = vpop.f32.mrb[0].mxu0
      %v482 = vadd.f32 %v253, %v481
      %v483 = vpop.f32.mrb[0].mxu0
      %484 = vmatprep.mubr.bf16.mxu0 0
      %485 = vmatmul.mubr.bf16.gmra.mrb[0].mxu0 %v370
      %v486 = vpop.f32.mrb[0].mxu0
      %v487 = vadd.f32 %v253, %v486
      %v488 = vpop.f32.mrb[0].mxu0
      %v489 = vpop.f32.mrb[0].mxu0
      %v490 = vadd.f32 %v253, %v489
      %v491 = vpop.f32.mrb[0].mxu0
      %492 = vmatprep.mubr.bf16.mxu0 0
      %493 = vmatmul.mubr.bf16.gmra.mrb[0].mxu0 %v373
      %v494 = vpop.f32.mrb[0].mxu0
      %v495 = vadd.f32 %v253, %v494
      %v496 = vpop.f32.mrb[0].mxu0
      %v497 = vpop.f32.mrb[0].mxu0
      %v498 = vadd.f32 %v253, %v497
      %v499 = vpop.f32.mrb[0].mxu0
      %500 = vmatprep.mubr.bf16.mxu0 0
      %501 = vmatmul.mubr.bf16.gmra.mrb[0].mxu0 %v376
      %v502 = vpop.f32.mrb[0].mxu0
      %v503 = vadd.f32 %v253, %v502
      %v504 = vpop.f32.mrb[0].mxu0
      %v505 = vpop.f32.mrb[0].mxu0
      %v506 = vadd.f32 %v253, %v505
      %v507 = vpop.f32.mrb[0].mxu0
      %508 = vmatprep.mubr.bf16.mxu0 0
      %509 = vmatmul.mubr.bf16.gmra.mrb[0].mxu0 %v379
      %v510 = vpop.f32.mrb[0].mxu0
      %v511 = vadd.f32 %v253, %v510
      %v512 = vpop.f32.mrb[0].mxu0
      %v513 = vpop.f32.mrb[0].mxu0
      %v514 = vadd.f32 %v253, %v513
      %v515 = vpop.f32.mrb[0].mxu0
      %516 = vmatprep.mubr.bf16.mxu0 0
      %517 = vmatmul.mubr.bf16.gmra.mrb[0].mxu0 %v382
      %v518 = vpop.f32.mrb[0].mxu0
      %v519 = vadd.f32 %v253, %v518
      %v520 = vpop.f32.mrb[0].mxu0
      %v521 = vpop.f32.mrb[0].mxu0
      %v522 = vadd.f32 %v253, %v521
      %v523 = vpop.f32.mrb[0].mxu0
      %524 = vmatprep.mubr.bf16.mxu0 0
      %525 = vmatmul.mubr.bf16.gmra.mrb[0].mxu0 %v385
      %v526 = vpop.f32.mrb[0].mxu0
      %v527 = vadd.f32 %v253, %v526
      %v528 = vpop.f32.mrb[0].mxu0
      %v529 = vpop.f32.mrb[0].mxu0
      %v530 = vadd.f32 %v253, %v529
      %v531 = vpop.f32.mrb[0].mxu0
      %532 = vmatprep.mubr.bf16.mxu0 0
      %533 = vmatmul.mubr.bf16.gmra.mrb[0].mxu0 %v388
      %v534 = vpop.f32.mrb[0].mxu0
      %v535 = vadd.f32 %v253, %v534
      %v536 = vpop.f32.mrb[0].mxu0
      %v537 = vpop.f32.mrb[0].mxu0
      %v538 = vadd.f32 %v253, %v537
      %v539 = vpop.f32.mrb[0].mxu0
      %540 = vmatprep.mubr.bf16.mxu0 0
      %541 = vmatmul.mubr.bf16.gmra.mrb[0].mxu0 %v391
      %v542 = vpop.f32.mrb[0].mxu0
      %v543 = vadd.f32 %v253, %v542
      %v544 = vpop.f32.mrb[0].mxu0
      %v545 = vpop.f32.mrb[0].mxu0
      %v546 = vadd.f32 %v253, %v545
      %v547 = vpop.f32.mrb[0].mxu0
      %548 = vmatprep.mubr.bf16.mxu0 0
      %549 = vmatmul.mubr.bf16.gmra.mrb[0].mxu0 %v394
      %v550 = vpop.f32.mrb[0].mxu0
      %v551 = vadd.f32 %v253, %v550
      %v552 = vpop.f32.mrb[0].mxu0
      %v553 = vpop.f32.mrb[0].mxu0
      %v554 = vadd.f32 %v253, %v553
      %v555 = vpop.f32.mrb[0].mxu0
      %556 = vdwg.mxu0
      %v557 = vpack.c.bf16 %v434, %v431
      %v558 = vpack.c.bf16 %v442, %v439
      %v559 = vpack.c.bf16 %v450, %v447
      %v560 = vpack.c.bf16 %v458, %v455
      %v561 = vpack.c.bf16 %v466, %v463
      %v562 = vpack.c.bf16 %v474, %v471
      %v563 = vpack.c.bf16 %v482, %v479
      %v564 = vpack.c.bf16 %v490, %v487
      %v565 = vpack.c.bf16 %v498, %v495
      %v566 = vpack.c.bf16 %v506, %v503
      %v567 = vpack.c.bf16 %v514, %v511
      %v568 = vpack.c.bf16 %v522, %v519
      %v569 = vpack.c.bf16 %v530, %v527
      %v570 = vpack.c.bf16 %v538, %v535
      %v571 = vpack.c.bf16 %v546, %v543
      %v572 = vpack.c.bf16 %v554, %v551
      %v589 = vunpack.c.l.b16 %v557
      %v590 = vunpack.c.h.b16 %v557
      %v591 = vunpack.c.l.b16 %v558
      %v592 = vunpack.c.h.b16 %v558
      %v593 = vunpack.c.l.b16 %v559
      %v594 = vunpack.c.h.b16 %v559
      %v595 = vunpack.c.l.b16 %v560
      %v596 = vunpack.c.h.b16 %v560
      %v597 = vunpack.c.l.b16 %v561
      %v598 = vunpack.c.h.b16 %v561
      %v599 = vunpack.c.l.b16 %v562
      %v600 = vunpack.c.h.b16 %v562
      %v601 = vunpack.c.l.b16 %v563
      %v602 = vunpack.c.h.b16 %v563
      %v603 = vunpack.c.l.b16 %v564
      %v604 = vunpack.c.h.b16 %v564
      %v605 = vunpack.c.l.b16 %v565
      %v606 = vunpack.c.h.b16 %v565
      %v607 = vunpack.c.l.b16 %v566
      %v608 = vunpack.c.h.b16 %v566
      %v609 = vunpack.c.l.b16 %v567
      %v610 = vunpack.c.h.b16 %v567
      %v611 = vunpack.c.l.b16 %v568
      %v612 = vunpack.c.h.b16 %v568
      %v613 = vunpack.c.l.b16 %v569
      %v614 = vunpack.c.h.b16 %v569
      %v615 = vunpack.c.l.b16 %v570
      %v616 = vunpack.c.h.b16 %v570
      %v617 = vunpack.c.l.b16 %v571
      %v618 = vunpack.c.h.b16 %v571
      %v619 = vunpack.c.l.b16 %v572
      %v620 = vunpack.c.h.b16 %v572
      %v621 = vpack.c.b16 %v589, %v589
      %v622 = vpack.c.b16 %v590, %v590
      %v623 = vpack.c.b16 %v591, %v591
      %v624 = vpack.c.b16 %v592, %v592
      %v625 = vpack.c.b16 %v593, %v593
      %v626 = vpack.c.b16 %v594, %v594
      %v627 = vpack.c.b16 %v595, %v595
      %v628 = vpack.c.b16 %v596, %v596
      %v629 = vpack.c.b16 %v597, %v597
      %v630 = vpack.c.b16 %v598, %v598
      %v631 = vpack.c.b16 %v599, %v599
      %v632 = vpack.c.b16 %v600, %v600
      %v633 = vpack.c.b16 %v601, %v601
      %v634 = vpack.c.b16 %v602, %v602
      %v635 = vpack.c.b16 %v603, %v603
      %v636 = vpack.c.b16 %v604, %v604
      %v637 = vpack.c.b16 %v605, %v605
      %v638 = vpack.c.b16 %v606, %v606
      %v639 = vpack.c.b16 %v607, %v607
      %v640 = vpack.c.b16 %v608, %v608
      %v641 = vpack.c.b16 %v609, %v609
      %v642 = vpack.c.b16 %v610, %v610
      %v643 = vpack.c.b16 %v611, %v611
      %v644 = vpack.c.b16 %v612, %v612
      %v645 = vpack.c.b16 %v613, %v613
      %v646 = vpack.c.b16 %v614, %v614
      %v647 = vpack.c.b16 %v615, %v615
      %v648 = vpack.c.b16 %v616, %v616
      %v649 = vpack.c.b16 %v617, %v617
      %v650 = vpack.c.b16 %v618, %v618
      %v651 = vpack.c.b16 %v619, %v619
      %v652 = vpack.c.b16 %v620, %v620
      %685 = vst [vmem:[%s205] sm:$0xf] %v621
      %686 = vst [vmem:[%s205 + $0x4] sm:$0xf] %v622
      %687 = vst [vmem:[%s205 + $0x8] sm:$0xf] %v623
      %688 = vst [vmem:[%s205 + $0xc] sm:$0xf] %v624
      %689 = vst [vmem:[%s205 + $0x10] sm:$0xf] %v625
      %690 = vst [vmem:[%s205 + $0x14] sm:$0xf] %v626
      %691 = vst [vmem:[%s205 + $0x18] sm:$0xf] %v627
      %692 = vst [vmem:[%s205 + $0x1c] sm:$0xf] %v628
      %693 = vst [vmem:[%s205 + $0x20] sm:$0xf] %v629
      %694 = vst [vmem:[%s205 + $0x24] sm:$0xf] %v630
      %695 = vst [vmem:[%s205 + $0x28] sm:$0xf] %v631
      %696 = vst [vmem:[%s205 + $0x2c] sm:$0xf] %v632
      %697 = vst [vmem:[%s205 + $0x30] sm:$0xf] %v633
      %698 = vst [vmem:[%s205 + $0x34] sm:$0xf] %v634
      %699 = vst [vmem:[%s205 + $0x38] sm:$0xf] %v635
      %700 = vst [vmem:[%s205 + $0x3c] sm:$0xf] %v636
      %701 = vst [vmem:[%s205 + $0x40] sm:$0xf] %v637
      %702 = vst [vmem:[%s205 + $0x44] sm:$0xf] %v638
      %703 = vst [vmem:[%s205 + $0x48] sm:$0xf] %v639
      %704 = vst [vmem:[%s205 + $0x4c] sm:$0xf] %v640
      %705 = vst [vmem:[%s205 + $0x50] sm:$0xf] %v641
      %706 = vst [vmem:[%s205 + $0x54] sm:$0xf] %v642
      %707 = vst [vmem:[%s205 + $0x58] sm:$0xf] %v643
      %708 = vst [vmem:[%s205 + $0x5c] sm:$0xf] %v644
      %709 = vst [vmem:[%s205 + $0x60] sm:$0xf] %v645
      %710 = vst [vmem:[%s205 + $0x64] sm:$0xf] %v646
      %711 = vst [vmem:[%s205 + $0x68] sm:$0xf] %v647
      %712 = vst [vmem:[%s205 + $0x6c] sm:$0xf] %v648
      %713 = vst [vmem:[%s205 + $0x70] sm:$0xf] %v649
      %714 = vst [vmem:[%s205 + $0x74] sm:$0xf] %v650
      %715 = vst [vmem:[%s205 + $0x78] sm:$0xf] %v651
      %716 = vst [vmem:[%s205 + $0x7c] sm:$0xf] %v652
      %v717 = vadd.f32 %v431, %v434
      %v718 = vadd.f32 %v717, %v439
      %v719 = vadd.f32 %v718, %v442
      %v720 = vadd.f32 %v719, %v447
      %v721 = vadd.f32 %v720, %v450
      %v722 = vadd.f32 %v721, %v455
      %v723 = vadd.f32 %v722, %v458
      %v724 = vadd.f32 %v723, %v463
      %v725 = vadd.f32 %v724, %v466
      %v726 = vadd.f32 %v725, %v471
      %v727 = vadd.f32 %v726, %v474
      %v728 = vadd.f32 %v727, %v479
      %v729 = vadd.f32 %v728, %v482
      %v730 = vadd.f32 %v729, %v487
      %v731 = vadd.f32 %v730, %v490
      %v732 = vadd.f32 %v731, %v495
      %v733 = vadd.f32 %v732, %v498
      %v734 = vadd.f32 %v733, %v503
      %v735 = vadd.f32 %v734, %v506
      %v736 = vadd.f32 %v735, %v511
      %v737 = vadd.f32 %v736, %v514
      %v738 = vadd.f32 %v737, %v519
      %v739 = vadd.f32 %v738, %v522
      %v740 = vadd.f32 %v739, %v527
      %v741 = vadd.f32 %v740, %v530
      %v742 = vadd.f32 %v741, %v535
      %v743 = vadd.f32 %v742, %v538
      %v744 = vadd.f32 %v743, %v543
      %v745 = vadd.f32 %v744, %v546
      %v746 = vadd.f32 %v745, %v551
      %v747 = vadd.f32 %v746, %v554
      %v748 = vrot.slane %v747, 4
      %v749 = vadd.f32 %v747, %v748
      %v750 = vrot.slane %v749, 2
      %v751 = vadd.f32 %v749, %v750
      %v752 = vrot.slane %v751, 1
      %v753 = vadd.f32 %v751, %v752
      %v754 = vmul.f32 %v431, %v431
      %v755 = vmul.f32 %v434, %v434
      %v756 = vmul.f32 %v439, %v439
      %v757 = vmul.f32 %v442, %v442
      %v758 = vmul.f32 %v447, %v447
      %v759 = vmul.f32 %v450, %v450
      %v760 = vmul.f32 %v455, %v455
      %v761 = vmul.f32 %v458, %v458
      %v762 = vmul.f32 %v463, %v463
      %v763 = vmul.f32 %v466, %v466
      %v764 = vmul.f32 %v471, %v471
      %v765 = vmul.f32 %v474, %v474
      %v766 = vmul.f32 %v479, %v479
      %v767 = vmul.f32 %v482, %v482
      %v768 = vmul.f32 %v487, %v487
      %v769 = vmul.f32 %v490, %v490
      %v770 = vmul.f32 %v495, %v495
      %v771 = vmul.f32 %v498, %v498
      %v772 = vmul.f32 %v503, %v503
      %v773 = vmul.f32 %v506, %v506
      %v774 = vmul.f32 %v511, %v511
      %v775 = vmul.f32 %v514, %v514
      %v776 = vmul.f32 %v519, %v519
      %v777 = vmul.f32 %v522, %v522
      %v778 = vmul.f32 %v527, %v527
      %v779 = vmul.f32 %v530, %v530
      %v780 = vmul.f32 %v535, %v535
      %v781 = vmul.f32 %v538, %v538
      %v782 = vmul.f32 %v543, %v543
      %v783 = vmul.f32 %v546, %v546
      %v784 = vmul.f32 %v551, %v551
      %v785 = vmul.f32 %v554, %v554
      %v786 = vadd.f32 %v754, %v755
      %v787 = vadd.f32 %v786, %v756
      %v788 = vadd.f32 %v787, %v757
      %v789 = vadd.f32 %v788, %v758
      %v790 = vadd.f32 %v789, %v759
      %v791 = vadd.f32 %v790, %v760
      %v792 = vadd.f32 %v791, %v761
      %v793 = vadd.f32 %v792, %v762
      %v794 = vadd.f32 %v793, %v763
      %v795 = vadd.f32 %v794, %v764
      %v796 = vadd.f32 %v795, %v765
      %v797 = vadd.f32 %v796, %v766
      %v798 = vadd.f32 %v797, %v767
      %v799 = vadd.f32 %v798, %v768
      %v800 = vadd.f32 %v799, %v769
      %v801 = vadd.f32 %v800, %v770
      %v802 = vadd.f32 %v801, %v771
      %v803 = vadd.f32 %v802, %v772
      %v804 = vadd.f32 %v803, %v773
      %v805 = vadd.f32 %v804, %v774
      %v806 = vadd.f32 %v805, %v775
      %v807 = vadd.f32 %v806, %v776
      %v808 = vadd.f32 %v807, %v777
      %v809 = vadd.f32 %v808, %v778
      %v810 = vadd.f32 %v809, %v779
      %v811 = vadd.f32 %v810, %v780
      %v812 = vadd.f32 %v811, %v781
      %v813 = vadd.f32 %v812, %v782
      %v814 = vadd.f32 %v813, %v783
      %v815 = vadd.f32 %v814, %v784
      %v816 = vadd.f32 %v815, %v785
      %v817 = vrot.slane %v816, 4
      %v818 = vadd.f32 %v816, %v817
      %v819 = vrot.slane %v818, 2
      %v820 = vadd.f32 %v818, %v819
      %v821 = vrot.slane %v820, 1
      %v822 = vadd.f32 %v820, %v821
      %823 = vst [vmem:[%s210] sm:$0xff] %v753
      %s824 = scalar_lea.vmem %s210, 8
      %825 = vst [vmem:[%s824] sm:$0xff] %v822
      %p826 = scmp.lt.s32.totalorder %s16, 1
      %s827 = scalar_select %p826, %s16, 1
      %s828 = smul.addr %s827, 32
      %s829 = smul.addr %s828, 4
      %s830 = scalar_lea.vmem %s3, %s829
      %p831 = scmp.lt.s32.totalorder %s16, 1
      %s832 = scalar_select %p831, %s16, 1
      %s833 = smul.addr %s832, 2
      %s834 = smul.addr %s833, 8
      %s835 = scalar_lea.vmem %s4, %s834
      // Predicated region
      $region33: #{foodnet_aspp_forward.4} parent=31 // pred_check
        %p836 = pneg %p102
      $region34: #{foodnet_aspp_forward.4} parent=31 // pred_check_branch
        %838 = sbr.rel (%p836) target = $region36
      $region35: #{foodnet_aspp_forward.4} parent=31 // pred_region
        _
      $region36: #{foodnet_aspp_forward.4} parent=31 // pred_fallthru
        _
      // Predicated region
      $region37: #{foodnet_aspp_forward.4} parent=31 // pred_check
        %p839 = pneg %p128
      $region38: #{foodnet_aspp_forward.4} parent=31 // pred_check_branch
        %841 = sbr.rel (%p839) target = $region40
      $region39: #{foodnet_aspp_forward.4} parent=31 // pred_region
        _
      $region40: #{foodnet_aspp_forward.4} parent=31 // pred_fallthru
        _
    $region32: #{foodnet_aspp_forward.4} parent=5 // pred_fallthru
      _
    %p842 = scmp.le.s32.totalorder 2, %s11
    // Predicated region
    $region41: #{foodnet_aspp_forward.4} parent=5 // pred_check
      %p843 = pneg %p842
    $region42: #{foodnet_aspp_forward.4} parent=5 // pred_check_branch
      %845 = sbr.rel (%p843) target = $region44
    $region43: #{foodnet_aspp_forward.4} parent=5 // pred_region
      %s846 = ssub.s32 %s11, 2
      // Predicated region
      $region45: #{foodnet_aspp_forward.4} parent=43 // pred_check
        %p847 = pneg %p108
      $region46: #{foodnet_aspp_forward.4} parent=43 // pred_check_branch
        %849 = sbr.rel (%p847) target = $region48
      $region47: #{foodnet_aspp_forward.4} parent=43 // pred_region
        %p850 = scmp.lt.s32.totalorder %s17, 1
        %s851 = scalar_select %p850, %s17, 1
        %s852 = smul.addr %s851, 32
        %s853 = smul.addr %s852, 4
        %s854 = scalar_lea.vmem %s3, %s853
      $region48: #{foodnet_aspp_forward.4} parent=43 // pred_fallthru
        _
      // Predicated region
      $region49: #{foodnet_aspp_forward.4} parent=43 // pred_check
        %p855 = pneg %p134
      $region50: #{foodnet_aspp_forward.4} parent=43 // pred_check_branch
        %857 = sbr.rel (%p855) target = $region52
      $region51: #{foodnet_aspp_forward.4} parent=43 // pred_region
        %p858 = scmp.lt.s32.totalorder %s17, 1
        %s859 = scalar_select %p858, %s17, 1
        %s860 = smul.addr %s859, 2
        %s861 = smul.addr %s860, 8
        %s862 = scalar_lea.vmem %s4, %s861
      $region52: #{foodnet_aspp_forward.4} parent=43 // pred_fallthru
        _
    $region44: #{foodnet_aspp_forward.4} parent=5 // pred_fallthru
      _
  $region6: #{foodnet_aspp_forward.4} parent=0 // loop_footer
    %s15 = sadd.s32 1, %s11
  $region7: #{foodnet_aspp_forward.4} parent=0 // loop_footer_branch
    %10 = sbr.rel target = $region3
  $region8: #{foodnet_aspp_forward.4} parent=0 // loop_exit
    _

// kernel: foodnet_aspp_forward.6
$region0: #{foodnet_aspp_forward.6}
  #allocation0 [shape = 'u32[]', space=smem, size = 0x4, offset = 0x4, fixed_abs, tag = 'smem constant byte address 0x4 - core index']
  #allocation1 [shape = 'u32[144,128]{1,0:T(1,128)}', space=vmem, size = 0x12000, scoped, tag = 'internal scratch']
  #allocation2 [shape = 'bf16[16,128]{1,0:T(16,128)(2,1)}', space=vmem, size = 0x1000, scoped, tag = 'scratch operand']
  %s0 = inlined_call_operand.vmem [shape: bf16[2,4,2,4,256], index: 0, kind: input, shape index: {}]
  %s1 = inlined_call_operand.vmem [shape: f32[1,1,256], index: 1, kind: input, shape index: {}]
  %s2 = inlined_call_operand.vmem [shape: f32[1,1,256], index: 2, kind: input, shape index: {}]
  %s3 = inlined_call_operand.vmem [shape: bf16[128,128], index: 3, kind: input, shape index: {}]
  %s4 = inlined_call_operand.vmem [shape: bf16[128,128], index: 4, kind: input, shape index: {}]
  %s5 = inlined_call_operand.vmem [shape: bf16[2,16,128], index: 5, kind: output, shape index: {0}]
  %s6 = inlined_call_operand.vmem [shape: f32[2,2,8,128], index: 6, kind: output, shape index: {1}]
  %7 = xla_tuple %s5, %s6
  %s8 = sld [smem:[#allocation0]]
  $region61: #{foodnet_aspp_forward.6} parent=0
    _
  %s10 = ssub.s32 1, %s8
  %s11 = scalar_select 0, %s10, %s8
  loop: start=0, step=1, limit=4
  $region2: #{foodnet_aspp_forward.6} parent=0 // loop_pre_header
    _
  $region3: #{foodnet_aspp_forward.6} parent=0 // loop_header
    %s13 = sphi 0, %s17
    %p14 = scmp.ge.s32.totalorder %s13, 4
    %s23 = sphi 0, %s25
    %s26 = sphi 0, %s23
    %s27 = sphi 0, %s26
    %s43 = sphi 0, %s27
    %s47 = sphi 0, %s47
    %s49 = sphi 0, %s47
    %s50 = sphi 0, %s49
    %s64 = sphi 0, %s50
    %s68 = sphi 0, %s68
    %s70 = sphi 0, %s68
    %s71 = sphi 0, %s70
    %s85 = sphi 0, %s71
    %s89 = sphi 0, %s89
    %s91 = sphi 0, %s89
    %s92 = sphi 0, %s91
    %s106 = sphi 0, %s92
    %s110 = sphi 0, %s110
    %s112 = sphi 0, %s110
    %s113 = sphi 0, %s112
    %s127 = sphi 0, %s113
    %s133 = sphi 0, %s135
    %s136 = sphi 0, %s133
    %s137 = sphi 0, %s136
    %s153 = sphi 0, %s137
    %s159 = sphi 0, %s161
    %s162 = sphi 0, %s159
    %s163 = sphi 0, %s162
    %s179 = sphi 0, %s163
  $region4: #{foodnet_aspp_forward.6} parent=0 // loop_header_branch
    %16 = sbr.rel (%p14) target = $region8
  $region5: #{foodnet_aspp_forward.6} parent=0 // loop_body
    %s18 = ssub.s32 %s13, 1
    %s19 = ssub.s32 %s13, 2
    %s20 = sadd.s32 %s13, 1
    %s21 = ssub.s32 %s13, %s20
    %p22 = scmp.eq.s32.totalorder %s21, 0
    %s24 = sadd.s32 %s23, 1
    %s25 = scalar_select %p22, %s23, %s24
    %p28 = pneg %p22
    %p29 = scmp.eq.s32.totalorder %s13, 1
    %p30 = por %p28, %p29
    %p31 = scmp.ne.s32.totalorder %s23, %s26
    %p32 = scmp.eq.s32.totalorder %s13, 0
    %p33 = por %p31, %p32
    %p34 = scmp.ne.s32.totalorder %s23, %s26
    %p35 = scmp.eq.s32.totalorder %s18, 1
    %p36 = por %p34, %p35
    %p37 = scmp.ne.s32.totalorder %s26, %s27
    %p38 = scmp.eq.s32.totalorder %s18, 0
    %p39 = por %p37, %p38
    %p40 = scmp.ne.s32.totalorder %s26, %s27
    %p41 = scmp.eq.s32.totalorder %s19, 1
    %p42 = por %p40, %p41
    %p44 = scmp.ne.s32.totalorder %s27, %s43
    %p45 = scmp.eq.s32.totalorder %s19, 0
    %p46 = por %p44, %p45
    %s48 = sadd.s32 %s47, 1
    %p51 = scmp.eq.s32.totalorder %s13, 1
    %p52 = scmp.ne.s32.totalorder %s47, %s49
    %p53 = scmp.eq.s32.totalorder %s13, 0
    %p54 = por %p52, %p53
    %p55 = scmp.ne.s32.totalorder %s47, %s49
    %p56 = scmp.eq.s32.totalorder %s18, 1
    %p57 = por %p55, %p56
    %p58 = scmp.ne.s32.totalorder %s49, %s50
    %p59 = scmp.eq.s32.totalorder %s18, 0
    %p60 = por %p58, %p59
    %p61 = scmp.ne.s32.totalorder %s49, %s50
    %p62 = scmp.eq.s32.totalorder %s19, 1
    %p63 = por %p61, %p62
    %p65 = scmp.ne.s32.totalorder %s50, %s64
    %p66 = scmp.eq.s32.totalorder %s19, 0
    %p67 = por %p65, %p66
    %s69 = sadd.s32 %s68, 1
    %p72 = scmp.eq.s32.totalorder %s13, 1
    %p73 = scmp.ne.s32.totalorder %s68, %s70
    %p74 = scmp.eq.s32.totalorder %s13, 0
    %p75 = por %p73, %p74
    %p76 = scmp.ne.s32.totalorder %s68, %s70
    %p77 = scmp.eq.s32.totalorder %s18, 1
    %p78 = por %p76, %p77
    %p79 = scmp.ne.s32.totalorder %s70, %s71
    %p80 = scmp.eq.s32.totalorder %s18, 0
    %p81 = por %p79, %p80
    %p82 = scmp.ne.s32.totalorder %s70, %s71
    %p83 = scmp.eq.s32.totalorder %s19, 1
    %p84 = por %p82, %p83
    %p86 = scmp.ne.s32.totalorder %s71, %s85
    %p87 = scmp.eq.s32.totalorder %s19, 0
    %p88 = por %p86, %p87
    %s90 = sadd.s32 %s89, 1
    %p93 = scmp.eq.s32.totalorder %s13, 1
    %p94 = scmp.ne.s32.totalorder %s89, %s91
    %p95 = scmp.eq.s32.totalorder %s13, 0
    %p96 = por %p94, %p95
    %p97 = scmp.ne.s32.totalorder %s89, %s91
    %p98 = scmp.eq.s32.totalorder %s18, 1
    %p99 = por %p97, %p98
    %p100 = scmp.ne.s32.totalorder %s91, %s92
    %p101 = scmp.eq.s32.totalorder %s18, 0
    %p102 = por %p100, %p101
    %p103 = scmp.ne.s32.totalorder %s91, %s92
    %p104 = scmp.eq.s32.totalorder %s19, 1
    %p105 = por %p103, %p104
    %p107 = scmp.ne.s32.totalorder %s92, %s106
    %p108 = scmp.eq.s32.totalorder %s19, 0
    %p109 = por %p107, %p108
    %s111 = sadd.s32 %s110, 1
    %p114 = scmp.eq.s32.totalorder %s13, 1
    %p115 = scmp.ne.s32.totalorder %s110, %s112
    %p116 = scmp.eq.s32.totalorder %s13, 0
    %p117 = por %p115, %p116
    %p118 = scmp.ne.s32.totalorder %s110, %s112
    %p119 = scmp.eq.s32.totalorder %s18, 1
    %p120 = por %p118, %p119
    %p121 = scmp.ne.s32.totalorder %s112, %s113
    %p122 = scmp.eq.s32.totalorder %s18, 0
    %p123 = por %p121, %p122
    %p124 = scmp.ne.s32.totalorder %s112, %s113
    %p125 = scmp.eq.s32.totalorder %s19, 1
    %p126 = por %p124, %p125
    %p128 = scmp.ne.s32.totalorder %s113, %s127
    %p129 = scmp.eq.s32.totalorder %s19, 0
    %p130 = por %p128, %p129
    %s131 = ssub.s32 %s13, %s20
    %p132 = scmp.eq.s32.totalorder %s131, 0
    %s134 = sadd.s32 %s133, 1
    %s135 = scalar_select %p132, %s133, %s134
    %p138 = pneg %p132
    %p139 = scmp.eq.s32.totalorder %s13, 1
    %p140 = por %p138, %p139
    %p141 = scmp.ne.s32.totalorder %s133, %s136
    %p142 = scmp.eq.s32.totalorder %s13, 0
    %p143 = por %p141, %p142
    %p144 = scmp.ne.s32.totalorder %s133, %s136
    %p145 = scmp.eq.s32.totalorder %s18, 1
    %p146 = por %p144, %p145
    %p147 = scmp.ne.s32.totalorder %s136, %s137
    %p148 = scmp.eq.s32.totalorder %s18, 0
    %p149 = por %p147, %p148
    %p150 = scmp.ne.s32.totalorder %s136, %s137
    %p151 = scmp.eq.s32.totalorder %s19, 1
    %p152 = por %p150, %p151
    %p154 = scmp.ne.s32.totalorder %s137, %s153
    %p155 = scmp.eq.s32.totalorder %s19, 0
    %p156 = por %p154, %p155
    %s157 = ssub.s32 %s13, %s20
    %p158 = scmp.eq.s32.totalorder %s157, 0
    %s160 = sadd.s32 %s159, 1
    %s161 = scalar_select %p158, %s159, %s160
    %p164 = pneg %p158
    %p165 = scmp.eq.s32.totalorder %s13, 1
    %p166 = por %p164, %p165
    %p167 = scmp.ne.s32.totalorder %s159, %s162
    %p168 = scmp.eq.s32.totalorder %s13, 0
    %p169 = por %p167, %p168
    %p170 = scmp.ne.s32.totalorder %s159, %s162
    %p171 = scmp.eq.s32.totalorder %s18, 1
    %p172 = por %p170, %p171
    %p173 = scmp.ne.s32.totalorder %s162, %s163
    %p174 = scmp.eq.s32.totalorder %s18, 0
    %p175 = por %p173, %p174
    %p176 = scmp.ne.s32.totalorder %s162, %s163
    %p177 = scmp.eq.s32.totalorder %s19, 1
    %p178 = por %p176, %p177
    %p180 = scmp.ne.s32.totalorder %s163, %s179
    %p181 = scmp.eq.s32.totalorder %s19, 0
    %p182 = por %p180, %p181
    %p183 = scmp.le.s32.totalorder 1, %s13
    %p184 = scmp.lt.s32.totalorder %s13, 3
    %p185 = pnand %p183, %p184
    %p186 = pneg %p185
    // Predicated region
    $region9: #{foodnet_aspp_forward.6} parent=5 // pred_check
      _
    $region10: #{foodnet_aspp_forward.6} parent=5 // pred_check_branch
      %188 = sbr.rel (%p185) target = $region12
    $region11: #{foodnet_aspp_forward.6} parent=5 // pred_region
      %s189 = ssub.s32 %s13, 1
      // Predicated region
      $region13: #{foodnet_aspp_forward.6} parent=11 // pred_check
        %p190 = pneg %p60
      $region14: #{foodnet_aspp_forward.6} parent=11 // pred_check_branch
        %192 = sbr.rel (%p190) target = $region16
      $region15: #{foodnet_aspp_forward.6} parent=11 // pred_region
        _
      $region16: #{foodnet_aspp_forward.6} parent=11 // pred_fallthru
        _
      // Predicated region
      $region17: #{foodnet_aspp_forward.6} parent=11 // pred_check
        %p193 = pneg %p81
      $region18: #{foodnet_aspp_forward.6} parent=11 // pred_check_branch
        %195 = sbr.rel (%p193) target = $region20
      $region19: #{foodnet_aspp_forward.6} parent=11 // pred_region
        _
      $region20: #{foodnet_aspp_forward.6} parent=11 // pred_fallthru
        _
      // Predicated region
      $region21: #{foodnet_aspp_forward.6} parent=11 // pred_check
        %p196 = pneg %p102
      $region22: #{foodnet_aspp_forward.6} parent=11 // pred_check_branch
        %198 = sbr.rel (%p196) target = $region24
      $region23: #{foodnet_aspp_forward.6} parent=11 // pred_region
        _
      $region24: #{foodnet_aspp_forward.6} parent=11 // pred_fallthru
        _
      // Predicated region
      $region25: #{foodnet_aspp_forward.6} parent=11 // pred_check
        %p199 = pneg %p123
      $region26: #{foodnet_aspp_forward.6} parent=11 // pred_check_branch
        %201 = sbr.rel (%p199) target = $region28
      $region27: #{foodnet_aspp_forward.6} parent=11 // pred_region
        _
      $region28: #{foodnet_aspp_forward.6} parent=11 // pred_fallthru
        _
    $region12: #{foodnet_aspp_forward.6} parent=5 // pred_fallthru
      _
    %p202 = scmp.lt.s32.totalorder %s13, 2
    // Predicated region
    $region29: #{foodnet_aspp_forward.6} parent=5 // pred_check
      %p203 = pneg %p202
    $region30: #{foodnet_aspp_forward.6} parent=5 // pred_check_branch
      %205 = sbr.rel (%p203) target = $region32
    $region31: #{foodnet_aspp_forward.6} parent=5 // pred_region
      // Predicated region
      $region33: #{foodnet_aspp_forward.6} parent=31 // pred_check
        %p206 = pneg %p33
      $region34: #{foodnet_aspp_forward.6} parent=31 // pred_check_branch
        %208 = sbr.rel (%p206) target = $region36
      $region35: #{foodnet_aspp_forward.6} parent=31 // pred_region
        %p209 = scmp.lt.s32.totalorder %s13, 1
        %s210 = scalar_select %p209, %s13, 1
        %s211 = smul.addr %s210, 16
        %s212 = smul.addr %s211, 2
        %s213 = scalar_lea.vmem %s0, %s212
      $region36: #{foodnet_aspp_forward.6} parent=31 // pred_fallthru
        _
    $region32: #{foodnet_aspp_forward.6} parent=5 // pred_fallthru
      _
    %p214 = scmp.le.s32.totalorder 1, %s13
    %p215 = scmp.lt.s32.totalorder %s13, 3
    %p216 = pnand %p214, %p215
    %p217 = pneg %p216
    // Predicated region
    $region37: #{foodnet_aspp_forward.6} parent=5 // pred_check
      _
    $region38: #{foodnet_aspp_forward.6} parent=5 // pred_check_branch
      %219 = sbr.rel (%p216) target = $region40
    $region39: #{foodnet_aspp_forward.6} parent=5 // pred_region
      %s220 = ssub.s32 %s13, 1
      %p221 = scmp.lt.s32.totalorder %s18, 1
      %s222 = scalar_select %p221, %s18, 1
      %s223 = smul.addr %s222, 16
      %s224 = smul.addr %s223, 2
      %s225 = scalar_lea.vmem %s0, %s224
      %p226 = pneg %p39
      %p227 = pneg %p36
      %p228 = pneg %p60
      %p229 = pneg %p57
      %p230 = pneg %p81
      %p231 = pneg %p78
      %p232 = pneg %p102
      %p233 = pneg %p99
      %p234 = pneg %p123
      %p235 = pneg %p120
      %p236 = pneg %p149
      %p237 = pneg %p146
      %p238 = scmp.lt.s32.totalorder %s18, 1
      %s239 = scalar_select %p238, %s18, 1
      %s240 = smul.addr %s239, 2
      %s241 = smul.addr %s240, 4
      %s242 = scalar_lea.vmem %s5, %s241
      %p243 = pneg %p175
      %p244 = pneg %p172
      %p245 = scmp.lt.s32.totalorder %s18, 1
      %s246 = scalar_select %p245, %s18, 1
      %s247 = smul.addr %s246, 2
      %s248 = smul.addr %s247, 8
      %s249 = scalar_lea.vmem %s6, %s248
      %p250 = scmp.lt.s32.totalorder %s18, 1
      %s251 = scalar_select %p250, %s18, 1
      %s252 = smul.addr %s251, 16
      %s253 = smul.addr %s252, 2
      %s254 = scalar_lea.vmem %s0, %s253
      %p255 = scmp.lt.s32.totalorder %s18, 1
      %s256 = scalar_select %p255, %s18, 1
      %s257 = smul.addr %s256, 2
      %s258 = smul.addr %s257, 4
      %s259 = scalar_lea.vmem %s5, %s258
      %p260 = scmp.lt.s32.totalorder %s18, 1
      %s261 = scalar_select %p260, %s18, 1
      %s262 = smul.addr %s261, 2
      %s263 = smul.addr %s262, 8
      %s264 = scalar_lea.vmem %s6, %s263
      %266 = vst [vmem:[#allocation2] sm:$0xff] 0
      %v267 = vld [vmem:[%s254] sm:$0xf]
      %v268 = vld [vmem:[%s254 + $0x4] sm:$0xf]
      %v269 = vld [vmem:[%s254 + $0x8] sm:$0xf]
      %v270 = vld [vmem:[%s254 + $0xc] sm:$0xf]
      %v271 = vld [vmem:[%s254 + $0x10] sm:$0xf]
      %v272 = vld [vmem:[%s254 + $0x14] sm:$0xf]
      %v273 = vld [vmem:[%s254 + $0x18] sm:$0xf]
      %v274 = vld [vmem:[%s254 + $0x1c] sm:$0xf]
      %v275 = vld [vmem:[%s1] sm:$0x3]
      %v276 = vld [vmem:[%s2] sm:$0x3]
      %v277 = vunpack.c.l.bf16 %v267
      %v278 = vunpack.c.l.bf16 %v269
      %v279 = vunpack.c.l.bf16 %v271
      %v280 = vunpack.c.l.bf16 %v273
      %v282 = vlaneseq
      %v283 = vshrl.u32 %v282, 7
      %v284 = vsub.s32 0, %v283
      %v285 = vrot.slane %v275, %v284
      %v286 = vlaneseq
      %v287 = vshrl.u32 %v286, 7
      %v288 = vsub.s32 1, %v287
      %v289 = vrot.slane %v275, %v288
      %v290 = vcombine.low %v285, %v289
      %v292 = vmul.f32 %v277, %v290
      %v293 = vmul.f32 %v278, %v290
      %v294 = vmul.f32 %v279, %v290
      %v295 = vmul.f32 %v280, %v290
      %v297 = vlaneseq
      %v298 = vshrl.u32 %v297, 7
      %v299 = vsub.s32 0, %v298
      %v300 = vrot.slane %v276, %v299
      %v301 = vlaneseq
      %v302 = vshrl.u32 %v301, 7
      %v303 = vsub.s32 1, %v302
      %v304 = vrot.slane %v276, %v303
      %v305 = vcombine.low %v300, %v304
      %v307 = vadd.f32 %v292, %v305
      %v308 = vadd.f32 %v293, %v305
      %v309 = vadd.f32 %v294, %v305
      %v310 = vadd.f32 %v295, %v305
      %v311 = vmax.f32 %v307, 0.0
      %v312 = vmax.f32 %v308, 0.0
      %v313 = vmax.f32 %v309, 0.0
      %v314 = vmax.f32 %v310, 0.0
      %v315 = vunpack.c.l.bf16 %v268
      %v316 = vunpack.c.l.bf16 %v270
      %v317 = vunpack.c.l.bf16 %v272
      %v318 = vunpack.c.l.bf16 %v274
      %v319 = vmul.f32 %v315, %v290
      %v320 = vmul.f32 %v316, %v290
      %v321 = vmul.f32 %v317, %v290
      %v322 = vmul.f32 %v318, %v290
      %v323 = vadd.f32 %v319, %v305
      %v324 = vadd.f32 %v320, %v305
      %v325 = vadd.f32 %v321, %v305
      %v326 = vadd.f32 %v322, %v305
      %v327 = vmax.f32 %v323, 0.0
      %v328 = vmax.f32 %v324, 0.0
      %v329 = vmax.f32 %v325, 0.0
      %v330 = vmax.f32 %v326, 0.0
      %v331 = vmax.f32 %v311, %v327
      %v332 = vmax.f32 %v312, %v328
      %v333 = vmax.f32 %v313, %v329
      %v334 = vmax.f32 %v314, %v330
      %v339 = vrot.slane %v331, 4
      %v340 = vrot.slane %v332, 4
      %v341 = vrot.slane %v333, 4
      %v342 = vrot.slane %v334, 4
      %v347 = vmax.f32 %v331, %v339
      %v348 = vmax.f32 %v332, %v340
      %v349 = vmax.f32 %v333, %v341
      %v350 = vmax.f32 %v334, %v342
      %v351 = vpack.c.bf16 %v347, %v347
      %v352 = vpack.c.bf16 %v348, %v348
      %v353 = vpack.c.bf16 %v349, %v349
      %v354 = vpack.c.bf16 %v350, %v350
      %355 = vst [vmem:[#allocation2] sm:$0x3] %v351
      %v357 = vrot.slane %v352, 6
      %359 = vst [vmem:[#allocation2] sm:$0xc] %v357
      %v361 = vrot.slane %v353, 4
      %363 = vst [vmem:[#allocation2] sm:$0x30] %v361
      %v365 = vrot.slane %v354, 2
      %367 = vst [vmem:[#allocation2] sm:$0xc0] %v365
      %v368 = vld [vmem:[#allocation2] sm:$0xff]
      %v369 = vld [vmem:[%s3] sm:$0xf]
      %v370 = vld [vmem:[%s3 + $0x4] sm:$0xf]
      %v371 = vld [vmem:[%s3 + $0x8] sm:$0xf]
      %v372 = vld [vmem:[%s3 + $0xc] sm:$0xf]
      %v373 = vld [vmem:[%s3 + $0x10] sm:$0xf]
      %v374 = vld [vmem:[%s3 + $0x14] sm:$0xf]
      %v375 = vld [vmem:[%s3 + $0x18] sm:$0xf]
      %v376 = vld [vmem:[%s3 + $0x1c] sm:$0xf]
      %v377 = vld [vmem:[%s3 + $0x20] sm:$0xf]
      %v378 = vld [vmem:[%s3 + $0x24] sm:$0xf]
      %v379 = vld [vmem:[%s3 + $0x28] sm:$0xf]
      %v380 = vld [vmem:[%s3 + $0x2c] sm:$0xf]
      %v381 = vld [vmem:[%s3 + $0x30] sm:$0xf]
      %v382 = vld [vmem:[%s3 + $0x34] sm:$0xf]
      %v383 = vld [vmem:[%s3 + $0x38] sm:$0xf]
      %v384 = vld [vmem:[%s3 + $0x3c] sm:$0xf]
      %v385 = vunpack.c.l.bf16 %v368
      %v386 = vunpack.c.h.bf16 %v368
      %v387 = vadd.f32 %v385, %v386
      %v388 = vrot.slane %v387, 4
      %v389 = vadd.f32 %v387, %v388
      %v390 = vrot.slane %v389, 2
      %v391 = vadd.f32 %v389, %v390
      %v392 = vrot.slane %v391, 1
      %v393 = vadd.f32 %v391, %v392
      %v394 = vmul.f32 %v393, 0.0625
      %v395 = vpack.c.bf16 %v394, %v394
      %v396 = vld [vmem:[%s4] sm:$0xf]
      %v397 = vld [vmem:[%s4 + $0x4] sm:$0xf]
      %v398 = vld [vmem:[%s4 + $0x8] sm:$0xf]
      %v399 = vld [vmem:[%s4 + $0xc] sm:$0xf]
      %v400 = vld [vmem:[%s4 + $0x10] sm:$0xf]
      %v401 = vld [vmem:[%s4 + $0x14] sm:$0xf]
      %v402 = vld [vmem:[%s4 + $0x18] sm:$0xf]
      %v403 = vld [vmem:[%s4 + $0x1c] sm:$0xf]
      %v404 = vld [vmem:[%s4 + $0x20] sm:$0xf]
      %v405 = vld [vmem:[%s4 + $0x24] sm:$0xf]
      %v406 = vld [vmem:[%s4 + $0x28] sm:$0xf]
      %v407 = vld [vmem:[%s4 + $0x2c] sm:$0xf]
      %v408 = vld [vmem:[%s4 + $0x30] sm:$0xf]
      %v409 = vld [vmem:[%s4 + $0x34] sm:$0xf]
      %v410 = vld [vmem:[%s4 + $0x38] sm:$0xf]
      %v411 = vld [vmem:[%s4 + $0x3c] sm:$0xf]
      %v428 = vunpack.c.l.b16 %v396
      %v429 = vunpack.c.l.b16 %v397
      %v430 = vunpack.c.l.b16 %v398
      %v431 = vunpack.c.l.b16 %v399
      %v432 = vunpack.c.l.b16 %v400
      %v433 = vunpack.c.l.b16 %v401
      %v434 = vunpack.c.l.b16 %v402
      %v435 = vunpack.c.l.b16 %v403
      %v436 = vunpack.c.l.b16 %v404
      %v437 = vunpack.c.l.b16 %v405
      %v438 = vunpack.c.l.b16 %v406
      %v439 = vunpack.c.l.b16 %v407
      %v440 = vunpack.c.l.b16 %v408
      %v441 = vunpack.c.l.b16 %v409
      %v442 = vunpack.c.l.b16 %v410
      %v443 = vunpack.c.l.b16 %v411
      %v444 = vpack.c.b16 %v429, %v428
      %v445 = vpack.c.b16 %v431, %v430
      %v446 = vpack.c.b16 %v433, %v432
      %v447 = vpack.c.b16 %v435, %v434
      %v448 = vpack.c.b16 %v437, %v436
      %v449 = vpack.c.b16 %v439, %v438
      %v450 = vpack.c.b16 %v441, %v440
      %v451 = vpack.c.b16 %v443, %v442
      %460 = vmatprep.subr.bf16.mxu0 0
      %461 = vmatpush1.bf16.msra.mxu0 %v444
      %462 = vmatprep.subr.bf16.mxu0 0
      %463 = vmatpush1.bf16.msra.mxu0 %v445
      %464 = vmatprep.subr.bf16.mxu0 0
      %465 = vmatpush1.bf16.msra.mxu0 %v446
      %466 = vmatprep.subr.bf16.mxu0 0
      %467 = vmatpush1.bf16.msra.mxu0 %v447
      %468 = vmatprep.subr.bf16.mxu0 0
      %469 = vmatpush1.bf16.msra.mxu0 %v448
      %470 = vmatprep.subr.bf16.mxu0 0
      %471 = vmatpush1.bf16.msra.mxu0 %v449
      %472 = vmatprep.subr.bf16.mxu0 0
      %473 = vmatpush1.bf16.msra.mxu0 %v450
      %474 = vmatprep.subr.bf16.mxu0 0
      %475 = vmatpush1.bf16.msra.mxu0 %v451
      %476 = vmatprep.subr.bf16.mxu0 0
      %477 = vmatpush1.bf16.msra.mxu0 0
      %478 = vmatprep.subr.bf16.mxu0 0
      %479 = vmatpush1.bf16.msra.mxu0 0
      %480 = vmatprep.subr.bf16.mxu0 0
      %481 = vmatpush1.bf16.msra.mxu0 0
      %482 = vmatprep.subr.bf16.mxu0 0
      %483 = vmatpush1.bf16.msra.mxu0 0
      %484 = vmatprep.subr.bf16.mxu0 0
      %485 = vmatpush1.bf16.msra.mxu0 0
      %486 = vmatprep.subr.bf16.mxu0 0
      %487 = vmatpush1.bf16.msra.mxu0 0
      %488 = vmatprep.subr.bf16.mxu0 0
      %489 = vmatpush1.bf16.msra.mxu0 0
      %490 = vmatprep.subr.bf16.mxu0 0
      %491 = vmatpush1.bf16.msra.mxu0 0
      %492 = vmatprep.mubr.bf16.mxu0 0
      %493 = vmatmul.mubr.bf16.gmra.mrb[0].mxu0 %v395
      %v494 = vpop.f32.mrb[0].mxu0
      %v495 = vadd.f32 0.0, %v494
      %v496 = vpop.f32.mrb[0].mxu0
      %v497 = vpop.f32.mrb[0].mxu0
      %v498 = vpop.f32.mrb[0].mxu0
      %499 = vdwg.mxu0
      %v500 = vlaneseq
      %v501 = vshrl.u32 %v500, 7
      %v502 = vsub.s32 0, %v501
      %v503 = vrot.slane %v495, %v502
      %v520 = vunpack.c.l.b16 %v369
      %v521 = vunpack.c.l.b16 %v370
      %v522 = vunpack.c.l.b16 %v371
      %v523 = vunpack.c.l.b16 %v372
      %v524 = vunpack.c.l.b16 %v373
      %v525 = vunpack.c.l.b16 %v374
      %v526 = vunpack.c.l.b16 %v375
      %v527 = vunpack.c.l.b16 %v376
      %v528 = vunpack.c.l.b16 %v377
      %v529 = vunpack.c.l.b16 %v378
      %v530 = vunpack.c.l.b16 %v379
      %v531 = vunpack.c.l.b16 %v380
      %v532 = vunpack.c.l.b16 %v381
      %v533 = vunpack.c.l.b16 %v382
      %v534 = vunpack.c.l.b16 %v383
      %v535 = vunpack.c.l.b16 %v384
      %v536 = vpack.c.b16 %v521, %v520
      %v537 = vpack.c.b16 %v523, %v522
      %v538 = vpack.c.b16 %v525, %v524
      %v539 = vpack.c.b16 %v527, %v526
      %v540 = vpack.c.b16 %v529, %v528
      %v541 = vpack.c.b16 %v531, %v530
      %v542 = vpack.c.b16 %v533, %v532
      %v543 = vpack.c.b16 %v535, %v534
      %552 = vmatprep.subr.bf16.mxu0 0
      %553 = vmatpush1.bf16.msra.mxu0 %v536
      %554 = vmatprep.subr.bf16.mxu0 0
      %555 = vmatpush1.bf16.msra.mxu0 %v537
      %556 = vmatprep.subr.bf16.mxu0 0
      %557 = vmatpush1.bf16.msra.mxu0 %v538
      %558 = vmatprep.subr.bf16.mxu0 0
      %559 = vmatpush1.bf16.msra.mxu0 %v539
      %560 = vmatprep.subr.bf16.mxu0 0
      %561 = vmatpush1.bf16.msra.mxu0 %v540
      %562 = vmatprep.subr.bf16.mxu0 0
      %563 = vmatpush1.bf16.msra.mxu0 %v541
      %564 = vmatprep.subr.bf16.mxu0 0
      %565 = vmatpush1.bf16.msra.mxu0 %v542
      %566 = vmatprep.subr.bf16.mxu0 0
      %567 = vmatpush1.bf16.msra.mxu0 %v543
      %568 = vmatprep.subr.bf16.mxu0 0
      %569 = vmatpush1.bf16.msra.mxu0 0
      %570 = vmatprep.subr.bf16.mxu0 0
      %571 = vmatpush1.bf16.msra.mxu0 0
      %572 = vmatprep.subr.bf16.mxu0 0
      %573 = vmatpush1.bf16.msra.mxu0 0
      %574 = vmatprep.subr.bf16.mxu0 0
      %575 = vmatpush1.bf16.msra.mxu0 0
      %576 = vmatprep.subr.bf16.mxu0 0
      %577 = vmatpush1.bf16.msra.mxu0 0
      %578 = vmatprep.subr.bf16.mxu0 0
      %579 = vmatpush1.bf16.msra.mxu0 0
      %580 = vmatprep.subr.bf16.mxu0 0
      %581 = vmatpush1.bf16.msra.mxu0 0
      %582 = vmatprep.subr.bf16.mxu0 0
      %583 = vmatpush1.bf16.msra.mxu0 0
      %584 = vmatprep.mubr.bf16.mxu0 0
      %585 = vmatmul.mubr.bf16.gmra.mrb[0].mxu0 %v368
      %v586 = vpop.f32.mrb[0].mxu0
      %v587 = vadd.f32 %v503, %v586
      %v588 = vpop.f32.mrb[0].mxu0
      %v589 = vpop.f32.mrb[0].mxu0
      %v590 = vadd.f32 %v503, %v589
      %v591 = vpop.f32.mrb[0].mxu0
      %592 = vdwg.mxu0
      %v593 = vpack.c.bf16 %v590, %v587
      %v595 = vunpack.c.l.b16 %v593
      %v596 = vunpack.c.h.b16 %v593
      %v597 = vpack.c.b16 %v595, %v595
      %v598 = vpack.c.b16 %v596, %v596
      %601 = vst [vmem:[%s259] sm:$0xf] %v597
      %602 = vst [vmem:[%s259 + $0x4] sm:$0xf] %v598
      %v603 = vadd.f32 %v587, %v590
      %v604 = vrot.slane %v603, 4
      %v605 = vadd.f32 %v603, %v604
      %v606 = vrot.slane %v605, 2
      %v607 = vadd.f32 %v605, %v606
      %v608 = vrot.slane %v607, 1
      %v609 = vadd.f32 %v607, %v608
      %v610 = vmul.f32 %v587, %v587
      %v611 = vmul.f32 %v590, %v590
      %v612 = vadd.f32 %v610, %v611
      %v613 = vrot.slane %v612, 4
      %v614 = vadd.f32 %v612, %v613
      %v615 = vrot.slane %v614, 2
      %v616 = vadd.f32 %v614, %v615
      %v617 = vrot.slane %v616, 1
      %v618 = vadd.f32 %v616, %v617
      %619 = vst [vmem:[%s264] sm:$0xff] %v609
      %s620 = scalar_lea.vmem %s264, 8
      %621 = vst [vmem:[%s620] sm:$0xff] %v618
      %p622 = scmp.lt.s32.totalorder %s18, 1
      %s623 = scalar_select %p622, %s18, 1
      %s624 = smul.addr %s623, 2
      %s625 = smul.addr %s624, 4
      %s626 = scalar_lea.vmem %s5, %s625
      %p627 = scmp.lt.s32.totalorder %s18, 1
      %s628 = scalar_select %p627, %s18, 1
      %s629 = smul.addr %s628, 2
      %s630 = smul.addr %s629, 8
      %s631 = scalar_lea.vmem %s6, %s630
      // Predicated region
      $region41: #{foodnet_aspp_forward.6} parent=39 // pred_check
        %p632 = pneg %p146
      $region42: #{foodnet_aspp_forward.6} parent=39 // pred_check_branch
        %634 = sbr.rel (%p632) target = $region44
      $region43: #{foodnet_aspp_forward.6} parent=39 // pred_region
        _
      $region44: #{foodnet_aspp_forward.6} parent=39 // pred_fallthru
        _
      // Predicated region
      $region45: #{foodnet_aspp_forward.6} parent=39 // pred_check
        %p635 = pneg %p172
      $region46: #{foodnet_aspp_forward.6} parent=39 // pred_check_branch
        %637 = sbr.rel (%p635) target = $region48
      $region47: #{foodnet_aspp_forward.6} parent=39 // pred_region
        _
      $region48: #{foodnet_aspp_forward.6} parent=39 // pred_fallthru
        _
    $region40: #{foodnet_aspp_forward.6} parent=5 // pred_fallthru
      _
    %p638 = scmp.le.s32.totalorder 2, %s13
    // Predicated region
    $region49: #{foodnet_aspp_forward.6} parent=5 // pred_check
      %p639 = pneg %p638
    $region50: #{foodnet_aspp_forward.6} parent=5 // pred_check_branch
      %641 = sbr.rel (%p639) target = $region52
    $region51: #{foodnet_aspp_forward.6} parent=5 // pred_region
      %s642 = ssub.s32 %s13, 2
      // Predicated region
      $region53: #{foodnet_aspp_forward.6} parent=51 // pred_check
        %p643 = pneg %p152
      $region54: #{foodnet_aspp_forward.6} parent=51 // pred_check_branch
        %645 = sbr.rel (%p643) target = $region56
      $region55: #{foodnet_aspp_forward.6} parent=51 // pred_region
        %p646 = scmp.lt.s32.totalorder %s19, 1
        %s647 = scalar_select %p646, %s19, 1
        %s648 = smul.addr %s647, 2
        %s649 = smul.addr %s648, 4
        %s650 = scalar_lea.vmem %s5, %s649
      $region56: #{foodnet_aspp_forward.6} parent=51 // pred_fallthru
        _
      // Predicated region
      $region57: #{foodnet_aspp_forward.6} parent=51 // pred_check
        %p651 = pneg %p178
      $region58: #{foodnet_aspp_forward.6} parent=51 // pred_check_branch
        %653 = sbr.rel (%p651) target = $region60
      $region59: #{foodnet_aspp_forward.6} parent=51 // pred_region
        %p654 = scmp.lt.s32.totalorder %s19, 1
        %s655 = scalar_select %p654, %s19, 1
        %s656 = smul.addr %s655, 2
        %s657 = smul.addr %s656, 8
        %s658 = scalar_lea.vmem %s6, %s657
      $region60: #{foodnet_aspp_forward.6} parent=51 // pred_fallthru
        _
    $region52: #{foodnet_aspp_forward.6} parent=5 // pred_fallthru
      _
  $region6: #{foodnet_aspp_forward.6} parent=0 // loop_footer
    %s17 = sadd.s32 1, %s13
  $region7: #{foodnet_aspp_forward.6} parent=0 // loop_footer_branch
    %12 = sbr.rel target = $region3
  $region8: #{foodnet_aspp_forward.6} parent=0 // loop_exit
    _

// kernel: foodnet_aspp_forward.5
$region0: #{foodnet_aspp_forward.5}
  #allocation0 [shape = 'u32[]', space=smem, size = 0x4, offset = 0x4, fixed_abs, tag = 'smem constant byte address 0x4 - core index']
  #allocation1 [shape = 'u32[144,128]{1,0:T(1,128)}', space=vmem, size = 0x12000, scoped, tag = 'internal scratch']
  #allocation2 [shape = 'bf16[89,128]{1,0:T(8,128)(2,1)}', space=vmem, size = 0x6000, scoped, tag = 'scratch operand']
  %s0 = inlined_call_operand.vmem [shape: bf16[2,8,2,8,256], index: 0, kind: input, shape index: {}]
  %s1 = inlined_call_operand.vmem [shape: f32[1,1,256], index: 1, kind: input, shape index: {}]
  %s2 = inlined_call_operand.vmem [shape: f32[1,1,256], index: 2, kind: input, shape index: {}]
  %s3 = inlined_call_operand.vmem [shape: bf16[9,128,128], index: 3, kind: input, shape index: {}]
  %s4 = inlined_call_operand.vmem [shape: f32[1,128], index: 4, kind: input, shape index: {}]
  %s5 = inlined_call_operand.vmem [shape: bf16[2,64,128], index: 5, kind: output, shape index: {0}]
  %s6 = inlined_call_operand.vmem [shape: f32[2,2,8,128], index: 6, kind: output, shape index: {1}]
  %7 = xla_tuple %s5, %s6
  %s8 = sld [smem:[#allocation0]]
  $region61: #{foodnet_aspp_forward.5} parent=0
    _
  %s10 = ssub.s32 1, %s8
  %s11 = scalar_select 0, %s10, %s8
  loop: start=0, step=1, limit=4
  $region2: #{foodnet_aspp_forward.5} parent=0 // loop_pre_header
    _
  $region3: #{foodnet_aspp_forward.5} parent=0 // loop_header
    %s13 = sphi 0, %s17
    %p14 = scmp.ge.s32.totalorder %s13, 4
    %s23 = sphi 0, %s25
    %s26 = sphi 0, %s23
    %s27 = sphi 0, %s26
    %s43 = sphi 0, %s27
    %s47 = sphi 0, %s47
    %s49 = sphi 0, %s47
    %s50 = sphi 0, %s49
    %s64 = sphi 0, %s50
    %s68 = sphi 0, %s68
    %s70 = sphi 0, %s68
    %s71 = sphi 0, %s70
    %s85 = sphi 0, %s71
    %s89 = sphi 0, %s89
    %s91 = sphi 0, %s89
    %s92 = sphi 0, %s91
    %s106 = sphi 0, %s92
    %s110 = sphi 0, %s110
    %s112 = sphi 0, %s110
    %s113 = sphi 0, %s112
    %s127 = sphi 0, %s113
    %s133 = sphi 0, %s135
    %s136 = sphi 0, %s133
    %s137 = sphi 0, %s136
    %s153 = sphi 0, %s137
    %s159 = sphi 0, %s161
    %s162 = sphi 0, %s159
    %s163 = sphi 0, %s162
    %s179 = sphi 0, %s163
  $region4: #{foodnet_aspp_forward.5} parent=0 // loop_header_branch
    %16 = sbr.rel (%p14) target = $region8
  $region5: #{foodnet_aspp_forward.5} parent=0 // loop_body
    %s18 = ssub.s32 %s13, 1
    %s19 = ssub.s32 %s13, 2
    %s20 = sadd.s32 %s13, 1
    %s21 = ssub.s32 %s13, %s20
    %p22 = scmp.eq.s32.totalorder %s21, 0
    %s24 = sadd.s32 %s23, 1
    %s25 = scalar_select %p22, %s23, %s24
    %p28 = pneg %p22
    %p29 = scmp.eq.s32.totalorder %s13, 1
    %p30 = por %p28, %p29
    %p31 = scmp.ne.s32.totalorder %s23, %s26
    %p32 = scmp.eq.s32.totalorder %s13, 0
    %p33 = por %p31, %p32
    %p34 = scmp.ne.s32.totalorder %s23, %s26
    %p35 = scmp.eq.s32.totalorder %s18, 1
    %p36 = por %p34, %p35
    %p37 = scmp.ne.s32.totalorder %s26, %s27
    %p38 = scmp.eq.s32.totalorder %s18, 0
    %p39 = por %p37, %p38
    %p40 = scmp.ne.s32.totalorder %s26, %s27
    %p41 = scmp.eq.s32.totalorder %s19, 1
    %p42 = por %p40, %p41
    %p44 = scmp.ne.s32.totalorder %s27, %s43
    %p45 = scmp.eq.s32.totalorder %s19, 0
    %p46 = por %p44, %p45
    %s48 = sadd.s32 %s47, 1
    %p51 = scmp.eq.s32.totalorder %s13, 1
    %p52 = scmp.ne.s32.totalorder %s47, %s49
    %p53 = scmp.eq.s32.totalorder %s13, 0
    %p54 = por %p52, %p53
    %p55 = scmp.ne.s32.totalorder %s47, %s49
    %p56 = scmp.eq.s32.totalorder %s18, 1
    %p57 = por %p55, %p56
    %p58 = scmp.ne.s32.totalorder %s49, %s50
    %p59 = scmp.eq.s32.totalorder %s18, 0
    %p60 = por %p58, %p59
    %p61 = scmp.ne.s32.totalorder %s49, %s50
    %p62 = scmp.eq.s32.totalorder %s19, 1
    %p63 = por %p61, %p62
    %p65 = scmp.ne.s32.totalorder %s50, %s64
    %p66 = scmp.eq.s32.totalorder %s19, 0
    %p67 = por %p65, %p66
    %s69 = sadd.s32 %s68, 1
    %p72 = scmp.eq.s32.totalorder %s13, 1
    %p73 = scmp.ne.s32.totalorder %s68, %s70
    %p74 = scmp.eq.s32.totalorder %s13, 0
    %p75 = por %p73, %p74
    %p76 = scmp.ne.s32.totalorder %s68, %s70
    %p77 = scmp.eq.s32.totalorder %s18, 1
    %p78 = por %p76, %p77
    %p79 = scmp.ne.s32.totalorder %s70, %s71
    %p80 = scmp.eq.s32.totalorder %s18, 0
    %p81 = por %p79, %p80
    %p82 = scmp.ne.s32.totalorder %s70, %s71
    %p83 = scmp.eq.s32.totalorder %s19, 1
    %p84 = por %p82, %p83
    %p86 = scmp.ne.s32.totalorder %s71, %s85
    %p87 = scmp.eq.s32.totalorder %s19, 0
    %p88 = por %p86, %p87
    %s90 = sadd.s32 %s89, 1
    %p93 = scmp.eq.s32.totalorder %s13, 1
    %p94 = scmp.ne.s32.totalorder %s89, %s91
    %p95 = scmp.eq.s32.totalorder %s13, 0
    %p96 = por %p94, %p95
    %p97 = scmp.ne.s32.totalorder %s89, %s91
    %p98 = scmp.eq.s32.totalorder %s18, 1
    %p99 = por %p97, %p98
    %p100 = scmp.ne.s32.totalorder %s91, %s92
    %p101 = scmp.eq.s32.totalorder %s18, 0
    %p102 = por %p100, %p101
    %p103 = scmp.ne.s32.totalorder %s91, %s92
    %p104 = scmp.eq.s32.totalorder %s19, 1
    %p105 = por %p103, %p104
    %p107 = scmp.ne.s32.totalorder %s92, %s106
    %p108 = scmp.eq.s32.totalorder %s19, 0
    %p109 = por %p107, %p108
    %s111 = sadd.s32 %s110, 1
    %p114 = scmp.eq.s32.totalorder %s13, 1
    %p115 = scmp.ne.s32.totalorder %s110, %s112
    %p116 = scmp.eq.s32.totalorder %s13, 0
    %p117 = por %p115, %p116
    %p118 = scmp.ne.s32.totalorder %s110, %s112
    %p119 = scmp.eq.s32.totalorder %s18, 1
    %p120 = por %p118, %p119
    %p121 = scmp.ne.s32.totalorder %s112, %s113
    %p122 = scmp.eq.s32.totalorder %s18, 0
    %p123 = por %p121, %p122
    %p124 = scmp.ne.s32.totalorder %s112, %s113
    %p125 = scmp.eq.s32.totalorder %s19, 1
    %p126 = por %p124, %p125
    %p128 = scmp.ne.s32.totalorder %s113, %s127
    %p129 = scmp.eq.s32.totalorder %s19, 0
    %p130 = por %p128, %p129
    %s131 = ssub.s32 %s13, %s20
    %p132 = scmp.eq.s32.totalorder %s131, 0
    %s134 = sadd.s32 %s133, 1
    %s135 = scalar_select %p132, %s133, %s134
    %p138 = pneg %p132
    %p139 = scmp.eq.s32.totalorder %s13, 1
    %p140 = por %p138, %p139
    %p141 = scmp.ne.s32.totalorder %s133, %s136
    %p142 = scmp.eq.s32.totalorder %s13, 0
    %p143 = por %p141, %p142
    %p144 = scmp.ne.s32.totalorder %s133, %s136
    %p145 = scmp.eq.s32.totalorder %s18, 1
    %p146 = por %p144, %p145
    %p147 = scmp.ne.s32.totalorder %s136, %s137
    %p148 = scmp.eq.s32.totalorder %s18, 0
    %p149 = por %p147, %p148
    %p150 = scmp.ne.s32.totalorder %s136, %s137
    %p151 = scmp.eq.s32.totalorder %s19, 1
    %p152 = por %p150, %p151
    %p154 = scmp.ne.s32.totalorder %s137, %s153
    %p155 = scmp.eq.s32.totalorder %s19, 0
    %p156 = por %p154, %p155
    %s157 = ssub.s32 %s13, %s20
    %p158 = scmp.eq.s32.totalorder %s157, 0
    %s160 = sadd.s32 %s159, 1
    %s161 = scalar_select %p158, %s159, %s160
    %p164 = pneg %p158
    %p165 = scmp.eq.s32.totalorder %s13, 1
    %p166 = por %p164, %p165
    %p167 = scmp.ne.s32.totalorder %s159, %s162
    %p168 = scmp.eq.s32.totalorder %s13, 0
    %p169 = por %p167, %p168
    %p170 = scmp.ne.s32.totalorder %s159, %s162
    %p171 = scmp.eq.s32.totalorder %s18, 1
    %p172 = por %p170, %p171
    %p173 = scmp.ne.s32.totalorder %s162, %s163
    %p174 = scmp.eq.s32.totalorder %s18, 0
    %p175 = por %p173, %p174
    %p176 = scmp.ne.s32.totalorder %s162, %s163
    %p177 = scmp.eq.s32.totalorder %s19, 1
    %p178 = por %p176, %p177
    %p180 = scmp.ne.s32.totalorder %s163, %s179
    %p181 = scmp.eq.s32.totalorder %s19, 0
    %p182 = por %p180, %p181
    %p183 = scmp.le.s32.totalorder 1, %s13
    %p184 = scmp.lt.s32.totalorder %s13, 3
    %p185 = pnand %p183, %p184
    %p186 = pneg %p185
    // Predicated region
    $region9: #{foodnet_aspp_forward.5} parent=5 // pred_check
      _
    $region10: #{foodnet_aspp_forward.5} parent=5 // pred_check_branch
      %188 = sbr.rel (%p185) target = $region12
    $region11: #{foodnet_aspp_forward.5} parent=5 // pred_region
      %s189 = ssub.s32 %s13, 1
      // Predicated region
      $region13: #{foodnet_aspp_forward.5} parent=11 // pred_check
        %p190 = pneg %p60
      $region14: #{foodnet_aspp_forward.5} parent=11 // pred_check_branch
        %192 = sbr.rel (%p190) target = $region16
      $region15: #{foodnet_aspp_forward.5} parent=11 // pred_region
        _
      $region16: #{foodnet_aspp_forward.5} parent=11 // pred_fallthru
        _
      // Predicated region
      $region17: #{foodnet_aspp_forward.5} parent=11 // pred_check
        %p193 = pneg %p81
      $region18: #{foodnet_aspp_forward.5} parent=11 // pred_check_branch
        %195 = sbr.rel (%p193) target = $region20
      $region19: #{foodnet_aspp_forward.5} parent=11 // pred_region
        _
      $region20: #{foodnet_aspp_forward.5} parent=11 // pred_fallthru
        _
      // Predicated region
      $region21: #{foodnet_aspp_forward.5} parent=11 // pred_check
        %p196 = pneg %p102
      $region22: #{foodnet_aspp_forward.5} parent=11 // pred_check_branch
        %198 = sbr.rel (%p196) target = $region24
      $region23: #{foodnet_aspp_forward.5} parent=11 // pred_region
        _
      $region24: #{foodnet_aspp_forward.5} parent=11 // pred_fallthru
        _
      // Predicated region
      $region25: #{foodnet_aspp_forward.5} parent=11 // pred_check
        %p199 = pneg %p123
      $region26: #{foodnet_aspp_forward.5} parent=11 // pred_check_branch
        %201 = sbr.rel (%p199) target = $region28
      $region27: #{foodnet_aspp_forward.5} parent=11 // pred_region
        _
      $region28: #{foodnet_aspp_forward.5} parent=11 // pred_fallthru
        _
    $region12: #{foodnet_aspp_forward.5} parent=5 // pred_fallthru
      _
    %p202 = scmp.lt.s32.totalorder %s13, 2
    // Predicated region
    $region29: #{foodnet_aspp_forward.5} parent=5 // pred_check
      %p203 = pneg %p202
    $region30: #{foodnet_aspp_forward.5} parent=5 // pred_check_branch
      %205 = sbr.rel (%p203) target = $region32
    $region31: #{foodnet_aspp_forward.5} parent=5 // pred_region
      // Predicated region
      $region33: #{foodnet_aspp_forward.5} parent=31 // pred_check
        %p206 = pneg %p33
      $region34: #{foodnet_aspp_forward.5} parent=31 // pred_check_branch
        %208 = sbr.rel (%p206) target = $region36
      $region35: #{foodnet_aspp_forward.5} parent=31 // pred_region
        %p209 = scmp.lt.s32.totalorder %s13, 1
        %s210 = scalar_select %p209, %s13, 1
        %s211 = smul.addr %s210, 32
        %s212 = smul.addr %s211, 4
        %s213 = scalar_lea.vmem %s0, %s212
      $region36: #{foodnet_aspp_forward.5} parent=31 // pred_fallthru
        _
    $region32: #{foodnet_aspp_forward.5} parent=5 // pred_fallthru
      _
    %p214 = scmp.le.s32.totalorder 1, %s13
    %p215 = scmp.lt.s32.totalorder %s13, 3
    %p216 = pnand %p214, %p215
    %p217 = pneg %p216
    // Predicated region
    $region37: #{foodnet_aspp_forward.5} parent=5 // pred_check
      _
    $region38: #{foodnet_aspp_forward.5} parent=5 // pred_check_branch
      %219 = sbr.rel (%p216) target = $region40
    $region39: #{foodnet_aspp_forward.5} parent=5 // pred_region
      %s220 = ssub.s32 %s13, 1
      %p221 = scmp.lt.s32.totalorder %s18, 1
      %s222 = scalar_select %p221, %s18, 1
      %s223 = smul.addr %s222, 32
      %s224 = smul.addr %s223, 4
      %s225 = scalar_lea.vmem %s0, %s224
      %p226 = pneg %p39
      %p227 = pneg %p36
      %p228 = pneg %p60
      %p229 = pneg %p57
      %p230 = pneg %p81
      %p231 = pneg %p78
      %p232 = pneg %p102
      %p233 = pneg %p99
      %p234 = pneg %p123
      %p235 = pneg %p120
      %p236 = pneg %p149
      %p237 = pneg %p146
      %p238 = scmp.lt.s32.totalorder %s18, 1
      %s239 = scalar_select %p238, %s18, 1
      %s240 = smul.addr %s239, 8
      %s241 = smul.addr %s240, 4
      %s242 = scalar_lea.vmem %s5, %s241
      %p243 = pneg %p175
      %p244 = pneg %p172
      %p245 = scmp.lt.s32.totalorder %s18, 1
      %s246 = scalar_select %p245, %s18, 1
      %s247 = smul.addr %s246, 2
      %s248 = smul.addr %s247, 8
      %s249 = scalar_lea.vmem %s6, %s248
      %p250 = scmp.lt.s32.totalorder %s18, 1
      %s251 = scalar_select %p250, %s18, 1
      %s252 = smul.addr %s251, 32
      %s253 = smul.addr %s252, 4
      %s254 = scalar_lea.vmem %s0, %s253
      %p255 = scmp.lt.s32.totalorder %s18, 1
      %s256 = scalar_select %p255, %s18, 1
      %s257 = smul.addr %s256, 8
      %s258 = smul.addr %s257, 4
      %s259 = scalar_lea.vmem %s5, %s258
      %p260 = scmp.lt.s32.totalorder %s18, 1
      %s261 = scalar_select %p260, %s18, 1
      %s262 = smul.addr %s261, 2
      %s263 = smul.addr %s262, 8
      %s264 = scalar_lea.vmem %s6, %s263
      %268 = vst [vmem:[#allocation2] sm:$0xf] 0
      %269 = vst [vmem:[#allocation2 + $0x4] sm:$0xf] 0
      %270 = vst [vmem:[#allocation2 + $0x8] sm:$0xf] 0
      %271 = vst [vmem:[#allocation2 + $0xc] sm:$0xf] 0
      %272 = vst [vmem:[#allocation2 + $0x10] sm:$0xf] 0
      %273 = vst [vmem:[#allocation2 + $0x14] sm:$0xf] 0
      %274 = vst [vmem:[#allocation2 + $0x18] sm:$0xf] 0
      %275 = vst [vmem:[#allocation2 + $0x1c] sm:$0xf] 0
      %276 = vst [vmem:[#allocation2 + $0x20] sm:$0xf] 0
      %277 = vst [vmem:[#allocation2 + $0x24] sm:$0xf] 0
      %278 = vst [vmem:[#allocation2 + $0x28] sm:$0xf] 0
      %vm279 = vcmask 1040384
      %vm280 = vsmask.f32 256
      %vm281 = vmand %vm279, %vm280
      %v282 = vld [vmem:[#allocation2 + $0x2c] sm:$0x1]
      %v283 = vsel %vm281, 0, %v282
      %284 = vst [vmem:[#allocation2 + $0x2c] sm:$0x1] %v283
      %v285 = vld [vmem:[%s254] sm:$0xff]
      %v286 = vld [vmem:[%s254 + $0x8] sm:$0xff]
      %v287 = vld [vmem:[%s254 + $0x10] sm:$0xff]
      %v288 = vld [vmem:[%s254 + $0x18] sm:$0xff]
      %v289 = vld [vmem:[%s254 + $0x20] sm:$0xff]
      %v290 = vld [vmem:[%s254 + $0x28] sm:$0xff]
      %v291 = vld [vmem:[%s254 + $0x30] sm:$0xff]
      %v292 = vld [vmem:[%s254 + $0x38] sm:$0xff]
      %v293 = vld [vmem:[%s254 + $0x40] sm:$0xff]
      %v294 = vld [vmem:[%s254 + $0x48] sm:$0xff]
      %v295 = vld [vmem:[%s254 + $0x50] sm:$0xff]
      %v296 = vld [vmem:[%s254 + $0x58] sm:$0xff]
      %v297 = vld [vmem:[%s254 + $0x60] sm:$0xff]
      %v298 = vld [vmem:[%s254 + $0x68] sm:$0xff]
      %v299 = vld [vmem:[%s254 + $0x70] sm:$0xff]
      %v300 = vld [vmem:[%s254 + $0x78] sm:$0xff]
      %v301 = vld [vmem:[%s1] sm:$0x3]
      %v302 = vld [vmem:[%s2] sm:$0x3]
      %v303 = vunpack.c.l.bf16 %v285
      %v304 = vunpack.c.h.bf16 %v285
      %v305 = vunpack.c.l.bf16 %v287
      %v306 = vunpack.c.h.bf16 %v287
      %v307 = vunpack.c.l.bf16 %v289
      %v308 = vunpack.c.h.bf16 %v289
      %v309 = vunpack.c.l.bf16 %v291
      %v310 = vunpack.c.h.bf16 %v291
      %v311 = vunpack.c.l.bf16 %v293
      %v312 = vunpack.c.h.bf16 %v293
      %v313 = vunpack.c.l.bf16 %v295
      %v314 = vunpack.c.h.bf16 %v295
      %v315 = vunpack.c.l.bf16 %v297
      %v316 = vunpack.c.h.bf16 %v297
      %v317 = vunpack.c.l.bf16 %v299
      %v318 = vunpack.c.h.bf16 %v299
      %v320 = vlaneseq
      %v321 = vshrl.u32 %v320, 7
      %v322 = vsub.s32 0, %v321
      %v323 = vrot.slane %v301, %v322
      %v324 = vlaneseq
      %v325 = vshrl.u32 %v324, 7
      %v326 = vsub.s32 1, %v325
      %v327 = vrot.slane %v301, %v326
      %v330 = vmul.f32 %v303, %v323
      %v331 = vmul.f32 %v304, %v327
      %v332 = vmul.f32 %v305, %v323
      %v333 = vmul.f32 %v306, %v327
      %v334 = vmul.f32 %v307, %v323
      %v335 = vmul.f32 %v308, %v327
      %v336 = vmul.f32 %v309, %v323
      %v337 = vmul.f32 %v310, %v327
      %v338 = vmul.f32 %v311, %v323
      %v339 = vmul.f32 %v312, %v327
      %v340 = vmul.f32 %v313, %v323
      %v341 = vmul.f32 %v314, %v327
      %v342 = vmul.f32 %v315, %v323
      %v343 = vmul.f32 %v316, %v327
      %v344 = vmul.f32 %v317, %v323
      %v345 = vmul.f32 %v318, %v327
      %v347 = vlaneseq
      %v348 = vshrl.u32 %v347, 7
      %v349 = vsub.s32 0, %v348
      %v350 = vrot.slane %v302, %v349
      %v351 = vlaneseq
      %v352 = vshrl.u32 %v351, 7
      %v353 = vsub.s32 1, %v352
      %v354 = vrot.slane %v302, %v353
      %v357 = vadd.f32 %v330, %v350
      %v358 = vadd.f32 %v331, %v354
      %v359 = vadd.f32 %v332, %v350
      %v360 = vadd.f32 %v333, %v354
      %v361 = vadd.f32 %v334, %v350
      %v362 = vadd.f32 %v335, %v354
      %v363 = vadd.f32 %v336, %v350
      %v364 = vadd.f32 %v337, %v354
      %v365 = vadd.f32 %v338, %v350
      %v366 = vadd.f32 %v339, %v354
      %v367 = vadd.f32 %v340, %v350
      %v368 = vadd.f32 %v341, %v354
      %v369 = vadd.f32 %v342, %v350
      %v370 = vadd.f32 %v343, %v354
      %v371 = vadd.f32 %v344, %v350
      %v372 = vadd.f32 %v345, %v354
      %v373 = vmax.f32 %v357, 0.0
      %v374 = vmax.f32 %v358, 0.0
      %v375 = vmax.f32 %v359, 0.0
      %v376 = vmax.f32 %v360, 0.0
      %v377 = vmax.f32 %v361, 0.0
      %v378 = vmax.f32 %v362, 0.0
      %v379 = vmax.f32 %v363, 0.0
      %v380 = vmax.f32 %v364, 0.0
      %v381 = vmax.f32 %v365, 0.0
      %v382 = vmax.f32 %v366, 0.0
      %v383 = vmax.f32 %v367, 0.0
      %v384 = vmax.f32 %v368, 0.0
      %v385 = vmax.f32 %v369, 0.0
      %v386 = vmax.f32 %v370, 0.0
      %v387 = vmax.f32 %v371, 0.0
      %v388 = vmax.f32 %v372, 0.0
      %v389 = vunpack.c.l.bf16 %v286
      %v390 = vunpack.c.h.bf16 %v286
      %v391 = vunpack.c.l.bf16 %v288
      %v392 = vunpack.c.h.bf16 %v288
      %v393 = vunpack.c.l.bf16 %v290
      %v394 = vunpack.c.h.bf16 %v290
      %v395 = vunpack.c.l.bf16 %v292
      %v396 = vunpack.c.h.bf16 %v292
      %v397 = vunpack.c.l.bf16 %v294
      %v398 = vunpack.c.h.bf16 %v294
      %v399 = vunpack.c.l.bf16 %v296
      %v400 = vunpack.c.h.bf16 %v296
      %v401 = vunpack.c.l.bf16 %v298
      %v402 = vunpack.c.h.bf16 %v298
      %v403 = vunpack.c.l.bf16 %v300
      %v404 = vunpack.c.h.bf16 %v300
      %v405 = vmul.f32 %v389, %v323
      %v406 = vmul.f32 %v390, %v327
      %v407 = vmul.f32 %v391, %v323
      %v408 = vmul.f32 %v392, %v327
      %v409 = vmul.f32 %v393, %v323
      %v410 = vmul.f32 %v394, %v327
      %v411 = vmul.f32 %v395, %v323
      %v412 = vmul.f32 %v396, %v327
      %v413 = vmul.f32 %v397, %v323
      %v414 = vmul.f32 %v398, %v327
      %v415 = vmul.f32 %v399, %v323
      %v416 = vmul.f32 %v400, %v327
      %v417 = vmul.f32 %v401, %v323
      %v418 = vmul.f32 %v402, %v327
      %v419 = vmul.f32 %v403, %v323
      %v420 = vmul.f32 %v404, %v327
      %v421 = vadd.f32 %v405, %v350
      %v422 = vadd.f32 %v406, %v354
      %v423 = vadd.f32 %v407, %v350
      %v424 = vadd.f32 %v408, %v354
      %v425 = vadd.f32 %v409, %v350
      %v426 = vadd.f32 %v410, %v354
      %v427 = vadd.f32 %v411, %v350
      %v428 = vadd.f32 %v412, %v354
      %v429 = vadd.f32 %v413, %v350
      %v430 = vadd.f32 %v414, %v354
      %v431 = vadd.f32 %v415, %v350
      %v432 = vadd.f32 %v416, %v354
      %v433 = vadd.f32 %v417, %v350
      %v434 = vadd.f32 %v418, %v354
      %v435 = vadd.f32 %v419, %v350
      %v436 = vadd.f32 %v420, %v354
      %v437 = vmax.f32 %v421, 0.0
      %v438 = vmax.f32 %v422, 0.0
      %v439 = vmax.f32 %v423, 0.0
      %v440 = vmax.f32 %v424, 0.0
      %v441 = vmax.f32 %v425, 0.0
      %v442 = vmax.f32 %v426, 0.0
      %v443 = vmax.f32 %v427, 0.0
      %v444 = vmax.f32 %v428, 0.0
      %v445 = vmax.f32 %v429, 0.0
      %v446 = vmax.f32 %v430, 0.0
      %v447 = vmax.f32 %v431, 0.0
      %v448 = vmax.f32 %v432, 0.0
      %v449 = vmax.f32 %v433, 0.0
      %v450 = vmax.f32 %v434, 0.0
      %v451 = vmax.f32 %v435, 0.0
      %v452 = vmax.f32 %v436, 0.0
      %v453 = vmax.f32 %v373, %v437
      %v454 = vmax.f32 %v374, %v438
      %v455 = vmax.f32 %v375, %v439
      %v456 = vmax.f32 %v376, %v440
      %v457 = vmax.f32 %v377, %v441
      %v458 = vmax.f32 %v378, %v442
      %v459 = vmax.f32 %v379, %v443
      %v460 = vmax.f32 %v380, %v444
      %v461 = vmax.f32 %v381, %v445
      %v462 = vmax.f32 %v382, %v446
      %v463 = vmax.f32 %v383, %v447
      %v464 = vmax.f32 %v384, %v448
      %v465 = vmax.f32 %v385, %v449
      %v466 = vmax.f32 %v386, %v450
      %v467 = vmax.f32 %v387, %v451
      %v468 = vmax.f32 %v388, %v452
      %v469 = vmax.f32 %v453, %v454
      %v470 = vmax.f32 %v455, %v456
      %v471 = vmax.f32 %v457, %v458
      %v472 = vmax.f32 %v459, %v460
      %v473 = vmax.f32 %v461, %v462
      %v474 = vmax.f32 %v463, %v464
      %v475 = vmax.f32 %v465, %v466
      %v476 = vmax.f32 %v467, %v468
      %v477 = vpack.c.bf16 %v469, %v469
      %v478 = vpack.c.bf16 %v470, %v470
      %v479 = vpack.c.bf16 %v471, %v471
      %v480 = vpack.c.bf16 %v472, %v472
      %v481 = vpack.c.bf16 %v473, %v473
      %v482 = vpack.c.bf16 %v474, %v474
      %v483 = vpack.c.bf16 %v475, %v475
      %v484 = vpack.c.bf16 %v476, %v476
      %485 = vst [vmem:[#allocation2 + $0x8] sm:$0xf] %v477
      %486 = vst [vmem:[#allocation2 + $0xc] sm:$0xf] %v478
      %487 = vst [vmem:[#allocation2 + $0x10] sm:$0xf] %v479
      %488 = vst [vmem:[#allocation2 + $0x14] sm:$0xf] %v480
      %489 = vst [vmem:[#allocation2 + $0x18] sm:$0xf] %v481
      %490 = vst [vmem:[#allocation2 + $0x1c] sm:$0xf] %v482
      %491 = vst [vmem:[#allocation2 + $0x20] sm:$0xf] %v483
      %492 = vst [vmem:[#allocation2 + $0x24] sm:$0xf] %v484
      %v493 = vlaneseq
      %v494 = vshrl.u32 %v493, 7
      %v495 = vadd.s32 %v494, 8
      %v496 = vadd.s32 %v494, 16
      %v497 = vadd.s32 %v494, 24
      %v498 = vadd.s32 %v494, 32
      %v499 = vadd.s32 %v494, 40
      %v500 = vadd.s32 %v494, 48
      %v501 = vadd.s32 %v494, 56
      %v502 = vcvt.s32.f32 %v494
      %v503 = vcvt.s32.f32 %v495
      %v504 = vcvt.s32.f32 %v496
      %v505 = vcvt.s32.f32 %v497
      %v506 = vcvt.s32.f32 %v498
      %v507 = vcvt.s32.f32 %v499
      %v508 = vcvt.s32.f32 %v500
      %v509 = vcvt.s32.f32 %v501
      %v510 = vadd.f32 %v502, 0.5
      %v511 = vadd.f32 %v503, 0.5
      %v512 = vadd.f32 %v504, 0.5
      %v513 = vadd.f32 %v505, 0.5
      %v514 = vadd.f32 %v506, 0.5
      %v515 = vadd.f32 %v507, 0.5
      %v516 = vadd.f32 %v508, 0.5
      %v517 = vadd.f32 %v509, 0.5
      %v518 = vmul.f32 %v510, 0.125
      %v519 = vmul.f32 %v511, 0.125
      %v520 = vmul.f32 %v512, 0.125
      %v521 = vmul.f32 %v513, 0.125
      %v522 = vmul.f32 %v514, 0.125
      %v523 = vmul.f32 %v515, 0.125
      %v524 = vmul.f32 %v516, 0.125
      %v525 = vmul.f32 %v517, 0.125
      %v526 = vfloor.f32 %v518
      %v527 = vfloor.f32 %v519
      %v528 = vfloor.f32 %v520
      %v529 = vfloor.f32 %v521
      %v530 = vfloor.f32 %v522
      %v531 = vfloor.f32 %v523
      %v532 = vfloor.f32 %v524
      %v533 = vfloor.f32 %v525
      %v534 = vmul.f32 %v526, 8.0
      %v535 = vmul.f32 %v527, 8.0
      %v536 = vmul.f32 %v528, 8.0
      %v537 = vmul.f32 %v529, 8.0
      %v538 = vmul.f32 %v530, 8.0
      %v539 = vmul.f32 %v531, 8.0
      %v540 = vmul.f32 %v532, 8.0
      %v541 = vmul.f32 %v533, 8.0
      %v542 = vsub.f32 %v502, %v534
      %v543 = vsub.f32 %v503, %v535
      %v544 = vsub.f32 %v504, %v536
      %v545 = vsub.f32 %v505, %v537
      %v546 = vsub.f32 %v506, %v538
      %v547 = vsub.f32 %v507, %v539
      %v548 = vsub.f32 %v508, %v540
      %v549 = vsub.f32 %v509, %v541
      %v550 = vld [vmem:[#allocation2] sm:$0x8]
      %v551 = vld [vmem:[#allocation2 + $0x4] sm:$0xf]
      %v552 = vld [vmem:[#allocation2 + $0x8] sm:$0xf]
      %v553 = vld [vmem:[#allocation2 + $0xc] sm:$0xf]
      %v554 = vld [vmem:[#allocation2 + $0x10] sm:$0xf]
      %v555 = vld [vmem:[#allocation2 + $0x14] sm:$0xf]
      %v556 = vld [vmem:[#allocation2 + $0x18] sm:$0xf]
      %v557 = vld [vmem:[#allocation2 + $0x1c] sm:$0xf]
      %v558 = vld [vmem:[#allocation2 + $0x20] sm:$0xf]
      %vm559 = vcmp.ge.f32.partialorder %v542, 1.0
      %vm560 = vcmp.ge.f32.partialorder %v543, 1.0
      %vm561 = vcmp.ge.f32.partialorder %v544, 1.0
      %vm562 = vcmp.ge.f32.partialorder %v545, 1.0
      %vm563 = vcmp.ge.f32.partialorder %v546, 1.0
      %vm564 = vcmp.ge.f32.partialorder %v547, 1.0
      %vm565 = vcmp.ge.f32.partialorder %v548, 1.0
      %vm566 = vcmp.ge.f32.partialorder %v549, 1.0
      %v567 = vsel %vm559, 1, 0
      %v568 = vsel %vm560, 1, 0
      %v569 = vsel %vm561, 1, 0
      %v570 = vsel %vm562, 1, 0
      %v571 = vsel %vm563, 1, 0
      %v572 = vsel %vm564, 1, 0
      %v573 = vsel %vm565, 1, 0
      %v574 = vsel %vm566, 1, 0
      %vm575 = vcmp.eq.s32.totalorder %v567, 1
      %vm576 = vcmp.eq.s32.totalorder %v568, 1
      %vm577 = vcmp.eq.s32.totalorder %v569, 1
      %vm578 = vcmp.eq.s32.totalorder %v570, 1
      %vm579 = vcmp.eq.s32.totalorder %v571, 1
      %vm580 = vcmp.eq.s32.totalorder %v572, 1
      %vm581 = vcmp.eq.s32.totalorder %v573, 1
      %vm582 = vcmp.eq.s32.totalorder %v574, 1
      %vm583 = vmpackc.low %vm575, %vm575
      %vm584 = vmpackc.low %vm576, %vm576
      %vm585 = vmpackc.low %vm577, %vm577
      %vm586 = vmpackc.low %vm578, %vm578
      %vm587 = vmpackc.low %vm579, %vm579
      %vm588 = vmpackc.low %vm580, %vm580
      %vm589 = vmpackc.low %vm581, %vm581
      %vm590 = vmpackc.low %vm582, %vm582
      %v591 = vsel %vm583, 65537, 0
      %v592 = vsel %vm584, 65537, 0
      %v593 = vsel %vm585, 65537, 0
      %v594 = vsel %vm586, 65537, 0
      %v595 = vsel %vm587, 65537, 0
      %v596 = vsel %vm588, 65537, 0
      %v597 = vsel %vm589, 65537, 0
      %v598 = vsel %vm590, 65537, 0
      %vm599 = vsmask.f32 3328
      %vm600 = vsmask.f32 7440
      %vm601 = vmor %vm599, %vm600
      %v603 = vshll.u32 %v591, 16
      %v605 = vrot.slane %v603, 5
      %v606 = vshrl.u32 %v591, 16
      %v608 = vrot.slane %v606, 4
      %v609 = vor.u32 %v608, %v605
      %v610 = vrot.slane %v609, 4
      %v612 = vshll.u32 %v592, 16
      %v614 = vrot.slane %v612, 5
      %v615 = vsel %vm601, %v610, %v614
      %v616 = vshrl.u32 %v592, 16
      %v618 = vrot.slane %v616, 4
      %v619 = vor.u32 %v618, %v614
      %v620 = vrot.slane %v619, 4
      %v622 = vshll.u32 %v593, 16
      %v624 = vrot.slane %v622, 5
      %v625 = vsel %vm601, %v620, %v624
      %v626 = vshrl.u32 %v593, 16
      %v628 = vrot.slane %v626, 4
      %v629 = vor.u32 %v628, %v624
      %v630 = vrot.slane %v629, 4
      %v632 = vshll.u32 %v594, 16
      %v634 = vrot.slane %v632, 5
      %v635 = vsel %vm601, %v630, %v634
      %v636 = vshrl.u32 %v594, 16
      %v638 = vrot.slane %v636, 4
      %v639 = vor.u32 %v638, %v634
      %v640 = vrot.slane %v639, 4
      %v642 = vshll.u32 %v595, 16
      %v644 = vrot.slane %v642, 5
      %v645 = vsel %vm601, %v640, %v644
      %v646 = vshrl.u32 %v595, 16
      %v648 = vrot.slane %v646, 4
      %v649 = vor.u32 %v648, %v644
      %v650 = vrot.slane %v649, 4
      %v652 = vshll.u32 %v596, 16
      %v654 = vrot.slane %v652, 5
      %v655 = vsel %vm601, %v650, %v654
      %v656 = vshrl.u32 %v596, 16
      %v658 = vrot.slane %v656, 4
      %v659 = vor.u32 %v658, %v654
      %v660 = vrot.slane %v659, 4
      %v662 = vshll.u32 %v597, 16
      %v664 = vrot.slane %v662, 5
      %v665 = vsel %vm601, %v660, %v664
      %v666 = vshrl.u32 %v597, 16
      %v668 = vrot.slane %v666, 4
      %v669 = vor.u32 %v668, %v664
      %v670 = vrot.slane %v669, 4
      %v672 = vshll.u32 %v598, 16
      %v674 = vrot.slane %v672, 5
      %v675 = vsel %vm601, %v670, %v674
      %v676 = vshrl.u32 %v598, 16
      %v678 = vrot.slane %v676, 4
      %v679 = vor.u32 %v678, %v674
      %v680 = vrot.slane %v679, 4
      %vm681 = vcmp.ne.s16.totalorder %v605, 0
      %vm682 = vcmp.ne.s16.totalorder %v615, 0
      %vm683 = vcmp.ne.s16.totalorder %v625, 0
      %vm684 = vcmp.ne.s16.totalorder %v635, 0
      %vm685 = vcmp.ne.s16.totalorder %v645, 0
      %vm686 = vcmp.ne.s16.totalorder %v655, 0
      %vm687 = vcmp.ne.s16.totalorder %v665, 0
      %vm688 = vcmp.ne.s16.totalorder %v675, 0
      %vm689 = vcmp.ne.s16.totalorder %v680, 0
      %v690 = vsel %vm681, %v550, 0
      %v691 = vsel %vm682, %v551, 0
      %v692 = vsel %vm683, %v552, 0
      %v693 = vsel %vm684, %v553, 0
      %v694 = vsel %vm685, %v554, 0
      %v695 = vsel %vm686, %v555, 0
      %v696 = vsel %vm687, %v556, 0
      %v697 = vsel %vm688, %v557, 0
      %v698 = vsel %vm689, %v558, 0
      %v699 = vld [vmem:[%s3] sm:$0xf]
      %v700 = vld [vmem:[%s3 + $0x4] sm:$0xf]
      %v701 = vld [vmem:[%s3 + $0x8] sm:$0xf]
      %v702 = vld [vmem:[%s3 + $0xc] sm:$0xf]
      %v703 = vld [vmem:[%s3 + $0x10] sm:$0xf]
      %v704 = vld [vmem:[%s3 + $0x14] sm:$0xf]
      %v705 = vld [vmem:[%s3 + $0x18] sm:$0xf]
      %v706 = vld [vmem:[%s3 + $0x1c] sm:$0xf]
      %v707 = vld [vmem:[%s3 + $0x20] sm:$0xf]
      %v708 = vld [vmem:[%s3 + $0x24] sm:$0xf]
      %v709 = vld [vmem:[%s3 + $0x28] sm:$0xf]
      %v710 = vld [vmem:[%s3 + $0x2c] sm:$0xf]
      %v711 = vld [vmem:[%s3 + $0x30] sm:$0xf]
      %v712 = vld [vmem:[%s3 + $0x34] sm:$0xf]
      %v713 = vld [vmem:[%s3 + $0x38] sm:$0xf]
      %v714 = vld [vmem:[%s3 + $0x3c] sm:$0xf]
      %s715 = scalar_lea.vmem %s3, 64
      %v716 = vld [vmem:[%s715] sm:$0xf]
      %v717 = vld [vmem:[%s715 + $0x4] sm:$0xf]
      %v718 = vld [vmem:[%s715 + $0x8] sm:$0xf]
      %v719 = vld [vmem:[%s715 + $0xc] sm:$0xf]
      %v720 = vld [vmem:[%s715 + $0x10] sm:$0xf]
      %v721 = vld [vmem:[%s715 + $0x14] sm:$0xf]
      %v722 = vld [vmem:[%s715 + $0x18] sm:$0xf]
      %v723 = vld [vmem:[%s715 + $0x1c] sm:$0xf]
      %v724 = vld [vmem:[%s715 + $0x20] sm:$0xf]
      %v725 = vld [vmem:[%s715 + $0x24] sm:$0xf]
      %v726 = vld [vmem:[%s715 + $0x28] sm:$0xf]
      %v727 = vld [vmem:[%s715 + $0x2c] sm:$0xf]
      %v728 = vld [vmem:[%s715 + $0x30] sm:$0xf]
      %v729 = vld [vmem:[%s715 + $0x34] sm:$0xf]
      %v730 = vld [vmem:[%s715 + $0x38] sm:$0xf]
      %v731 = vld [vmem:[%s715 + $0x3c] sm:$0xf]
      %v740 = vunpack.c.l.b16 %v551
      %v741 = vunpack.c.l.b16 %v552
      %v742 = vunpack.c.l.b16 %v553
      %v743 = vunpack.c.l.b16 %v554
      %v744 = vunpack.c.l.b16 %v555
      %v745 = vunpack.c.l.b16 %v556
      %v746 = vunpack.c.l.b16 %v557
      %v747 = vunpack.c.l.b16 %v558
      %v748 = vpack.c.b16 %v741, %v740
      %v749 = vpack.c.b16 %v743, %v742
      %v750 = vpack.c.b16 %v745, %v744
      %v751 = vpack.c.b16 %v747, %v746
      %v772 = vunpack.c.l.b16 %v716
      %v773 = vunpack.c.l.b16 %v717
      %v774 = vunpack.c.l.b16 %v718
      %v775 = vunpack.c.l.b16 %v719
      %v776 = vunpack.c.l.b16 %v720
      %v777 = vunpack.c.l.b16 %v721
      %v778 = vunpack.c.l.b16 %v722
      %v779 = vunpack.c.l.b16 %v723
      %v780 = vunpack.c.l.b16 %v724
      %v781 = vunpack.c.l.b16 %v725
      %v782 = vunpack.c.l.b16 %v726
      %v783 = vunpack.c.l.b16 %v727
      %v784 = vunpack.c.l.b16 %v728
      %v785 = vunpack.c.l.b16 %v729
      %v786 = vunpack.c.l.b16 %v730
      %v787 = vunpack.c.l.b16 %v731
      %v788 = vpack.c.b16 %v773, %v772
      %v789 = vpack.c.b16 %v775, %v774
      %v790 = vpack.c.b16 %v777, %v776
      %v791 = vpack.c.b16 %v779, %v778
      %v792 = vpack.c.b16 %v781, %v780
      %v793 = vpack.c.b16 %v783, %v782
      %v794 = vpack.c.b16 %v785, %v784
      %v795 = vpack.c.b16 %v787, %v786
      %804 = vmatprep.subr.bf16.mxu0 0
      %805 = vmatpush1.bf16.msra.mxu0 %v788
      %806 = vmatprep.subr.bf16.mxu0 0
      %807 = vmatpush1.bf16.msra.mxu0 %v789
      %808 = vmatprep.subr.bf16.mxu0 0
      %809 = vmatpush1.bf16.msra.mxu0 %v790
      %810 = vmatprep.subr.bf16.mxu0 0
      %811 = vmatpush1.bf16.msra.mxu0 %v791
      %812 = vmatprep.subr.bf16.mxu0 0
      %813 = vmatpush1.bf16.msra.mxu0 %v792
      %814 = vmatprep.subr.bf16.mxu0 0
      %815 = vmatpush1.bf16.msra.mxu0 %v793
      %816 = vmatprep.subr.bf16.mxu0 0
      %817 = vmatpush1.bf16.msra.mxu0 %v794
      %818 = vmatprep.subr.bf16.mxu0 0
      %819 = vmatpush1.bf16.msra.mxu0 %v795
      %820 = vmatprep.subr.bf16.mxu0 0
      %821 = vmatpush1.bf16.msra.mxu0 0
      %822 = vmatprep.subr.bf16.mxu0 0
      %823 = vmatpush1.bf16.msra.mxu0 0
      %824 = vmatprep.subr.bf16.mxu0 0
      %825 = vmatpush1.bf16.msra.mxu0 0
      %826 = vmatprep.subr.bf16.mxu0 0
      %827 = vmatpush1.bf16.msra.mxu0 0
      %828 = vmatprep.subr.bf16.mxu0 0
      %829 = vmatpush1.bf16.msra.mxu0 0
      %830 = vmatprep.subr.bf16.mxu0 0
      %831 = vmatpush1.bf16.msra.mxu0 0
      %832 = vmatprep.subr.bf16.mxu0 0
      %833 = vmatpush1.bf16.msra.mxu0 0
      %834 = vmatprep.subr.bf16.mxu0 0
      %835 = vmatpush1.bf16.msra.mxu0 0
      %836 = vmatprep.mubr.bf16.mxu0 0
      %837 = vmatmul.mubr.bf16.gmra.mrb[0].mxu0 %v748
      %v838 = vpop.f32.mrb[0].mxu0
      %v839 = vadd.f32 0.0, %v838
      %v840 = vpop.f32.mrb[0].mxu0
      %v841 = vpop.f32.mrb[0].mxu0
      %v842 = vadd.f32 0.0, %v841
      %v843 = vpop.f32.mrb[0].mxu0
      %844 = vmatprep.mubr.bf16.mxu0 0
      %845 = vmatmul.mubr.bf16.gmra.mrb[0].mxu0 %v749
      %v846 = vpop.f32.mrb[0].mxu0
      %v847 = vadd.f32 0.0, %v846
      %v848 = vpop.f32.mrb[0].mxu0
      %v849 = vpop.f32.mrb[0].mxu0
      %v850 = vadd.f32 0.0, %v849
      %v851 = vpop.f32.mrb[0].mxu0
      %852 = vmatprep.mubr.bf16.mxu0 0
      %853 = vmatmul.mubr.bf16.gmra.mrb[0].mxu0 %v750
      %v854 = vpop.f32.mrb[0].mxu0
      %v855 = vadd.f32 0.0, %v854
      %v856 = vpop.f32.mrb[0].mxu0
      %v857 = vpop.f32.mrb[0].mxu0
      %v858 = vadd.f32 0.0, %v857
      %v859 = vpop.f32.mrb[0].mxu0
      %860 = vmatprep.mubr.bf16.mxu0 0
      %861 = vmatmul.mubr.bf16.gmra.mrb[0].mxu0 %v751
      %v862 = vpop.f32.mrb[0].mxu0
      %v863 = vadd.f32 0.0, %v862
      %v864 = vpop.f32.mrb[0].mxu0
      %v865 = vpop.f32.mrb[0].mxu0
      %v866 = vadd.f32 0.0, %v865
      %v867 = vpop.f32.mrb[0].mxu0
      %868 = vdwg.mxu0
      %v878 = vunpack.c.l.b16 %v690
      %v879 = vunpack.c.l.b16 %v691
      %v880 = vunpack.c.l.b16 %v692
      %v881 = vunpack.c.l.b16 %v693
      %v882 = vunpack.c.l.b16 %v694
      %v883 = vunpack.c.l.b16 %v695
      %v884 = vunpack.c.l.b16 %v696
      %v885 = vunpack.c.l.b16 %v697
      %v886 = vunpack.c.l.b16 %v698
      %v887 = vpack.c.b16 %v879, %v878
      %v888 = vpack.c.b16 %v881, %v880
      %v889 = vpack.c.b16 %v883, %v882
      %v890 = vpack.c.b16 %v885, %v884
      %v891 = vpack.c.b16 %v886, %v886
      %vm892 = vsmask.f32 4352
      %v894 = vshrl.u32 %v887, 16
      %v896 = vrot.slane %v894, 3
      %v897 = vshll.u32 %v887, 16
      %v899 = vrot.slane %v897, 4
      %v900 = vor.u32 %v896, %v899
      %v902 = vshrl.u32 %v888, 16
      %v904 = vrot.slane %v902, 3
      %v905 = vshll.u32 %v888, 16
      %v907 = vrot.slane %v905, 4
      %v908 = vor.u32 %v904, %v907
      %v909 = vsel %vm892, %v900, %v908
      %v911 = vshrl.u32 %v889, 16
      %v913 = vrot.slane %v911, 3
      %v914 = vshll.u32 %v889, 16
      %v916 = vrot.slane %v914, 4
      %v917 = vor.u32 %v913, %v916
      %v918 = vsel %vm892, %v908, %v917
      %v920 = vshrl.u32 %v890, 16
      %v922 = vrot.slane %v920, 3
      %v923 = vshll.u32 %v890, 16
      %v925 = vrot.slane %v923, 4
      %v926 = vor.u32 %v922, %v925
      %v927 = vsel %vm892, %v917, %v926
      %v929 = vshrl.u32 %v891, 16
      %v931 = vrot.slane %v929, 3
      %v932 = vshll.u32 %v891, 16
      %v934 = vrot.slane %v932, 4
      %v935 = vor.u32 %v931, %v934
      %v936 = vsel %vm892, %v926, %v935
      %v957 = vunpack.c.l.b16 %v699
      %v958 = vunpack.c.l.b16 %v700
      %v959 = vunpack.c.l.b16 %v701
      %v960 = vunpack.c.l.b16 %v702
      %v961 = vunpack.c.l.b16 %v703
      %v962 = vunpack.c.l.b16 %v704
      %v963 = vunpack.c.l.b16 %v705
      %v964 = vunpack.c.l.b16 %v706
      %v965 = vunpack.c.l.b16 %v707
      %v966 = vunpack.c.l.b16 %v708
      %v967 = vunpack.c.l.b16 %v709
      %v968 = vunpack.c.l.b16 %v710
      %v969 = vunpack.c.l.b16 %v711
      %v970 = vunpack.c.l.b16 %v712
      %v971 = vunpack.c.l.b16 %v713
      %v972 = vunpack.c.l.b16 %v714
      %v973 = vpack.c.b16 %v958, %v957
      %v974 = vpack.c.b16 %v960, %v959
      %v975 = vpack.c.b16 %v962, %v961
      %v976 = vpack.c.b16 %v964, %v963
      %v977 = vpack.c.b16 %v966, %v965
      %v978 = vpack.c.b16 %v968, %v967
      %v979 = vpack.c.b16 %v970, %v969
      %v980 = vpack.c.b16 %v972, %v971
      %989 = vmatprep.subr.bf16.mxu0 0
      %990 = vmatpush1.bf16.msra.mxu0 %v973
      %991 = vmatprep.subr.bf16.mxu0 0
      %992 = vmatpush1.bf16.msra.mxu0 %v974
      %993 = vmatprep.subr.bf16.mxu0 0
      %994 = vmatpush1.bf16.msra.mxu0 %v975
      %995 = vmatprep.subr.bf16.mxu0 0
      %996 = vmatpush1.bf16.msra.mxu0 %v976
      %997 = vmatprep.subr.bf16.mxu0 0
      %998 = vmatpush1.bf16.msra.mxu0 %v977
      %999 = vmatprep.subr.bf16.mxu0 0
      %1000 = vmatpush1.bf16.msra.mxu0 %v978
      %1001 = vmatprep.subr.bf16.mxu0 0
      %1002 = vmatpush1.bf16.msra.mxu0 %v979
      %1003 = vmatprep.subr.bf16.mxu0 0
      %1004 = vmatpush1.bf16.msra.mxu0 %v980
      %1005 = vmatprep.subr.bf16.mxu0 0
      %1006 = vmatpush1.bf16.msra.mxu0 0
      %1007 = vmatprep.subr.bf16.mxu0 0
      %1008 = vmatpush1.bf16.msra.mxu0 0
      %1009 = vmatprep.subr.bf16.mxu0 0
      %1010 = vmatpush1.bf16.msra.mxu0 0
      %1011 = vmatprep.subr.bf16.mxu0 0
      %1012 = vmatpush1.bf16.msra.mxu0 0
      %1013 = vmatprep.subr.bf16.mxu0 0
      %1014 = vmatpush1.bf16.msra.mxu0 0
      %1015 = vmatprep.subr.bf16.mxu0 0
      %1016 = vmatpush1.bf16.msra.mxu0 0
      %1017 = vmatprep.subr.bf16.mxu0 0
      %1018 = vmatpush1.bf16.msra.mxu0 0
      %1019 = vmatprep.subr.bf16.mxu0 0
      %1020 = vmatpush1.bf16.msra.mxu0 0
      %1021 = vmatprep.mubr.bf16.mxu0 0
      %1022 = vmatmul.mubr.bf16.gmra.mrb[0].mxu0 %v909
      %v1023 = vpop.f32.mrb[0].mxu0
      %v1024 = vadd.f32 %v839, %v1023
      %v1025 = vpop.f32.mrb[0].mxu0
      %v1026 = vpop.f32.mrb[0].mxu0
      %v1027 = vadd.f32 %v842, %v1026
      %v1028 = vpop.f32.mrb[0].mxu0
      %1029 = vmatprep.mubr.bf16.mxu0 0
      %1030 = vmatmul.mubr.bf16.gmra.mrb[0].mxu0 %v918
      %v1031 = vpop.f32.mrb[0].mxu0
      %v1032 = vadd.f32 %v847, %v1031
      %v1033 = vpop.f32.mrb[0].mxu0
      %v1034 = vpop.f32.mrb[0].mxu0
      %v1035 = vadd.f32 %v850, %v1034
      %v1036 = vpop.f32.mrb[0].mxu0
      %1037 = vmatprep.mubr.bf16.mxu0 0
      %1038 = vmatmul.mubr.bf16.gmra.mrb[0].mxu0 %v927
      %v1039 = vpop.f32.mrb[0].mxu0
      %v1040 = vadd.f32 %v855, %v1039
      %v1041 = vpop.f32.mrb[0].mxu0
      %v1042 = vpop.f32.mrb[0].mxu0
      %v1043 = vadd.f32 %v858, %v1042
      %v1044 = vpop.f32.mrb[0].mxu0
      %1045 = vmatprep.mubr.bf16.mxu0 0
      %1046 = vmatmul.mubr.bf16.gmra.mrb[0].mxu0 %v936
      %v1047 = vpop.f32.mrb[0].mxu0
      %v1048 = vadd.f32 %v863, %v1047
      %v1049 = vpop.f32.mrb[0].mxu0
      %v1050 = vpop.f32.mrb[0].mxu0
      %v1051 = vadd.f32 %v866, %v1050
      %v1052 = vpop.f32.mrb[0].mxu0
      %1053 = vdwg.mxu0
      %v1054 = vld [vmem:[#allocation2 + $0x4] sm:$0xf]
      %v1055 = vld [vmem:[#allocation2 + $0x8] sm:$0xf]
      %v1056 = vld [vmem:[#allocation2 + $0xc] sm:$0xf]
      %v1057 = vld [vmem:[#allocation2 + $0x10] sm:$0xf]
      %v1058 = vld [vmem:[#allocation2 + $0x14] sm:$0xf]
      %v1059 = vld [vmem:[#allocation2 + $0x18] sm:$0xf]
      %v1060 = vld [vmem:[#allocation2 + $0x1c] sm:$0xf]
      %v1061 = vld [vmem:[#allocation2 + $0x20] sm:$0xf]
      %v1062 = vld [vmem:[#allocation2 + $0x24] sm:$0x1]
      %vm1063 = vcmp.lt.f32.partialorder %v542, 7.0
      %vm1064 = vcmp.lt.f32.partialorder %v543, 7.0
      %vm1065 = vcmp.lt.f32.partialorder %v544, 7.0
      %vm1066 = vcmp.lt.f32.partialorder %v545, 7.0
      %vm1067 = vcmp.lt.f32.partialorder %v546, 7.0
      %vm1068 = vcmp.lt.f32.partialorder %v547, 7.0
      %vm1069 = vcmp.lt.f32.partialorder %v548, 7.0
      %vm1070 = vcmp.lt.f32.partialorder %v549, 7.0
      %v1071 = vsel %vm1063, 1, 0
      %v1072 = vsel %vm1064, 1, 0
      %v1073 = vsel %vm1065, 1, 0
      %v1074 = vsel %vm1066, 1, 0
      %v1075 = vsel %vm1067, 1, 0
      %v1076 = vsel %vm1068, 1, 0
      %v1077 = vsel %vm1069, 1, 0
      %v1078 = vsel %vm1070, 1, 0
      %vm1079 = vcmp.eq.s32.totalorder %v1071, 1
      %vm1080 = vcmp.eq.s32.totalorder %v1072, 1
      %vm1081 = vcmp.eq.s32.totalorder %v1073, 1
      %vm1082 = vcmp.eq.s32.totalorder %v1074, 1
      %vm1083 = vcmp.eq.s32.totalorder %v1075, 1
      %vm1084 = vcmp.eq.s32.totalorder %v1076, 1
      %vm1085 = vcmp.eq.s32.totalorder %v1077, 1
      %vm1086 = vcmp.eq.s32.totalorder %v1078, 1
      %vm1087 = vmpackc.low %vm1079, %vm1079
      %vm1088 = vmpackc.low %vm1080, %vm1080
      %vm1089 = vmpackc.low %vm1081, %vm1081
      %vm1090 = vmpackc.low %vm1082, %vm1082
      %vm1091 = vmpackc.low %vm1083, %vm1083
      %vm1092 = vmpackc.low %vm1084, %vm1084
      %vm1093 = vmpackc.low %vm1085, %vm1085
      %vm1094 = vmpackc.low %vm1086, %vm1086
      %v1095 = vsel %vm1087, 65537, 0
      %v1096 = vsel %vm1088, 65537, 0
      %v1097 = vsel %vm1089, 65537, 0
      %v1098 = vsel %vm1090, 65537, 0
      %v1099 = vsel %vm1091, 65537, 0
      %v1100 = vsel %vm1092, 65537, 0
      %v1101 = vsel %vm1093, 65537, 0
      %v1102 = vsel %vm1094, 65537, 0
      %vm1103 = vsmask.f32 4368
      %vm1104 = vmor %vm280, %vm1103
      %v1106 = vshrl.u32 %v1095, 16
      %v1108 = vrot.slane %v1106, 7
      %v1109 = vshll.u32 %v1095, 16
      %v1111 = vor.u32 %v1108, %v1109
      %v1112 = vrot.slane %v1108, 4
      %v1114 = vshrl.u32 %v1096, 16
      %v1116 = vrot.slane %v1114, 7
      %v1117 = vshll.u32 %v1096, 16
      %v1119 = vor.u32 %v1116, %v1117
      %v1120 = vsel %vm1104, %v1112, %v1119
      %v1121 = vrot.slane %v1116, 4
      %v1123 = vshrl.u32 %v1097, 16
      %v1125 = vrot.slane %v1123, 7
      %v1126 = vshll.u32 %v1097, 16
      %v1128 = vor.u32 %v1125, %v1126
      %v1129 = vsel %vm1104, %v1121, %v1128
      %v1130 = vrot.slane %v1125, 4
      %v1132 = vshrl.u32 %v1098, 16
      %v1134 = vrot.slane %v1132, 7
      %v1135 = vshll.u32 %v1098, 16
      %v1137 = vor.u32 %v1134, %v1135
      %v1138 = vsel %vm1104, %v1130, %v1137
      %v1139 = vrot.slane %v1134, 4
      %v1141 = vshrl.u32 %v1099, 16
      %v1143 = vrot.slane %v1141, 7
      %v1144 = vshll.u32 %v1099, 16
      %v1146 = vor.u32 %v1143, %v1144
      %v1147 = vsel %vm1104, %v1139, %v1146
      %v1148 = vrot.slane %v1143, 4
      %v1150 = vshrl.u32 %v1100, 16
      %v1152 = vrot.slane %v1150, 7
      %v1153 = vshll.u32 %v1100, 16
      %v1155 = vor.u32 %v1152, %v1153
      %v1156 = vsel %vm1104, %v1148, %v1155
      %v1157 = vrot.slane %v1152, 4
      %v1159 = vshrl.u32 %v1101, 16
      %v1161 = vrot.slane %v1159, 7
      %v1162 = vshll.u32 %v1101, 16
      %v1164 = vor.u32 %v1161, %v1162
      %v1165 = vsel %vm1104, %v1157, %v1164
      %v1166 = vrot.slane %v1161, 4
      %v1168 = vshrl.u32 %v1102, 16
      %v1170 = vrot.slane %v1168, 7
      %v1171 = vshll.u32 %v1102, 16
      %v1173 = vor.u32 %v1170, %v1171
      %v1174 = vsel %vm1104, %v1166, %v1173
      %v1175 = vrot.slane %v1170, 4
      %vm1176 = vcmp.ne.s16.totalorder %v1111, 0
      %vm1177 = vcmp.ne.s16.totalorder %v1120, 0
      %vm1178 = vcmp.ne.s16.totalorder %v1129, 0
      %vm1179 = vcmp.ne.s16.totalorder %v1138, 0
      %vm1180 = vcmp.ne.s16.totalorder %v1147, 0
      %vm1181 = vcmp.ne.s16.totalorder %v1156, 0
      %vm1182 = vcmp.ne.s16.totalorder %v1165, 0
      %vm1183 = vcmp.ne.s16.totalorder %v1174, 0
      %vm1184 = vcmp.ne.s16.totalorder %v1175, 0
      %v1185 = vsel %vm1176, %v1054, 0
      %v1186 = vsel %vm1177, %v1055, 0
      %v1187 = vsel %vm1178, %v1056, 0
      %v1188 = vsel %vm1179, %v1057, 0
      %v1189 = vsel %vm1180, %v1058, 0
      %v1190 = vsel %vm1181, %v1059, 0
      %v1191 = vsel %vm1182, %v1060, 0
      %v1192 = vsel %vm1183, %v1061, 0
      %v1193 = vsel %vm1184, %v1062, 0
      %s1194 = scalar_lea.vmem %s3, 128
      %v1195 = vld [vmem:[%s1194] sm:$0xf]
      %v1196 = vld [vmem:[%s1194 + $0x4] sm:$0xf]
      %v1197 = vld [vmem:[%s1194 + $0x8] sm:$0xf]
      %v1198 = vld [vmem:[%s1194 + $0xc] sm:$0xf]
      %v1199 = vld [vmem:[%s1194 + $0x10] sm:$0xf]
      %v1200 = vld [vmem:[%s1194 + $0x14] sm:$0xf]
      %v1201 = vld [vmem:[%s1194 + $0x18] sm:$0xf]
      %v1202 = vld [vmem:[%s1194 + $0x1c] sm:$0xf]
      %v1203 = vld [vmem:[%s1194 + $0x20] sm:$0xf]
      %v1204 = vld [vmem:[%s1194 + $0x24] sm:$0xf]
      %v1205 = vld [vmem:[%s1194 + $0x28] sm:$0xf]
      %v1206 = vld [vmem:[%s1194 + $0x2c] sm:$0xf]
      %v1207 = vld [vmem:[%s1194 + $0x30] sm:$0xf]
      %v1208 = vld [vmem:[%s1194 + $0x34] sm:$0xf]
      %v1209 = vld [vmem:[%s1194 + $0x38] sm:$0xf]
      %v1210 = vld [vmem:[%s1194 + $0x3c] sm:$0xf]
      %v1220 = vunpack.c.l.b16 %v1185
      %v1221 = vunpack.c.l.b16 %v1186
      %v1222 = vunpack.c.l.b16 %v1187
      %v1223 = vunpack.c.l.b16 %v1188
      %v1224 = vunpack.c.l.b16 %v1189
      %v1225 = vunpack.c.l.b16 %v1190
      %v1226 = vunpack.c.l.b16 %v1191
      %v1227 = vunpack.c.l.b16 %v1192
      %v1228 = vunpack.c.l.b16 %v1193
      %v1229 = vpack.c.b16 %v1221, %v1220
      %v1230 = vpack.c.b16 %v1223, %v1222
      %v1231 = vpack.c.b16 %v1225, %v1224
      %v1232 = vpack.c.b16 %v1227, %v1226
      %v1233 = vpack.c.b16 %v1228, %v1228
      %vm1234 = vsmask.f32 7424
      %v1236 = vshrl.u32 %v1229, 16
      %v1238 = vshll.u32 %v1229, 16
      %v1240 = vrot.slane %v1238, 1
      %v1241 = vor.u32 %v1236, %v1240
      %v1243 = vshll.u32 %v1230, 16
      %v1245 = vrot.slane %v1243, 1
      %v1246 = vsel %vm1234, %v1241, %v1245
      %v1247 = vshrl.u32 %v1230, 16
      %v1249 = vor.u32 %v1247, %v1245
      %v1251 = vshll.u32 %v1231, 16
      %v1253 = vrot.slane %v1251, 1
      %v1254 = vsel %vm1234, %v1249, %v1253
      %v1255 = vshrl.u32 %v1231, 16
      %v1257 = vor.u32 %v1255, %v1253
      %v1259 = vshll.u32 %v1232, 16
      %v1261 = vrot.slane %v1259, 1
      %v1262 = vsel %vm1234, %v1257, %v1261
      %v1263 = vshrl.u32 %v1232, 16
      %v1265 = vor.u32 %v1263, %v1261
      %v1267 = vshll.u32 %v1233, 16
      %v1269 = vrot.slane %v1267, 1
      %v1270 = vsel %vm1234, %v1265, %v1269
      %v1291 = vunpack.c.l.b16 %v1195
      %v1292 = vunpack.c.l.b16 %v1196
      %v1293 = vunpack.c.l.b16 %v1197
      %v1294 = vunpack.c.l.b16 %v1198
      %v1295 = vunpack.c.l.b16 %v1199
      %v1296 = vunpack.c.l.b16 %v1200
      %v1297 = vunpack.c.l.b16 %v1201
      %v1298 = vunpack.c.l.b16 %v1202
      %v1299 = vunpack.c.l.b16 %v1203
      %v1300 = vunpack.c.l.b16 %v1204
      %v1301 = vunpack.c.l.b16 %v1205
      %v1302 = vunpack.c.l.b16 %v1206
      %v1303 = vunpack.c.l.b16 %v1207
      %v1304 = vunpack.c.l.b16 %v1208
      %v1305 = vunpack.c.l.b16 %v1209
      %v1306 = vunpack.c.l.b16 %v1210
      %v1307 = vpack.c.b16 %v1292, %v1291
      %v1308 = vpack.c.b16 %v1294, %v1293
      %v1309 = vpack.c.b16 %v1296, %v1295
      %v1310 = vpack.c.b16 %v1298, %v1297
      %v1311 = vpack.c.b16 %v1300, %v1299
      %v1312 = vpack.c.b16 %v1302, %v1301
      %v1313 = vpack.c.b16 %v1304, %v1303
      %v1314 = vpack.c.b16 %v1306, %v1305
      %1323 = vmatprep.subr.bf16.mxu0 0
      %1324 = vmatpush1.bf16.msra.mxu0 %v1307
      %1325 = vmatprep.subr.bf16.mxu0 0
      %1326 = vmatpush1.bf16.msra.mxu0 %v1308
      %1327 = vmatprep.subr.bf16.mxu0 0
      %1328 = vmatpush1.bf16.msra.mxu0 %v1309
      %1329 = vmatprep.subr.bf16.mxu0 0
      %1330 = vmatpush1.bf16.msra.mxu0 %v1310
      %1331 = vmatprep.subr.bf16.mxu0 0
      %1332 = vmatpush1.bf16.msra.mxu0 %v1311
      %1333 = vmatprep.subr.bf16.mxu0 0
      %1334 = vmatpush1.bf16.msra.mxu0 %v1312
      %1335 = vmatprep.subr.bf16.mxu0 0
      %1336 = vmatpush1.bf16.msra.mxu0 %v1313
      %1337 = vmatprep.subr.bf16.mxu0 0
      %1338 = vmatpush1.bf16.msra.mxu0 %v1314
      %1339 = vmatprep.subr.bf16.mxu0 0
      %1340 = vmatpush1.bf16.msra.mxu0 0
      %1341 = vmatprep.subr.bf16.mxu0 0
      %1342 = vmatpush1.bf16.msra.mxu0 0
      %1343 = vmatprep.subr.bf16.mxu0 0
      %1344 = vmatpush1.bf16.msra.mxu0 0
      %1345 = vmatprep.subr.bf16.mxu0 0
      %1346 = vmatpush1.bf16.msra.mxu0 0
      %1347 = vmatprep.subr.bf16.mxu0 0
      %1348 = vmatpush1.bf16.msra.mxu0 0
      %1349 = vmatprep.subr.bf16.mxu0 0
      %1350 = vmatpush1.bf16.msra.mxu0 0
      %1351 = vmatprep.subr.bf16.mxu0 0
      %1352 = vmatpush1.bf16.msra.mxu0 0
      %1353 = vmatprep.subr.bf16.mxu0 0
      %1354 = vmatpush1.bf16.msra.mxu0 0
      %1355 = vmatprep.mubr.bf16.mxu0 0
      %1356 = vmatmul.mubr.bf16.gmra.mrb[0].mxu0 %v1246
      %v1357 = vpop.f32.mrb[0].mxu0
      %v1358 = vadd.f32 0.0, %v1357
      %v1359 = vpop.f32.mrb[0].mxu0
      %v1360 = vpop.f32.mrb[0].mxu0
      %v1361 = vadd.f32 0.0, %v1360
      %v1362 = vpop.f32.mrb[0].mxu0
      %1363 = vmatprep.mubr.bf16.mxu0 0
      %1364 = vmatmul.mubr.bf16.gmra.mrb[0].mxu0 %v1254
      %v1365 = vpop.f32.mrb[0].mxu0
      %v1366 = vadd.f32 0.0, %v1365
      %v1367 = vpop.f32.mrb[0].mxu0
      %v1368 = vpop.f32.mrb[0].mxu0
      %v1369 = vadd.f32 0.0, %v1368
      %v1370 = vpop.f32.mrb[0].mxu0
      %1371 = vmatprep.mubr.bf16.mxu0 0
      %1372 = vmatmul.mubr.bf16.gmra.mrb[0].mxu0 %v1262
      %v1373 = vpop.f32.mrb[0].mxu0
      %v1374 = vadd.f32 0.0, %v1373
      %v1375 = vpop.f32.mrb[0].mxu0
      %v1376 = vpop.f32.mrb[0].mxu0
      %v1377 = vadd.f32 0.0, %v1376
      %v1378 = vpop.f32.mrb[0].mxu0
      %1379 = vmatprep.mubr.bf16.mxu0 0
      %1380 = vmatmul.mubr.bf16.gmra.mrb[0].mxu0 %v1270
      %v1381 = vpop.f32.mrb[0].mxu0
      %v1382 = vadd.f32 0.0, %v1381
      %v1383 = vpop.f32.mrb[0].mxu0
      %v1384 = vpop.f32.mrb[0].mxu0
      %v1385 = vadd.f32 0.0, %v1384
      %v1386 = vpop.f32.mrb[0].mxu0
      %1387 = vdwg.mxu0
      %v1388 = vadd.f32 %v1024, %v1358
      %v1389 = vadd.f32 %v1027, %v1361
      %v1390 = vadd.f32 %v1032, %v1366
      %v1391 = vadd.f32 %v1035, %v1369
      %v1392 = vadd.f32 %v1040, %v1374
      %v1393 = vadd.f32 %v1043, %v1377
      %v1394 = vadd.f32 %v1048, %v1382
      %v1395 = vadd.f32 %v1051, %v1385
      %v1396 = vld [vmem:[#allocation2 + $0x4] sm:$0x8]
      %v1397 = vld [vmem:[#allocation2 + $0x24] sm:$0xf]
      %v1398 = vsel %vm681, %v1396, 0
      %v1399 = vsel %vm682, %v1055, 0
      %v1400 = vsel %vm683, %v1056, 0
      %v1401 = vsel %vm684, %v1057, 0
      %v1402 = vsel %vm685, %v1058, 0
      %v1403 = vsel %vm686, %v1059, 0
      %v1404 = vsel %vm687, %v1060, 0
      %v1405 = vsel %vm688, %v1061, 0
      %v1406 = vsel %vm689, %v1397, 0
      %s1407 = scalar_lea.vmem %s3, 192
      %v1408 = vld [vmem:[%s1407] sm:$0xf]
      %v1409 = vld [vmem:[%s1407 + $0x4] sm:$0xf]
      %v1410 = vld [vmem:[%s1407 + $0x8] sm:$0xf]
      %v1411 = vld [vmem:[%s1407 + $0xc] sm:$0xf]
      %v1412 = vld [vmem:[%s1407 + $0x10] sm:$0xf]
      %v1413 = vld [vmem:[%s1407 + $0x14] sm:$0xf]
      %v1414 = vld [vmem:[%s1407 + $0x18] sm:$0xf]
      %v1415 = vld [vmem:[%s1407 + $0x1c] sm:$0xf]
      %v1416 = vld [vmem:[%s1407 + $0x20] sm:$0xf]
      %v1417 = vld [vmem:[%s1407 + $0x24] sm:$0xf]
      %v1418 = vld [vmem:[%s1407 + $0x28] sm:$0xf]
      %v1419 = vld [vmem:[%s1407 + $0x2c] sm:$0xf]
      %v1420 = vld [vmem:[%s1407 + $0x30] sm:$0xf]
      %v1421 = vld [vmem:[%s1407 + $0x34] sm:$0xf]
      %v1422 = vld [vmem:[%s1407 + $0x38] sm:$0xf]
      %v1423 = vld [vmem:[%s1407 + $0x3c] sm:$0xf]
      %v1433 = vunpack.c.l.b16 %v1398
      %v1434 = vunpack.c.l.b16 %v1399
      %v1435 = vunpack.c.l.b16 %v1400
      %v1436 = vunpack.c.l.b16 %v1401
      %v1437 = vunpack.c.l.b16 %v1402
      %v1438 = vunpack.c.l.b16 %v1403
      %v1439 = vunpack.c.l.b16 %v1404
      %v1440 = vunpack.c.l.b16 %v1405
      %v1441 = vunpack.c.l.b16 %v1406
      %v1442 = vpack.c.b16 %v1434, %v1433
      %v1443 = vpack.c.b16 %v1436, %v1435
      %v1444 = vpack.c.b16 %v1438, %v1437
      %v1445 = vpack.c.b16 %v1440, %v1439
      %v1446 = vpack.c.b16 %v1441, %v1441
      %v1448 = vshrl.u32 %v1442, 16
      %v1450 = vrot.slane %v1448, 3
      %v1451 = vshll.u32 %v1442, 16
      %v1453 = vrot.slane %v1451, 4
      %v1454 = vor.u32 %v1450, %v1453
      %v1456 = vshrl.u32 %v1443, 16
      %v1458 = vrot.slane %v1456, 3
      %v1459 = vshll.u32 %v1443, 16
      %v1461 = vrot.slane %v1459, 4
      %v1462 = vor.u32 %v1458, %v1461
      %v1463 = vsel %vm892, %v1454, %v1462
      %v1465 = vshrl.u32 %v1444, 16
      %v1467 = vrot.slane %v1465, 3
      %v1468 = vshll.u32 %v1444, 16
      %v1470 = vrot.slane %v1468, 4
      %v1471 = vor.u32 %v1467, %v1470
      %v1472 = vsel %vm892, %v1462, %v1471
      %v1474 = vshrl.u32 %v1445, 16
      %v1476 = vrot.slane %v1474, 3
      %v1477 = vshll.u32 %v1445, 16
      %v1479 = vrot.slane %v1477, 4
      %v1480 = vor.u32 %v1476, %v1479
      %v1481 = vsel %vm892, %v1471, %v1480
      %v1483 = vshrl.u32 %v1446, 16
      %v1485 = vrot.slane %v1483, 3
      %v1486 = vshll.u32 %v1446, 16
      %v1488 = vrot.slane %v1486, 4
      %v1489 = vor.u32 %v1485, %v1488
      %v1490 = vsel %vm892, %v1480, %v1489
      %v1511 = vunpack.c.l.b16 %v1408
      %v1512 = vunpack.c.l.b16 %v1409
      %v1513 = vunpack.c.l.b16 %v1410
      %v1514 = vunpack.c.l.b16 %v1411
      %v1515 = vunpack.c.l.b16 %v1412
      %v1516 = vunpack.c.l.b16 %v1413
      %v1517 = vunpack.c.l.b16 %v1414
      %v1518 = vunpack.c.l.b16 %v1415
      %v1519 = vunpack.c.l.b16 %v1416
      %v1520 = vunpack.c.l.b16 %v1417
      %v1521 = vunpack.c.l.b16 %v1418
      %v1522 = vunpack.c.l.b16 %v1419
      %v1523 = vunpack.c.l.b16 %v1420
      %v1524 = vunpack.c.l.b16 %v1421
      %v1525 = vunpack.c.l.b16 %v1422
      %v1526 = vunpack.c.l.b16 %v1423
      %v1527 = vpack.c.b16 %v1512, %v1511
      %v1528 = vpack.c.b16 %v1514, %v1513
      %v1529 = vpack.c.b16 %v1516, %v1515
      %v1530 = vpack.c.b16 %v1518, %v1517
      %v1531 = vpack.c.b16 %v1520, %v1519
      %v1532 = vpack.c.b16 %v1522, %v1521
      %v1533 = vpack.c.b16 %v1524, %v1523
      %v1534 = vpack.c.b16 %v1526, %v1525
      %1543 = vmatprep.subr.bf16.mxu0 0
      %1544 = vmatpush1.bf16.msra.mxu0 %v1527
      %1545 = vmatprep.subr.bf16.mxu0 0
      %1546 = vmatpush1.bf16.msra.mxu0 %v1528
      %1547 = vmatprep.subr.bf16.mxu0 0
      %1548 = vmatpush1.bf16.msra.mxu0 %v1529
      %1549 = vmatprep.subr.bf16.mxu0 0
      %1550 = vmatpush1.bf16.msra.mxu0 %v1530
      %1551 = vmatprep.subr.bf16.mxu0 0
      %1552 = vmatpush1.bf16.msra.mxu0 %v1531
      %1553 = vmatprep.subr.bf16.mxu0 0
      %1554 = vmatpush1.bf16.msra.mxu0 %v1532
      %1555 = vmatprep.subr.bf16.mxu0 0
      %1556 = vmatpush1.bf16.msra.mxu0 %v1533
      %1557 = vmatprep.subr.bf16.mxu0 0
      %1558 = vmatpush1.bf16.msra.mxu0 %v1534
      %1559 = vmatprep.subr.bf16.mxu0 0
      %1560 = vmatpush1.bf16.msra.mxu0 0
      %1561 = vmatprep.subr.bf16.mxu0 0
      %1562 = vmatpush1.bf16.msra.mxu0 0
      %1563 = vmatprep.subr.bf16.mxu0 0
      %1564 = vmatpush1.bf16.msra.mxu0 0
      %1565 = vmatprep.subr.bf16.mxu0 0
      %1566 = vmatpush1.bf16.msra.mxu0 0
      %1567 = vmatprep.subr.bf16.mxu0 0
      %1568 = vmatpush1.bf16.msra.mxu0 0
      %1569 = vmatprep.subr.bf16.mxu0 0
      %1570 = vmatpush1.bf16.msra.mxu0 0
      %1571 = vmatprep.subr.bf16.mxu0 0
      %1572 = vmatpush1.bf16.msra.mxu0 0
      %1573 = vmatprep.subr.bf16.mxu0 0
      %1574 = vmatpush1.bf16.msra.mxu0 0
      %1575 = vmatprep.mubr.bf16.mxu0 0
      %1576 = vmatmul.mubr.bf16.gmra.mrb[0].mxu0 %v1463
      %v1577 = vpop.f32.mrb[0].mxu0
      %v1578 = vadd.f32 0.0, %v1577
      %v1579 = vpop.f32.mrb[0].mxu0
      %v1580 = vpop.f32.mrb[0].mxu0
      %v1581 = vadd.f32 0.0, %v1580
      %v1582 = vpop.f32.mrb[0].mxu0
      %1583 = vmatprep.mubr.bf16.mxu0 0
      %1584 = vmatmul.mubr.bf16.gmra.mrb[0].mxu0 %v1472
      %v1585 = vpop.f32.mrb[0].mxu0
      %v1586 = vadd.f32 0.0, %v1585
      %v1587 = vpop.f32.mrb[0].mxu0
      %v1588 = vpop.f32.mrb[0].mxu0
      %v1589 = vadd.f32 0.0, %v1588
      %v1590 = vpop.f32.mrb[0].mxu0
      %1591 = vmatprep.mubr.bf16.mxu0 0
      %1592 = vmatmul.mubr.bf16.gmra.mrb[0].mxu0 %v1481
      %v1593 = vpop.f32.mrb[0].mxu0
      %v1594 = vadd.f32 0.0, %v1593
      %v1595 = vpop.f32.mrb[0].mxu0
      %v1596 = vpop.f32.mrb[0].mxu0
      %v1597 = vadd.f32 0.0, %v1596
      %v1598 = vpop.f32.mrb[0].mxu0
      %1599 = vmatprep.mubr.bf16.mxu0 0
      %1600 = vmatmul.mubr.bf16.gmra.mrb[0].mxu0 %v1490
      %v1601 = vpop.f32.mrb[0].mxu0
      %v1602 = vadd.f32 0.0, %v1601
      %v1603 = vpop.f32.mrb[0].mxu0
      %v1604 = vpop.f32.mrb[0].mxu0
      %v1605 = vadd.f32 0.0, %v1604
      %v1606 = vpop.f32.mrb[0].mxu0
      %1607 = vdwg.mxu0
      %v1608 = vadd.f32 %v1388, %v1578
      %v1609 = vadd.f32 %v1389, %v1581
      %v1610 = vadd.f32 %v1390, %v1586
      %v1611 = vadd.f32 %v1391, %v1589
      %v1612 = vadd.f32 %v1392, %v1594
      %v1613 = vadd.f32 %v1393, %v1597
      %v1614 = vadd.f32 %v1394, %v1602
      %v1615 = vadd.f32 %v1395, %v1605
      %s1616 = scalar_lea.vmem %s3, 256
      %v1617 = vld [vmem:[%s1616] sm:$0xf]
      %v1618 = vld [vmem:[%s1616 + $0x4] sm:$0xf]
      %v1619 = vld [vmem:[%s1616 + $0x8] sm:$0xf]
      %v1620 = vld [vmem:[%s1616 + $0xc] sm:$0xf]
      %v1621 = vld [vmem:[%s1616 + $0x10] sm:$0xf]
      %v1622 = vld [vmem:[%s1616 + $0x14] sm:$0xf]
      %v1623 = vld [vmem:[%s1616 + $0x18] sm:$0xf]
      %v1624 = vld [vmem:[%s1616 + $0x1c] sm:$0xf]
      %v1625 = vld [vmem:[%s1616 + $0x20] sm:$0xf]
      %v1626 = vld [vmem:[%s1616 + $0x24] sm:$0xf]
      %v1627 = vld [vmem:[%s1616 + $0x28] sm:$0xf]
      %v1628 = vld [vmem:[%s1616 + $0x2c] sm:$0xf]
      %v1629 = vld [vmem:[%s1616 + $0x30] sm:$0xf]
      %v1630 = vld [vmem:[%s1616 + $0x34] sm:$0xf]
      %v1631 = vld [vmem:[%s1616 + $0x38] sm:$0xf]
      %v1632 = vld [vmem:[%s1616 + $0x3c] sm:$0xf]
      %v1641 = vunpack.c.l.b16 %v1055
      %v1642 = vunpack.c.l.b16 %v1056
      %v1643 = vunpack.c.l.b16 %v1057
      %v1644 = vunpack.c.l.b16 %v1058
      %v1645 = vunpack.c.l.b16 %v1059
      %v1646 = vunpack.c.l.b16 %v1060
      %v1647 = vunpack.c.l.b16 %v1061
      %v1648 = vunpack.c.l.b16 %v1397
      %v1649 = vpack.c.b16 %v1642, %v1641
      %v1650 = vpack.c.b16 %v1644, %v1643
      %v1651 = vpack.c.b16 %v1646, %v1645
      %v1652 = vpack.c.b16 %v1648, %v1647
      %v1673 = vunpack.c.l.b16 %v1617
      %v1674 = vunpack.c.l.b16 %v1618
      %v1675 = vunpack.c.l.b16 %v1619
      %v1676 = vunpack.c.l.b16 %v1620
      %v1677 = vunpack.c.l.b16 %v1621
      %v1678 = vunpack.c.l.b16 %v1622
      %v1679 = vunpack.c.l.b16 %v1623
      %v1680 = vunpack.c.l.b16 %v1624
      %v1681 = vunpack.c.l.b16 %v1625
      %v1682 = vunpack.c.l.b16 %v1626
      %v1683 = vunpack.c.l.b16 %v1627
      %v1684 = vunpack.c.l.b16 %v1628
      %v1685 = vunpack.c.l.b16 %v1629
      %v1686 = vunpack.c.l.b16 %v1630
      %v1687 = vunpack.c.l.b16 %v1631
      %v1688 = vunpack.c.l.b16 %v1632
      %v1689 = vpack.c.b16 %v1674, %v1673
      %v1690 = vpack.c.b16 %v1676, %v1675
      %v1691 = vpack.c.b16 %v1678, %v1677
      %v1692 = vpack.c.b16 %v1680, %v1679
      %v1693 = vpack.c.b16 %v1682, %v1681
      %v1694 = vpack.c.b16 %v1684, %v1683
      %v1695 = vpack.c.b16 %v1686, %v1685
      %v1696 = vpack.c.b16 %v1688, %v1687
      %1705 = vmatprep.subr.bf16.mxu0 0
      %1706 = vmatpush1.bf16.msra.mxu0 %v1689
      %1707 = vmatprep.subr.bf16.mxu0 0
      %1708 = vmatpush1.bf16.msra.mxu0 %v1690
      %1709 = vmatprep.subr.bf16.mxu0 0
      %1710 = vmatpush1.bf16.msra.mxu0 %v1691
      %1711 = vmatprep.subr.bf16.mxu0 0
      %1712 = vmatpush1.bf16.msra.mxu0 %v1692
      %1713 = vmatprep.subr.bf16.mxu0 0
      %1714 = vmatpush1.bf16.msra.mxu0 %v1693
      %1715 = vmatprep.subr.bf16.mxu0 0
      %1716 = vmatpush1.bf16.msra.mxu0 %v1694
      %1717 = vmatprep.subr.bf16.mxu0 0
      %1718 = vmatpush1.bf16.msra.mxu0 %v1695
      %1719 = vmatprep.subr.bf16.mxu0 0
      %1720 = vmatpush1.bf16.msra.mxu0 %v1696
      %1721 = vmatprep.subr.bf16.mxu0 0
      %1722 = vmatpush1.bf16.msra.mxu0 0
      %1723 = vmatprep.subr.bf16.mxu0 0
      %1724 = vmatpush1.bf16.msra.mxu0 0
      %1725 = vmatprep.subr.bf16.mxu0 0
      %1726 = vmatpush1.bf16.msra.mxu0 0
      %1727 = vmatprep.subr.bf16.mxu0 0
      %1728 = vmatpush1.bf16.msra.mxu0 0
      %1729 = vmatprep.subr.bf16.mxu0 0
      %1730 = vmatpush1.bf16.msra.mxu0 0
      %1731 = vmatprep.subr.bf16.mxu0 0
      %1732 = vmatpush1.bf16.msra.mxu0 0
      %1733 = vmatprep.subr.bf16.mxu0 0
      %1734 = vmatpush1.bf16.msra.mxu0 0
      %1735 = vmatprep.subr.bf16.mxu0 0
      %1736 = vmatpush1.bf16.msra.mxu0 0
      %1737 = vmatprep.mubr.bf16.mxu0 0
      %1738 = vmatmul.mubr.bf16.gmra.mrb[0].mxu0 %v1649
      %v1739 = vpop.f32.mrb[0].mxu0
      %v1740 = vadd.f32 0.0, %v1739
      %v1741 = vpop.f32.mrb[0].mxu0
      %v1742 = vpop.f32.mrb[0].mxu0
      %v1743 = vadd.f32 0.0, %v1742
      %v1744 = vpop.f32.mrb[0].mxu0
      %1745 = vmatprep.mubr.bf16.mxu0 0
      %1746 = vmatmul.mubr.bf16.gmra.mrb[0].mxu0 %v1650
      %v1747 = vpop.f32.mrb[0].mxu0
      %v1748 = vadd.f32 0.0, %v1747
      %v1749 = vpop.f32.mrb[0].mxu0
      %v1750 = vpop.f32.mrb[0].mxu0
      %v1751 = vadd.f32 0.0, %v1750
      %v1752 = vpop.f32.mrb[0].mxu0
      %1753 = vmatprep.mubr.bf16.mxu0 0
      %1754 = vmatmul.mubr.bf16.gmra.mrb[0].mxu0 %v1651
      %v1755 = vpop.f32.mrb[0].mxu0
      %v1756 = vadd.f32 0.0, %v1755
      %v1757 = vpop.f32.mrb[0].mxu0
      %v1758 = vpop.f32.mrb[0].mxu0
      %v1759 = vadd.f32 0.0, %v1758
      %v1760 = vpop.f32.mrb[0].mxu0
      %1761 = vmatprep.mubr.bf16.mxu0 0
      %1762 = vmatmul.mubr.bf16.gmra.mrb[0].mxu0 %v1652
      %v1763 = vpop.f32.mrb[0].mxu0
      %v1764 = vadd.f32 0.0, %v1763
      %v1765 = vpop.f32.mrb[0].mxu0
      %v1766 = vpop.f32.mrb[0].mxu0
      %v1767 = vadd.f32 0.0, %v1766
      %v1768 = vpop.f32.mrb[0].mxu0
      %1769 = vdwg.mxu0
      %v1770 = vadd.f32 %v1608, %v1740
      %v1771 = vadd.f32 %v1609, %v1743
      %v1772 = vadd.f32 %v1610, %v1748
      %v1773 = vadd.f32 %v1611, %v1751
      %v1774 = vadd.f32 %v1612, %v1756
      %v1775 = vadd.f32 %v1613, %v1759
      %v1776 = vadd.f32 %v1614, %v1764
      %v1777 = vadd.f32 %v1615, %v1767
      %v1778 = vld [vmem:[#allocation2 + $0x8] sm:$0xf]
      %v1779 = vld [vmem:[#allocation2 + $0xc] sm:$0xf]
      %v1780 = vld [vmem:[#allocation2 + $0x10] sm:$0xf]
      %v1781 = vld [vmem:[#allocation2 + $0x14] sm:$0xf]
      %v1782 = vld [vmem:[#allocation2 + $0x18] sm:$0xf]
      %v1783 = vld [vmem:[#allocation2 + $0x1c] sm:$0xf]
      %v1784 = vld [vmem:[#allocation2 + $0x20] sm:$0xf]
      %v1785 = vld [vmem:[#allocation2 + $0x24] sm:$0xf]
      %v1786 = vld [vmem:[#allocation2 + $0x28] sm:$0x1]
      %v1787 = vsel %vm1176, %v1778, 0
      %v1788 = vsel %vm1177, %v1779, 0
      %v1789 = vsel %vm1178, %v1780, 0
      %v1790 = vsel %vm1179, %v1781, 0
      %v1791 = vsel %vm1180, %v1782, 0
      %v1792 = vsel %vm1181, %v1783, 0
      %v1793 = vsel %vm1182, %v1784, 0
      %v1794 = vsel %vm1183, %v1785, 0
      %v1795 = vsel %vm1184, %v1786, 0
      %s1796 = scalar_lea.vmem %s3, 320
      %v1797 = vld [vmem:[%s1796] sm:$0xf]
      %v1798 = vld [vmem:[%s1796 + $0x4] sm:$0xf]
      %v1799 = vld [vmem:[%s1796 + $0x8] sm:$0xf]
      %v1800 = vld [vmem:[%s1796 + $0xc] sm:$0xf]
      %v1801 = vld [vmem:[%s1796 + $0x10] sm:$0xf]
      %v1802 = vld [vmem:[%s1796 + $0x14] sm:$0xf]
      %v1803 = vld [vmem:[%s1796 + $0x18] sm:$0xf]
      %v1804 = vld [vmem:[%s1796 + $0x1c] sm:$0xf]
      %v1805 = vld [vmem:[%s1796 + $0x20] sm:$0xf]
      %v1806 = vld [vmem:[%s1796 + $0x24] sm:$0xf]
      %v1807 = vld [vmem:[%s1796 + $0x28] sm:$0xf]
      %v1808 = vld [vmem:[%s1796 + $0x2c] sm:$0xf]
      %v1809 = vld [vmem:[%s1796 + $0x30] sm:$0xf]
      %v1810 = vld [vmem:[%s1796 + $0x34] sm:$0xf]
      %v1811 = vld [vmem:[%s1796 + $0x38] sm:$0xf]
      %v1812 = vld [vmem:[%s1796 + $0x3c] sm:$0xf]
      %v1822 = vunpack.c.l.b16 %v1787
      %v1823 = vunpack.c.l.b16 %v1788
      %v1824 = vunpack.c.l.b16 %v1789
      %v1825 = vunpack.c.l.b16 %v1790
      %v1826 = vunpack.c.l.b16 %v1791
      %v1827 = vunpack.c.l.b16 %v1792
      %v1828 = vunpack.c.l.b16 %v1793
      %v1829 = vunpack.c.l.b16 %v1794
      %v1830 = vunpack.c.l.b16 %v1795
      %v1831 = vpack.c.b16 %v1823, %v1822
      %v1832 = vpack.c.b16 %v1825, %v1824
      %v1833 = vpack.c.b16 %v1827, %v1826
      %v1834 = vpack.c.b16 %v1829, %v1828
      %v1835 = vpack.c.b16 %v1830, %v1830
      %v1837 = vshrl.u32 %v1831, 16
      %v1839 = vshll.u32 %v1831, 16
      %v1841 = vrot.slane %v1839, 1
      %v1842 = vor.u32 %v1837, %v1841
      %v1844 = vshll.u32 %v1832, 16
      %v1846 = vrot.slane %v1844, 1
      %v1847 = vsel %vm1234, %v1842, %v1846
      %v1848 = vshrl.u32 %v1832, 16
      %v1850 = vor.u32 %v1848, %v1846
      %v1852 = vshll.u32 %v1833, 16
      %v1854 = vrot.slane %v1852, 1
      %v1855 = vsel %vm1234, %v1850, %v1854
      %v1856 = vshrl.u32 %v1833, 16
      %v1858 = vor.u32 %v1856, %v1854
      %v1860 = vshll.u32 %v1834, 16
      %v1862 = vrot.slane %v1860, 1
      %v1863 = vsel %vm1234, %v1858, %v1862
      %v1864 = vshrl.u32 %v1834, 16
      %v1866 = vor.u32 %v1864, %v1862
      %v1868 = vshll.u32 %v1835, 16
      %v1870 = vrot.slane %v1868, 1
      %v1871 = vsel %vm1234, %v1866, %v1870
      %v1892 = vunpack.c.l.b16 %v1797
      %v1893 = vunpack.c.l.b16 %v1798
      %v1894 = vunpack.c.l.b16 %v1799
      %v1895 = vunpack.c.l.b16 %v1800
      %v1896 = vunpack.c.l.b16 %v1801
      %v1897 = vunpack.c.l.b16 %v1802
      %v1898 = vunpack.c.l.b16 %v1803
      %v1899 = vunpack.c.l.b16 %v1804
      %v1900 = vunpack.c.l.b16 %v1805
      %v1901 = vunpack.c.l.b16 %v1806
      %v1902 = vunpack.c.l.b16 %v1807
      %v1903 = vunpack.c.l.b16 %v1808
      %v1904 = vunpack.c.l.b16 %v1809
      %v1905 = vunpack.c.l.b16 %v1810
      %v1906 = vunpack.c.l.b16 %v1811
      %v1907 = vunpack.c.l.b16 %v1812
      %v1908 = vpack.c.b16 %v1893, %v1892
      %v1909 = vpack.c.b16 %v1895, %v1894
      %v1910 = vpack.c.b16 %v1897, %v1896
      %v1911 = vpack.c.b16 %v1899, %v1898
      %v1912 = vpack.c.b16 %v1901, %v1900
      %v1913 = vpack.c.b16 %v1903, %v1902
      %v1914 = vpack.c.b16 %v1905, %v1904
      %v1915 = vpack.c.b16 %v1907, %v1906
      %1924 = vmatprep.subr.bf16.mxu0 0
      %1925 = vmatpush1.bf16.msra.mxu0 %v1908
      %1926 = vmatprep.subr.bf16.mxu0 0
      %1927 = vmatpush1.bf16.msra.mxu0 %v1909
      %1928 = vmatprep.subr.bf16.mxu0 0
      %1929 = vmatpush1.bf16.msra.mxu0 %v1910
      %1930 = vmatprep.subr.bf16.mxu0 0
      %1931 = vmatpush1.bf16.msra.mxu0 %v1911
      %1932 = vmatprep.subr.bf16.mxu0 0
      %1933 = vmatpush1.bf16.msra.mxu0 %v1912
      %1934 = vmatprep.subr.bf16.mxu0 0
      %1935 = vmatpush1.bf16.msra.mxu0 %v1913
      %1936 = vmatprep.subr.bf16.mxu0 0
      %1937 = vmatpush1.bf16.msra.mxu0 %v1914
      %1938 = vmatprep.subr.bf16.mxu0 0
      %1939 = vmatpush1.bf16.msra.mxu0 %v1915
      %1940 = vmatprep.subr.bf16.mxu0 0
      %1941 = vmatpush1.bf16.msra.mxu0 0
      %1942 = vmatprep.subr.bf16.mxu0 0
      %1943 = vmatpush1.bf16.msra.mxu0 0
      %1944 = vmatprep.subr.bf16.mxu0 0
      %1945 = vmatpush1.bf16.msra.mxu0 0
      %1946 = vmatprep.subr.bf16.mxu0 0
      %1947 = vmatpush1.bf16.msra.mxu0 0
      %1948 = vmatprep.subr.bf16.mxu0 0
      %1949 = vmatpush1.bf16.msra.mxu0 0
      %1950 = vmatprep.subr.bf16.mxu0 0
      %1951 = vmatpush1.bf16.msra.mxu0 0
      %1952 = vmatprep.subr.bf16.mxu0 0
      %1953 = vmatpush1.bf16.msra.mxu0 0
      %1954 = vmatprep.subr.bf16.mxu0 0
      %1955 = vmatpush1.bf16.msra.mxu0 0
      %1956 = vmatprep.mubr.bf16.mxu0 0
      %1957 = vmatmul.mubr.bf16.gmra.mrb[0].mxu0 %v1847
      %v1958 = vpop.f32.mrb[0].mxu0
      %v1959 = vadd.f32 0.0, %v1958
      %v1960 = vpop.f32.mrb[0].mxu0
      %v1961 = vpop.f32.mrb[0].mxu0
      %v1962 = vadd.f32 0.0, %v1961
      %v1963 = vpop.f32.mrb[0].mxu0
      %1964 = vmatprep.mubr.bf16.mxu0 0
      %1965 = vmatmul.mubr.bf16.gmra.mrb[0].mxu0 %v1855
      %v1966 = vpop.f32.mrb[0].mxu0
      %v1967 = vadd.f32 0.0, %v1966
      %v1968 = vpop.f32.mrb[0].mxu0
      %v1969 = vpop.f32.mrb[0].mxu0
      %v1970 = vadd.f32 0.0, %v1969
      %v1971 = vpop.f32.mrb[0].mxu0
      %1972 = vmatprep.mubr.bf16.mxu0 0
      %1973 = vmatmul.mubr.bf16.gmra.mrb[0].mxu0 %v1863
      %v1974 = vpop.f32.mrb[0].mxu0
      %v1975 = vadd.f32 0.0, %v1974
      %v1976 = vpop.f32.mrb[0].mxu0
      %v1977 = vpop.f32.mrb[0].mxu0
      %v1978 = vadd.f32 0.0, %v1977
      %v1979 = vpop.f32.mrb[0].mxu0
      %1980 = vmatprep.mubr.bf16.mxu0 0
      %1981 = vmatmul.mubr.bf16.gmra.mrb[0].mxu0 %v1871
      %v1982 = vpop.f32.mrb[0].mxu0
      %v1983 = vadd.f32 0.0, %v1982
      %v1984 = vpop.f32.mrb[0].mxu0
      %v1985 = vpop.f32.mrb[0].mxu0
      %v1986 = vadd.f32 0.0, %v1985
      %v1987 = vpop.f32.mrb[0].mxu0
      %1988 = vdwg.mxu0
      %v1989 = vadd.f32 %v1770, %v1959
      %v1990 = vadd.f32 %v1771, %v1962
      %v1991 = vadd.f32 %v1772, %v1967
      %v1992 = vadd.f32 %v1773, %v1970
      %v1993 = vadd.f32 %v1774, %v1975
      %v1994 = vadd.f32 %v1775, %v1978
      %v1995 = vadd.f32 %v1776, %v1983
      %v1996 = vadd.f32 %v1777, %v1986
      %v1997 = vld [vmem:[#allocation2 + $0x8] sm:$0x8]
      %v1998 = vld [vmem:[#allocation2 + $0x28] sm:$0xf]
      %v1999 = vsel %vm681, %v1997, 0
      %v2000 = vsel %vm682, %v1779, 0
      %v2001 = vsel %vm683, %v1780, 0
      %v2002 = vsel %vm684, %v1781, 0
      %v2003 = vsel %vm685, %v1782, 0
      %v2004 = vsel %vm686, %v1783, 0
      %v2005 = vsel %vm687, %v1784, 0
      %v2006 = vsel %vm688, %v1785, 0
      %v2007 = vsel %vm689, %v1998, 0
      %s2008 = scalar_lea.vmem %s3, 384
      %v2009 = vld [vmem:[%s2008] sm:$0xf]
      %v2010 = vld [vmem:[%s2008 + $0x4] sm:$0xf]
      %v2011 = vld [vmem:[%s2008 + $0x8] sm:$0xf]
      %v2012 = vld [vmem:[%s2008 + $0xc] sm:$0xf]
      %v2013 = vld [vmem:[%s2008 + $0x10] sm:$0xf]
      %v2014 = vld [vmem:[%s2008 + $0x14] sm:$0xf]
      %v2015 = vld [vmem:[%s2008 + $0x18] sm:$0xf]
      %v2016 = vld [vmem:[%s2008 + $0x1c] sm:$0xf]
      %v2017 = vld [vmem:[%s2008 + $0x20] sm:$0xf]
      %v2018 = vld [vmem:[%s2008 + $0x24] sm:$0xf]
      %v2019 = vld [vmem:[%s2008 + $0x28] sm:$0xf]
      %v2020 = vld [vmem:[%s2008 + $0x2c] sm:$0xf]
      %v2021 = vld [vmem:[%s2008 + $0x30] sm:$0xf]
      %v2022 = vld [vmem:[%s2008 + $0x34] sm:$0xf]
      %v2023 = vld [vmem:[%s2008 + $0x38] sm:$0xf]
      %v2024 = vld [vmem:[%s2008 + $0x3c] sm:$0xf]
      %v2034 = vunpack.c.l.b16 %v1999
      %v2035 = vunpack.c.l.b16 %v2000
      %v2036 = vunpack.c.l.b16 %v2001
      %v2037 = vunpack.c.l.b16 %v2002
      %v2038 = vunpack.c.l.b16 %v2003
      %v2039 = vunpack.c.l.b16 %v2004
      %v2040 = vunpack.c.l.b16 %v2005
      %v2041 = vunpack.c.l.b16 %v2006
      %v2042 = vunpack.c.l.b16 %v2007
      %v2043 = vpack.c.b16 %v2035, %v2034
      %v2044 = vpack.c.b16 %v2037, %v2036
      %v2045 = vpack.c.b16 %v2039, %v2038
      %v2046 = vpack.c.b16 %v2041, %v2040
      %v2047 = vpack.c.b16 %v2042, %v2042
      %v2049 = vshrl.u32 %v2043, 16
      %v2051 = vrot.slane %v2049, 3
      %v2052 = vshll.u32 %v2043, 16
      %v2054 = vrot.slane %v2052, 4
      %v2055 = vor.u32 %v2051, %v2054
      %v2057 = vshrl.u32 %v2044, 16
      %v2059 = vrot.slane %v2057, 3
      %v2060 = vshll.u32 %v2044, 16
      %v2062 = vrot.slane %v2060, 4
      %v2063 = vor.u32 %v2059, %v2062
      %v2064 = vsel %vm892, %v2055, %v2063
      %v2066 = vshrl.u32 %v2045, 16
      %v2068 = vrot.slane %v2066, 3
      %v2069 = vshll.u32 %v2045, 16
      %v2071 = vrot.slane %v2069, 4
      %v2072 = vor.u32 %v2068, %v2071
      %v2073 = vsel %vm892, %v2063, %v2072
      %v2075 = vshrl.u32 %v2046, 16
      %v2077 = vrot.slane %v2075, 3
      %v2078 = vshll.u32 %v2046, 16
      %v2080 = vrot.slane %v2078, 4
      %v2081 = vor.u32 %v2077, %v2080
      %v2082 = vsel %vm892, %v2072, %v2081
      %v2084 = vshrl.u32 %v2047, 16
      %v2086 = vrot.slane %v2084, 3
      %v2087 = vshll.u32 %v2047, 16
      %v2089 = vrot.slane %v2087, 4
      %v2090 = vor.u32 %v2086, %v2089
      %v2091 = vsel %vm892, %v2081, %v2090
      %v2112 = vunpack.c.l.b16 %v2009
      %v2113 = vunpack.c.l.b16 %v2010
      %v2114 = vunpack.c.l.b16 %v2011
      %v2115 = vunpack.c.l.b16 %v2012
      %v2116 = vunpack.c.l.b16 %v2013
      %v2117 = vunpack.c.l.b16 %v2014
      %v2118 = vunpack.c.l.b16 %v2015
      %v2119 = vunpack.c.l.b16 %v2016
      %v2120 = vunpack.c.l.b16 %v2017
      %v2121 = vunpack.c.l.b16 %v2018
      %v2122 = vunpack.c.l.b16 %v2019
      %v2123 = vunpack.c.l.b16 %v2020
      %v2124 = vunpack.c.l.b16 %v2021
      %v2125 = vunpack.c.l.b16 %v2022
      %v2126 = vunpack.c.l.b16 %v2023
      %v2127 = vunpack.c.l.b16 %v2024
      %v2128 = vpack.c.b16 %v2113, %v2112
      %v2129 = vpack.c.b16 %v2115, %v2114
      %v2130 = vpack.c.b16 %v2117, %v2116
      %v2131 = vpack.c.b16 %v2119, %v2118
      %v2132 = vpack.c.b16 %v2121, %v2120
      %v2133 = vpack.c.b16 %v2123, %v2122
      %v2134 = vpack.c.b16 %v2125, %v2124
      %v2135 = vpack.c.b16 %v2127, %v2126
      %2144 = vmatprep.subr.bf16.mxu0 0
      %2145 = vmatpush1.bf16.msra.mxu0 %v2128
      %2146 = vmatprep.subr.bf16.mxu0 0
      %2147 = vmatpush1.bf16.msra.mxu0 %v2129
      %2148 = vmatprep.subr.bf16.mxu0 0
      %2149 = vmatpush1.bf16.msra.mxu0 %v2130
      %2150 = vmatprep.subr.bf16.mxu0 0
      %2151 = vmatpush1.bf16.msra.mxu0 %v2131
      %2152 = vmatprep.subr.bf16.mxu0 0
      %2153 = vmatpush1.bf16.msra.mxu0 %v2132
      %2154 = vmatprep.subr.bf16.mxu0 0
      %2155 = vmatpush1.bf16.msra.mxu0 %v2133
      %2156 = vmatprep.subr.bf16.mxu0 0
      %2157 = vmatpush1.bf16.msra.mxu0 %v2134
      %2158 = vmatprep.subr.bf16.mxu0 0
      %2159 = vmatpush1.bf16.msra.mxu0 %v2135
      %2160 = vmatprep.subr.bf16.mxu0 0
      %2161 = vmatpush1.bf16.msra.mxu0 0
      %2162 = vmatprep.subr.bf16.mxu0 0
      %2163 = vmatpush1.bf16.msra.mxu0 0
      %2164 = vmatprep.subr.bf16.mxu0 0
      %2165 = vmatpush1.bf16.msra.mxu0 0
      %2166 = vmatprep.subr.bf16.mxu0 0
      %2167 = vmatpush1.bf16.msra.mxu0 0
      %2168 = vmatprep.subr.bf16.mxu0 0
      %2169 = vmatpush1.bf16.msra.mxu0 0
      %2170 = vmatprep.subr.bf16.mxu0 0
      %2171 = vmatpush1.bf16.msra.mxu0 0
      %2172 = vmatprep.subr.bf16.mxu0 0
      %2173 = vmatpush1.bf16.msra.mxu0 0
      %2174 = vmatprep.subr.bf16.mxu0 0
      %2175 = vmatpush1.bf16.msra.mxu0 0
      %2176 = vmatprep.mubr.bf16.mxu0 0
      %2177 = vmatmul.mubr.bf16.gmra.mrb[0].mxu0 %v2064
      %v2178 = vpop.f32.mrb[0].mxu0
      %v2179 = vadd.f32 0.0, %v2178
      %v2180 = vpop.f32.mrb[0].mxu0
      %v2181 = vpop.f32.mrb[0].mxu0
      %v2182 = vadd.f32 0.0, %v2181
      %v2183 = vpop.f32.mrb[0].mxu0
      %2184 = vmatprep.mubr.bf16.mxu0 0
      %2185 = vmatmul.mubr.bf16.gmra.mrb[0].mxu0 %v2073
      %v2186 = vpop.f32.mrb[0].mxu0
      %v2187 = vadd.f32 0.0, %v2186
      %v2188 = vpop.f32.mrb[0].mxu0
      %v2189 = vpop.f32.mrb[0].mxu0
      %v2190 = vadd.f32 0.0, %v2189
      %v2191 = vpop.f32.mrb[0].mxu0
      %2192 = vmatprep.mubr.bf16.mxu0 0
      %2193 = vmatmul.mubr.bf16.gmra.mrb[0].mxu0 %v2082
      %v2194 = vpop.f32.mrb[0].mxu0
      %v2195 = vadd.f32 0.0, %v2194
      %v2196 = vpop.f32.mrb[0].mxu0
      %v2197 = vpop.f32.mrb[0].mxu0
      %v2198 = vadd.f32 0.0, %v2197
      %v2199 = vpop.f32.mrb[0].mxu0
      %2200 = vmatprep.mubr.bf16.mxu0 0
      %2201 = vmatmul.mubr.bf16.gmra.mrb[0].mxu0 %v2091
      %v2202 = vpop.f32.mrb[0].mxu0
      %v2203 = vadd.f32 0.0, %v2202
      %v2204 = vpop.f32.mrb[0].mxu0
      %v2205 = vpop.f32.mrb[0].mxu0
      %v2206 = vadd.f32 0.0, %v2205
      %v2207 = vpop.f32.mrb[0].mxu0
      %2208 = vdwg.mxu0
      %v2209 = vadd.f32 %v1989, %v2179
      %v2210 = vadd.f32 %v1990, %v2182
      %v2211 = vadd.f32 %v1991, %v2187
      %v2212 = vadd.f32 %v1992, %v2190
      %v2213 = vadd.f32 %v1993, %v2195
      %v2214 = vadd.f32 %v1994, %v2198
      %v2215 = vadd.f32 %v1995, %v2203
      %v2216 = vadd.f32 %v1996, %v2206
      %s2217 = scalar_lea.vmem %s3, 448
      %v2218 = vld [vmem:[%s2217] sm:$0xf]
      %v2219 = vld [vmem:[%s2217 + $0x4] sm:$0xf]
      %v2220 = vld [vmem:[%s2217 + $0x8] sm:$0xf]
      %v2221 = vld [vmem:[%s2217 + $0xc] sm:$0xf]
      %v2222 = vld [vmem:[%s2217 + $0x10] sm:$0xf]
      %v2223 = vld [vmem:[%s2217 + $0x14] sm:$0xf]
      %v2224 = vld [vmem:[%s2217 + $0x18] sm:$0xf]
      %v2225 = vld [vmem:[%s2217 + $0x1c] sm:$0xf]
      %v2226 = vld [vmem:[%s2217 + $0x20] sm:$0xf]
      %v2227 = vld [vmem:[%s2217 + $0x24] sm:$0xf]
      %v2228 = vld [vmem:[%s2217 + $0x28] sm:$0xf]
      %v2229 = vld [vmem:[%s2217 + $0x2c] sm:$0xf]
      %v2230 = vld [vmem:[%s2217 + $0x30] sm:$0xf]
      %v2231 = vld [vmem:[%s2217 + $0x34] sm:$0xf]
      %v2232 = vld [vmem:[%s2217 + $0x38] sm:$0xf]
      %v2233 = vld [vmem:[%s2217 + $0x3c] sm:$0xf]
      %v2242 = vunpack.c.l.b16 %v1779
      %v2243 = vunpack.c.l.b16 %v1780
      %v2244 = vunpack.c.l.b16 %v1781
      %v2245 = vunpack.c.l.b16 %v1782
      %v2246 = vunpack.c.l.b16 %v1783
      %v2247 = vunpack.c.l.b16 %v1784
      %v2248 = vunpack.c.l.b16 %v1785
      %v2249 = vunpack.c.l.b16 %v1998
      %v2250 = vpack.c.b16 %v2243, %v2242
      %v2251 = vpack.c.b16 %v2245, %v2244
      %v2252 = vpack.c.b16 %v2247, %v2246
      %v2253 = vpack.c.b16 %v2249, %v2248
      %v2274 = vunpack.c.l.b16 %v2218
      %v2275 = vunpack.c.l.b16 %v2219
      %v2276 = vunpack.c.l.b16 %v2220
      %v2277 = vunpack.c.l.b16 %v2221
      %v2278 = vunpack.c.l.b16 %v2222
      %v2279 = vunpack.c.l.b16 %v2223
      %v2280 = vunpack.c.l.b16 %v2224
      %v2281 = vunpack.c.l.b16 %v2225
      %v2282 = vunpack.c.l.b16 %v2226
      %v2283 = vunpack.c.l.b16 %v2227
      %v2284 = vunpack.c.l.b16 %v2228
      %v2285 = vunpack.c.l.b16 %v2229
      %v2286 = vunpack.c.l.b16 %v2230
      %v2287 = vunpack.c.l.b16 %v2231
      %v2288 = vunpack.c.l.b16 %v2232
      %v2289 = vunpack.c.l.b16 %v2233
      %v2290 = vpack.c.b16 %v2275, %v2274
      %v2291 = vpack.c.b16 %v2277, %v2276
      %v2292 = vpack.c.b16 %v2279, %v2278
      %v2293 = vpack.c.b16 %v2281, %v2280
      %v2294 = vpack.c.b16 %v2283, %v2282
      %v2295 = vpack.c.b16 %v2285, %v2284
      %v2296 = vpack.c.b16 %v2287, %v2286
      %v2297 = vpack.c.b16 %v2289, %v2288
      %2306 = vmatprep.subr.bf16.mxu0 0
      %2307 = vmatpush1.bf16.msra.mxu0 %v2290
      %2308 = vmatprep.subr.bf16.mxu0 0
      %2309 = vmatpush1.bf16.msra.mxu0 %v2291
      %2310 = vmatprep.subr.bf16.mxu0 0
      %2311 = vmatpush1.bf16.msra.mxu0 %v2292
      %2312 = vmatprep.subr.bf16.mxu0 0
      %2313 = vmatpush1.bf16.msra.mxu0 %v2293
      %2314 = vmatprep.subr.bf16.mxu0 0
      %2315 = vmatpush1.bf16.msra.mxu0 %v2294
      %2316 = vmatprep.subr.bf16.mxu0 0
      %2317 = vmatpush1.bf16.msra.mxu0 %v2295
      %2318 = vmatprep.subr.bf16.mxu0 0
      %2319 = vmatpush1.bf16.msra.mxu0 %v2296
      %2320 = vmatprep.subr.bf16.mxu0 0
      %2321 = vmatpush1.bf16.msra.mxu0 %v2297
      %2322 = vmatprep.subr.bf16.mxu0 0
      %2323 = vmatpush1.bf16.msra.mxu0 0
      %2324 = vmatprep.subr.bf16.mxu0 0
      %2325 = vmatpush1.bf16.msra.mxu0 0
      %2326 = vmatprep.subr.bf16.mxu0 0
      %2327 = vmatpush1.bf16.msra.mxu0 0
      %2328 = vmatprep.subr.bf16.mxu0 0
      %2329 = vmatpush1.bf16.msra.mxu0 0
      %2330 = vmatprep.subr.bf16.mxu0 0
      %2331 = vmatpush1.bf16.msra.mxu0 0
      %2332 = vmatprep.subr.bf16.mxu0 0
      %2333 = vmatpush1.bf16.msra.mxu0 0
      %2334 = vmatprep.subr.bf16.mxu0 0
      %2335 = vmatpush1.bf16.msra.mxu0 0
      %2336 = vmatprep.subr.bf16.mxu0 0
      %2337 = vmatpush1.bf16.msra.mxu0 0
      %2338 = vmatprep.mubr.bf16.mxu0 0
      %2339 = vmatmul.mubr.bf16.gmra.mrb[0].mxu0 %v2250
      %v2340 = vpop.f32.mrb[0].mxu0
      %v2341 = vadd.f32 0.0, %v2340
      %v2342 = vpop.f32.mrb[0].mxu0
      %v2343 = vpop.f32.mrb[0].mxu0
      %v2344 = vadd.f32 0.0, %v2343
      %v2345 = vpop.f32.mrb[0].mxu0
      %2346 = vmatprep.mubr.bf16.mxu0 0
      %2347 = vmatmul.mubr.bf16.gmra.mrb[0].mxu0 %v2251
      %v2348 = vpop.f32.mrb[0].mxu0
      %v2349 = vadd.f32 0.0, %v2348
      %v2350 = vpop.f32.mrb[0].mxu0
      %v2351 = vpop.f32.mrb[0].mxu0
      %v2352 = vadd.f32 0.0, %v2351
      %v2353 = vpop.f32.mrb[0].mxu0
      %2354 = vmatprep.mubr.bf16.mxu0 0
      %2355 = vmatmul.mubr.bf16.gmra.mrb[0].mxu0 %v2252
      %v2356 = vpop.f32.mrb[0].mxu0
      %v2357 = vadd.f32 0.0, %v2356
      %v2358 = vpop.f32.mrb[0].mxu0
      %v2359 = vpop.f32.mrb[0].mxu0
      %v2360 = vadd.f32 0.0, %v2359
      %v2361 = vpop.f32.mrb[0].mxu0
      %2362 = vmatprep.mubr.bf16.mxu0 0
      %2363 = vmatmul.mubr.bf16.gmra.mrb[0].mxu0 %v2253
      %v2364 = vpop.f32.mrb[0].mxu0
      %v2365 = vadd.f32 0.0, %v2364
      %v2366 = vpop.f32.mrb[0].mxu0
      %v2367 = vpop.f32.mrb[0].mxu0
      %v2368 = vadd.f32 0.0, %v2367
      %v2369 = vpop.f32.mrb[0].mxu0
      %2370 = vdwg.mxu0
      %v2371 = vadd.f32 %v2209, %v2341
      %v2372 = vadd.f32 %v2210, %v2344
      %v2373 = vadd.f32 %v2211, %v2349
      %v2374 = vadd.f32 %v2212, %v2352
      %v2375 = vadd.f32 %v2213, %v2357
      %v2376 = vadd.f32 %v2214, %v2360
      %v2377 = vadd.f32 %v2215, %v2365
      %v2378 = vadd.f32 %v2216, %v2368
      %v2379 = vld [vmem:[#allocation2 + $0xc] sm:$0xf]
      %v2380 = vld [vmem:[#allocation2 + $0x10] sm:$0xf]
      %v2381 = vld [vmem:[#allocation2 + $0x14] sm:$0xf]
      %v2382 = vld [vmem:[#allocation2 + $0x18] sm:$0xf]
      %v2383 = vld [vmem:[#allocation2 + $0x1c] sm:$0xf]
      %v2384 = vld [vmem:[#allocation2 + $0x20] sm:$0xf]
      %v2385 = vld [vmem:[#allocation2 + $0x24] sm:$0xf]
      %v2386 = vld [vmem:[#allocation2 + $0x28] sm:$0xf]
      %v2387 = vld [vmem:[#allocation2 + $0x2c] sm:$0x1]
      %v2388 = vsel %vm1176, %v2379, 0
      %v2389 = vsel %vm1177, %v2380, 0
      %v2390 = vsel %vm1178, %v2381, 0
      %v2391 = vsel %vm1179, %v2382, 0
      %v2392 = vsel %vm1180, %v2383, 0
      %v2393 = vsel %vm1181, %v2384, 0
      %v2394 = vsel %vm1182, %v2385, 0
      %v2395 = vsel %vm1183, %v2386, 0
      %v2396 = vsel %vm1184, %v2387, 0
      %s2397 = scalar_lea.vmem %s3, 512
      %v2398 = vld [vmem:[%s2397] sm:$0xf]
      %v2399 = vld [vmem:[%s2397 + $0x4] sm:$0xf]
      %v2400 = vld [vmem:[%s2397 + $0x8] sm:$0xf]
      %v2401 = vld [vmem:[%s2397 + $0xc] sm:$0xf]
      %v2402 = vld [vmem:[%s2397 + $0x10] sm:$0xf]
      %v2403 = vld [vmem:[%s2397 + $0x14] sm:$0xf]
      %v2404 = vld [vmem:[%s2397 + $0x18] sm:$0xf]
      %v2405 = vld [vmem:[%s2397 + $0x1c] sm:$0xf]
      %v2406 = vld [vmem:[%s2397 + $0x20] sm:$0xf]
      %v2407 = vld [vmem:[%s2397 + $0x24] sm:$0xf]
      %v2408 = vld [vmem:[%s2397 + $0x28] sm:$0xf]
      %v2409 = vld [vmem:[%s2397 + $0x2c] sm:$0xf]
      %v2410 = vld [vmem:[%s2397 + $0x30] sm:$0xf]
      %v2411 = vld [vmem:[%s2397 + $0x34] sm:$0xf]
      %v2412 = vld [vmem:[%s2397 + $0x38] sm:$0xf]
      %v2413 = vld [vmem:[%s2397 + $0x3c] sm:$0xf]
      %v2423 = vunpack.c.l.b16 %v2388
      %v2424 = vunpack.c.l.b16 %v2389
      %v2425 = vunpack.c.l.b16 %v2390
      %v2426 = vunpack.c.l.b16 %v2391
      %v2427 = vunpack.c.l.b16 %v2392
      %v2428 = vunpack.c.l.b16 %v2393
      %v2429 = vunpack.c.l.b16 %v2394
      %v2430 = vunpack.c.l.b16 %v2395
      %v2431 = vunpack.c.l.b16 %v2396
      %v2432 = vpack.c.b16 %v2424, %v2423
      %v2433 = vpack.c.b16 %v2426, %v2425
      %v2434 = vpack.c.b16 %v2428, %v2427
      %v2435 = vpack.c.b16 %v2430, %v2429
      %v2436 = vpack.c.b16 %v2431, %v2431
      %v2438 = vshrl.u32 %v2432, 16
      %v2440 = vshll.u32 %v2432, 16
      %v2442 = vrot.slane %v2440, 1
      %v2443 = vor.u32 %v2438, %v2442
      %v2445 = vshll.u32 %v2433, 16
      %v2447 = vrot.slane %v2445, 1
      %v2448 = vsel %vm1234, %v2443, %v2447
      %v2449 = vshrl.u32 %v2433, 16
      %v2451 = vor.u32 %v2449, %v2447
      %v2453 = vshll.u32 %v2434, 16
      %v2455 = vrot.slane %v2453, 1
      %v2456 = vsel %vm1234, %v2451, %v2455
      %v2457 = vshrl.u32 %v2434, 16
      %v2459 = vor.u32 %v2457, %v2455
      %v2461 = vshll.u32 %v2435, 16
      %v2463 = vrot.slane %v2461, 1
      %v2464 = vsel %vm1234, %v2459, %v2463
      %v2465 = vshrl.u32 %v2435, 16
      %v2467 = vor.u32 %v2465, %v2463
      %v2469 = vshll.u32 %v2436, 16
      %v2471 = vrot.slane %v2469, 1
      %v2472 = vsel %vm1234, %v2467, %v2471
      %v2493 = vunpack.c.l.b16 %v2398
      %v2494 = vunpack.c.l.b16 %v2399
      %v2495 = vunpack.c.l.b16 %v2400
      %v2496 = vunpack.c.l.b16 %v2401
      %v2497 = vunpack.c.l.b16 %v2402
      %v2498 = vunpack.c.l.b16 %v2403
      %v2499 = vunpack.c.l.b16 %v2404
      %v2500 = vunpack.c.l.b16 %v2405
      %v2501 = vunpack.c.l.b16 %v2406
      %v2502 = vunpack.c.l.b16 %v2407
      %v2503 = vunpack.c.l.b16 %v2408
      %v2504 = vunpack.c.l.b16 %v2409
      %v2505 = vunpack.c.l.b16 %v2410
      %v2506 = vunpack.c.l.b16 %v2411
      %v2507 = vunpack.c.l.b16 %v2412
      %v2508 = vunpack.c.l.b16 %v2413
      %v2509 = vpack.c.b16 %v2494, %v2493
      %v2510 = vpack.c.b16 %v2496, %v2495
      %v2511 = vpack.c.b16 %v2498, %v2497
      %v2512 = vpack.c.b16 %v2500, %v2499
      %v2513 = vpack.c.b16 %v2502, %v2501
      %v2514 = vpack.c.b16 %v2504, %v2503
      %v2515 = vpack.c.b16 %v2506, %v2505
      %v2516 = vpack.c.b16 %v2508, %v2507
      %2525 = vmatprep.subr.bf16.mxu0 0
      %2526 = vmatpush1.bf16.msra.mxu0 %v2509
      %2527 = vmatprep.subr.bf16.mxu0 0
      %2528 = vmatpush1.bf16.msra.mxu0 %v2510
      %2529 = vmatprep.subr.bf16.mxu0 0
      %2530 = vmatpush1.bf16.msra.mxu0 %v2511
      %2531 = vmatprep.subr.bf16.mxu0 0
      %2532 = vmatpush1.bf16.msra.mxu0 %v2512
      %2533 = vmatprep.subr.bf16.mxu0 0
      %2534 = vmatpush1.bf16.msra.mxu0 %v2513
      %2535 = vmatprep.subr.bf16.mxu0 0
      %2536 = vmatpush1.bf16.msra.mxu0 %v2514
      %2537 = vmatprep.subr.bf16.mxu0 0
      %2538 = vmatpush1.bf16.msra.mxu0 %v2515
      %2539 = vmatprep.subr.bf16.mxu0 0
      %2540 = vmatpush1.bf16.msra.mxu0 %v2516
      %2541 = vmatprep.subr.bf16.mxu0 0
      %2542 = vmatpush1.bf16.msra.mxu0 0
      %2543 = vmatprep.subr.bf16.mxu0 0
      %2544 = vmatpush1.bf16.msra.mxu0 0
      %2545 = vmatprep.subr.bf16.mxu0 0
      %2546 = vmatpush1.bf16.msra.mxu0 0
      %2547 = vmatprep.subr.bf16.mxu0 0
      %2548 = vmatpush1.bf16.msra.mxu0 0
      %2549 = vmatprep.subr.bf16.mxu0 0
      %2550 = vmatpush1.bf16.msra.mxu0 0
      %2551 = vmatprep.subr.bf16.mxu0 0
      %2552 = vmatpush1.bf16.msra.mxu0 0
      %2553 = vmatprep.subr.bf16.mxu0 0
      %2554 = vmatpush1.bf16.msra.mxu0 0
      %2555 = vmatprep.subr.bf16.mxu0 0
      %2556 = vmatpush1.bf16.msra.mxu0 0
      %2557 = vmatprep.mubr.bf16.mxu0 0
      %2558 = vmatmul.mubr.bf16.gmra.mrb[0].mxu0 %v2448
      %v2559 = vpop.f32.mrb[0].mxu0
      %v2560 = vadd.f32 0.0, %v2559
      %v2561 = vpop.f32.mrb[0].mxu0
      %v2562 = vpop.f32.mrb[0].mxu0
      %v2563 = vadd.f32 0.0, %v2562
      %v2564 = vpop.f32.mrb[0].mxu0
      %2565 = vmatprep.mubr.bf16.mxu0 0
      %2566 = vmatmul.mubr.bf16.gmra.mrb[0].mxu0 %v2456
      %v2567 = vpop.f32.mrb[0].mxu0
      %v2568 = vadd.f32 0.0, %v2567
      %v2569 = vpop.f32.mrb[0].mxu0
      %v2570 = vpop.f32.mrb[0].mxu0
      %v2571 = vadd.f32 0.0, %v2570
      %v2572 = vpop.f32.mrb[0].mxu0
      %2573 = vmatprep.mubr.bf16.mxu0 0
      %2574 = vmatmul.mubr.bf16.gmra.mrb[0].mxu0 %v2464
      %v2575 = vpop.f32.mrb[0].mxu0
      %v2576 = vadd.f32 0.0, %v2575
      %v2577 = vpop.f32.mrb[0].mxu0
      %v2578 = vpop.f32.mrb[0].mxu0
      %v2579 = vadd.f32 0.0, %v2578
      %v2580 = vpop.f32.mrb[0].mxu0
      %2581 = vmatprep.mubr.bf16.mxu0 0
      %2582 = vmatmul.mubr.bf16.gmra.mrb[0].mxu0 %v2472
      %v2583 = vpop.f32.mrb[0].mxu0
      %v2584 = vadd.f32 0.0, %v2583
      %v2585 = vpop.f32.mrb[0].mxu0
      %v2586 = vpop.f32.mrb[0].mxu0
      %v2587 = vadd.f32 0.0, %v2586
      %v2588 = vpop.f32.mrb[0].mxu0
      %2589 = vdwg.mxu0
      %v2590 = vadd.f32 %v2371, %v2560
      %v2591 = vadd.f32 %v2372, %v2563
      %v2592 = vadd.f32 %v2373, %v2568
      %v2593 = vadd.f32 %v2374, %v2571
      %v2594 = vadd.f32 %v2375, %v2576
      %v2595 = vadd.f32 %v2376, %v2579
      %v2596 = vadd.f32 %v2377, %v2584
      %v2597 = vadd.f32 %v2378, %v2587
      %v2598 = vld [vmem:[%s4] sm:$0x1]
      %v2600 = vlaneseq
      %v2601 = vshrl.u32 %v2600, 7
      %v2602 = vsub.s32 0, %v2601
      %v2603 = vrot.slane %v2598, %v2602
      %v2605 = vadd.f32 %v2590, %v2603
      %v2606 = vadd.f32 %v2591, %v2603
      %v2607 = vadd.f32 %v2592, %v2603
      %v2608 = vadd.f32 %v2593, %v2603
      %v2609 = vadd.f32 %v2594, %v2603
      %v2610 = vadd.f32 %v2595, %v2603
      %v2611 = vadd.f32 %v2596, %v2603
      %v2612 = vadd.f32 %v2597, %v2603
      %v2613 = vpack.c.bf16 %v2606, %v2605
      %v2614 = vpack.c.bf16 %v2608, %v2607
      %v2615 = vpack.c.bf16 %v2610, %v2609
      %v2616 = vpack.c.bf16 %v2612, %v2611
      %v2621 = vunpack.c.l.b16 %v2613
      %v2622 = vunpack.c.h.b16 %v2613
      %v2623 = vunpack.c.l.b16 %v2614
      %v2624 = vunpack.c.h.b16 %v2614
      %v2625 = vunpack.c.l.b16 %v2615
      %v2626 = vunpack.c.h.b16 %v2615
      %v2627 = vunpack.c.l.b16 %v2616
      %v2628 = vunpack.c.h.b16 %v2616
      %v2629 = vpack.c.b16 %v2621, %v2621
      %v2630 = vpack.c.b16 %v2622, %v2622
      %v2631 = vpack.c.b16 %v2623, %v2623
      %v2632 = vpack.c.b16 %v2624, %v2624
      %v2633 = vpack.c.b16 %v2625, %v2625
      %v2634 = vpack.c.b16 %v2626, %v2626
      %v2635 = vpack.c.b16 %v2627, %v2627
      %v2636 = vpack.c.b16 %v2628, %v2628
      %2645 = vst [vmem:[%s259] sm:$0xf] %v2629
      %2646 = vst [vmem:[%s259 + $0x4] sm:$0xf] %v2630
      %2647 = vst [vmem:[%s259 + $0x8] sm:$0xf] %v2631
      %2648 = vst [vmem:[%s259 + $0xc] sm:$0xf] %v2632
      %2649 = vst [vmem:[%s259 + $0x10] sm:$0xf] %v2633
      %2650 = vst [vmem:[%s259 + $0x14] sm:$0xf] %v2634
      %2651 = vst [vmem:[%s259 + $0x18] sm:$0xf] %v2635
      %2652 = vst [vmem:[%s259 + $0x1c] sm:$0xf] %v2636
      %v2653 = vadd.f32 %v2605, %v2606
      %v2654 = vadd.f32 %v2653, %v2607
      %v2655 = vadd.f32 %v2654, %v2608
      %v2656 = vadd.f32 %v2655, %v2609
      %v2657 = vadd.f32 %v2656, %v2610
      %v2658 = vadd.f32 %v2657, %v2611
      %v2659 = vadd.f32 %v2658, %v2612
      %v2660 = vrot.slane %v2659, 4
      %v2661 = vadd.f32 %v2659, %v2660
      %v2662 = vrot.slane %v2661, 2
      %v2663 = vadd.f32 %v2661, %v2662
      %v2664 = vrot.slane %v2663, 1
      %v2665 = vadd.f32 %v2663, %v2664
      %v2666 = vmul.f32 %v2605, %v2605
      %v2667 = vmul.f32 %v2606, %v2606
      %v2668 = vmul.f32 %v2607, %v2607
      %v2669 = vmul.f32 %v2608, %v2608
      %v2670 = vmul.f32 %v2609, %v2609
      %v2671 = vmul.f32 %v2610, %v2610
      %v2672 = vmul.f32 %v2611, %v2611
      %v2673 = vmul.f32 %v2612, %v2612
      %v2674 = vadd.f32 %v2666, %v2667
      %v2675 = vadd.f32 %v2674, %v2668
      %v2676 = vadd.f32 %v2675, %v2669
      %v2677 = vadd.f32 %v2676, %v2670
      %v2678 = vadd.f32 %v2677, %v2671
      %v2679 = vadd.f32 %v2678, %v2672
      %v2680 = vadd.f32 %v2679, %v2673
      %v2681 = vrot.slane %v2680, 4
      %v2682 = vadd.f32 %v2680, %v2681
      %v2683 = vrot.slane %v2682, 2
      %v2684 = vadd.f32 %v2682, %v2683
      %v2685 = vrot.slane %v2684, 1
      %v2686 = vadd.f32 %v2684, %v2685
      %2687 = vst [vmem:[%s264] sm:$0xff] %v2665
      %s2688 = scalar_lea.vmem %s264, 8
      %2689 = vst [vmem:[%s2688] sm:$0xff] %v2686
      %p2690 = scmp.lt.s32.totalorder %s18, 1
      %s2691 = scalar_select %p2690, %s18, 1
      %s2692 = smul.addr %s2691, 8
      %s2693 = smul.addr %s2692, 4
      %s2694 = scalar_lea.vmem %s5, %s2693
      %p2695 = scmp.lt.s32.totalorder %s18, 1
      %s2696 = scalar_select %p2695, %s18, 1
      %s2697 = smul.addr %s2696, 2
      %s2698 = smul.addr %s2697, 8
      %s2699 = scalar_lea.vmem %s6, %s2698
      // Predicated region
      $region41: #{foodnet_aspp_forward.5} parent=39 // pred_check
        %p2700 = pneg %p146
      $region42: #{foodnet_aspp_forward.5} parent=39 // pred_check_branch
        %2702 = sbr.rel (%p2700) target = $region44
      $region43: #{foodnet_aspp_forward.5} parent=39 // pred_region
        _
      $region44: #{foodnet_aspp_forward.5} parent=39 // pred_fallthru
        _
      // Predicated region
      $region45: #{foodnet_aspp_forward.5} parent=39 // pred_check
        %p2703 = pneg %p172
      $region46: #{foodnet_aspp_forward.5} parent=39 // pred_check_branch
        %2705 = sbr.rel (%p2703) target = $region48
      $region47: #{foodnet_aspp_forward.5} parent=39 // pred_region
        _
      $region48: #{foodnet_aspp_forward.5} parent=39 // pred_fallthru
        _
    $region40: #{foodnet_aspp_forward.5} parent=5 // pred_fallthru
      _
    %p2706 = scmp.le.s32.totalorder 2, %s13
    // Predicated region
    $region49: #{foodnet_aspp_forward.5} parent=5 // pred_check
      %p2707 = pneg %p2706
    $region50: #{foodnet_aspp_forward.5} parent=5 // pred_check_branch
      %2709 = sbr.rel (%p2707) target = $region52
    $region51: #{foodnet_aspp_forward.5} parent=5 // pred_region
      %s2710 = ssub.s32 %s13, 2
      // Predicated region
      $region53: #{foodnet_aspp_forward.5} parent=51 // pred_check
        %p2711 = pneg %p152
      $region54: #{foodnet_aspp_forward.5} parent=51 // pred_check_branch
        %2713 = sbr.rel (%p2711) target = $region56
      $region55: #{foodnet_aspp_forward.5} parent=51 // pred_region
        %p2714 = scmp.lt.s32.totalorder %s19, 1
        %s2715 = scalar_select %p2714, %s19, 1
        %s2716 = smul.addr %s2715, 8
        %s2717 = smul.addr %s2716, 4
        %s2718 = scalar_lea.vmem %s5, %s2717
      $region56: #{foodnet_aspp_forward.5} parent=51 // pred_fallthru
        _
      // Predicated region
      $region57: #{foodnet_aspp_forward.5} parent=51 // pred_check
        %p2719 = pneg %p178
      $region58: #{foodnet_aspp_forward.5} parent=51 // pred_check_branch
        %2721 = sbr.rel (%p2719) target = $region60
      $region59: #{foodnet_aspp_forward.5} parent=51 // pred_region
        %p2722 = scmp.lt.s32.totalorder %s19, 1
        %s2723 = scalar_select %p2722, %s19, 1
        %s2724 = smul.addr %s2723, 2
        %s2725 = smul.addr %s2724, 8
        %s2726 = scalar_lea.vmem %s6, %s2725
      $region60: #{foodnet_aspp_forward.5} parent=51 // pred_fallthru
        _
    $region52: #{foodnet_aspp_forward.5} parent=5 // pred_fallthru
      _
  $region6: #{foodnet_aspp_forward.5} parent=0 // loop_footer
    %s17 = sadd.s32 1, %s13
  $region7: #{foodnet_aspp_forward.5} parent=0 // loop_footer_branch
    %12 = sbr.rel target = $region3
  $region8: #{foodnet_aspp_forward.5} parent=0 // loop_exit
    _

// kernel: foodnet_aspp_forward.7
$region0: #{foodnet_aspp_forward.7}
  #allocation0 [shape = 'u32[]', space=smem, size = 0x4, offset = 0x4, fixed_abs, tag = 'smem constant byte address 0x4 - core index']
  #allocation1 [shape = 'u32[144,128]{1,0:T(1,128)}', space=vmem, size = 0x12000, scoped, tag = 'internal scratch']
  %s0 = inlined_call_operand.vmem [shape: bf16[2,16,128], index: 0, kind: input, shape index: {}]
  %s1 = inlined_call_operand.vmem [shape: f32[1,1,128], index: 1, kind: input, shape index: {}]
  %s2 = inlined_call_operand.vmem [shape: f32[1,1,128], index: 2, kind: input, shape index: {}]
  %s3 = inlined_call_operand.vmem [shape: bf16[128,256], index: 3, kind: input, shape index: {}]
  %s4 = inlined_call_operand.vmem [shape: f32[1,256], index: 4, kind: input, shape index: {}]
  %s5 = inlined_call_operand.hbm [shape: f32[2,256], index: 5, kind: output, shape index: {}]
  %s6 = sld [smem:[#allocation0]]
  $region30: #{foodnet_aspp_forward.7} parent=0
    _
  %s8 = ssub.s32 1, %s6
  %s9 = scalar_select 0, %s8, %s6
  $region1: #{foodnet_aspp_forward.7} parent=0
    #allocation2 [shape = 'u8[2048]{0}', space=vmem, size = 0x800, scoped, tag = 'output window, operand 0, single buffered']
    #allocation3 [shape = 's32[1]{0}', space=sflag, size = 0x4, scoped, tag = 'scoped memory for foodnet_aspp_forward.7']
    %10 = vsyncpa [#allocation3], 0
    // Predicated region
    $region2: #{foodnet_aspp_forward.7} parent=1 // pred_check
      _
    $region3: #{foodnet_aspp_forward.7} parent=1 // pred_check_branch
      %12 = sbr.rel (0) target = $region5
    $region4: #{foodnet_aspp_forward.7} parent=1 // pred_region
      _
    $region5: #{foodnet_aspp_forward.7} parent=1 // pred_fallthru
      _
    // Predicated region
    $region6: #{foodnet_aspp_forward.7} parent=1 // pred_check
      _
    $region7: #{foodnet_aspp_forward.7} parent=1 // pred_check_branch
      %14 = sbr.rel (0) target = $region9
    $region8: #{foodnet_aspp_forward.7} parent=1 // pred_region
      _
    $region9: #{foodnet_aspp_forward.7} parent=1 // pred_fallthru
      _
    // Predicated region
    $region10: #{foodnet_aspp_forward.7} parent=1 // pred_check
      _
    $region11: #{foodnet_aspp_forward.7} parent=1 // pred_check_branch
      %16 = sbr.rel (0) target = $region13
    $region12: #{foodnet_aspp_forward.7} parent=1 // pred_region
      _
    $region13: #{foodnet_aspp_forward.7} parent=1 // pred_fallthru
      _
    // Predicated region
    $region14: #{foodnet_aspp_forward.7} parent=1 // pred_check
      _
    $region15: #{foodnet_aspp_forward.7} parent=1 // pred_check_branch
      %18 = sbr.rel (0) target = $region17
    $region16: #{foodnet_aspp_forward.7} parent=1 // pred_region
      _
    $region17: #{foodnet_aspp_forward.7} parent=1 // pred_fallthru
      _
    // Predicated region
    $region18: #{foodnet_aspp_forward.7} parent=1 // pred_check
      _
    $region19: #{foodnet_aspp_forward.7} parent=1 // pred_check_branch
      %20 = sbr.rel (0) target = $region21
    $region20: #{foodnet_aspp_forward.7} parent=1 // pred_region
      _
    $region21: #{foodnet_aspp_forward.7} parent=1 // pred_fallthru
      _
    %v22 = vld [vmem:[%s0] sm:$0xf]
    %v23 = vld [vmem:[%s0 + $0x4] sm:$0xf]
    %v24 = vld [vmem:[%s0 + $0x8] sm:$0xf]
    %v25 = vld [vmem:[%s0 + $0xc] sm:$0xf]
    %v26 = vunpack.c.l.bf16 %v22
    %v27 = vunpack.c.l.bf16 %v23
    %v28 = vunpack.c.l.bf16 %v24
    %v29 = vunpack.c.l.bf16 %v25
    %v30 = vld [vmem:[%s1] sm:$0x1]
    %v32 = vlaneseq
    %v33 = vshrl.u32 %v32, 7
    %v34 = vsub.s32 0, %v33
    %v35 = vrot.slane %v30, %v34
    %v37 = vmul.f32 %v26, %v35
    %v38 = vmul.f32 %v27, %v35
    %v39 = vmul.f32 %v28, %v35
    %v40 = vmul.f32 %v29, %v35
    %v41 = vld [vmem:[%s2] sm:$0x1]
    %v43 = vlaneseq
    %v44 = vshrl.u32 %v43, 7
    %v45 = vsub.s32 0, %v44
    %v46 = vrot.slane %v41, %v45
    %v48 = vadd.f32 %v37, %v46
    %v49 = vadd.f32 %v38, %v46
    %v50 = vadd.f32 %v39, %v46
    %v51 = vadd.f32 %v40, %v46
    %v52 = vmax.f32 %v48, 0.0
    %v53 = vmax.f32 %v49, 0.0
    %v54 = vmax.f32 %v50, 0.0
    %v55 = vmax.f32 %v51, 0.0
    %v56 = vadd.f32 %v52, %v53
    %v57 = vrot.slane %v56, 4
    %v58 = vadd.f32 %v56, %v57
    %v59 = vrot.slane %v58, 2
    %v60 = vadd.f32 %v58, %v59
    %v61 = vrot.slane %v60, 1
    %v62 = vadd.f32 %v60, %v61
    %v63 = vadd.f32 %v54, %v55
    %v64 = vrot.slane %v63, 4
    %v65 = vadd.f32 %v63, %v64
    %v66 = vrot.slane %v65, 2
    %v67 = vadd.f32 %v65, %v66
    %v68 = vrot.slane %v67, 1
    %v69 = vadd.f32 %v67, %v68
    %v70 = vmul.f32 %v62, 0.0625
    %v71 = vmul.f32 %v69, 0.0625
    %v72 = vpack.c.bf16 %v70, %v70
    %v73 = vpack.c.bf16 %v71, %v71
    %v74 = vld [vmem:[%s3] sm:$0xff]
    %v75 = vld [vmem:[%s3 + $0x8] sm:$0xff]
    %v76 = vld [vmem:[%s3 + $0x10] sm:$0xff]
    %v77 = vld [vmem:[%s3 + $0x18] sm:$0xff]
    %v78 = vld [vmem:[%s3 + $0x20] sm:$0xff]
    %v79 = vld [vmem:[%s3 + $0x28] sm:$0xff]
    %v80 = vld [vmem:[%s3 + $0x30] sm:$0xff]
    %v81 = vld [vmem:[%s3 + $0x38] sm:$0xff]
    %v82 = vld [vmem:[%s3 + $0x40] sm:$0xff]
    %v83 = vld [vmem:[%s3 + $0x48] sm:$0xff]
    %v84 = vld [vmem:[%s3 + $0x50] sm:$0xff]
    %v85 = vld [vmem:[%s3 + $0x58] sm:$0xff]
    %v86 = vld [vmem:[%s3 + $0x60] sm:$0xff]
    %v87 = vld [vmem:[%s3 + $0x68] sm:$0xff]
    %v88 = vld [vmem:[%s3 + $0x70] sm:$0xff]
    %v89 = vld [vmem:[%s3 + $0x78] sm:$0xff]
    %v90 = vld [vmem:[%s4] sm:$0x3]
    %v92 = vlaneseq
    %v93 = vshrl.u32 %v92, 7
    %v94 = vsub.s32 0, %v93
    %v95 = vrot.slane %v90, %v94
    %v96 = vlaneseq
    %v97 = vshrl.u32 %v96, 7
    %v98 = vsub.s32 1, %v97
    %v99 = vrot.slane %v90, %v98
    %v104 = vunpack.c.l.b16 %v72
    %v105 = vunpack.c.l.b16 %v73
    %vm106 = vcmask 1041409
    %v107 = vsel %vm106, %v105, %v104
    %v108 = vpack.c.b16 %v107, %v107
    %v126 = vunpack.c.l.b16 %v74
    %v127 = vunpack.c.h.b16 %v74
    %v128 = vunpack.c.l.b16 %v75
    %v129 = vunpack.c.h.b16 %v75
    %v130 = vunpack.c.l.b16 %v76
    %v131 = vunpack.c.h.b16 %v76
    %v132 = vunpack.c.l.b16 %v77
    %v133 = vunpack.c.h.b16 %v77
    %v134 = vunpack.c.l.b16 %v78
    %v135 = vunpack.c.h.b16 %v78
    %v136 = vunpack.c.l.b16 %v79
    %v137 = vunpack.c.h.b16 %v79
    %v138 = vunpack.c.l.b16 %v80
    %v139 = vunpack.c.h.b16 %v80
    %v140 = vunpack.c.l.b16 %v81
    %v141 = vunpack.c.h.b16 %v81
    %v142 = vunpack.c.l.b16 %v82
    %v143 = vunpack.c.h.b16 %v82
    %v144 = vunpack.c.l.b16 %v83
    %v145 = vunpack.c.h.b16 %v83
    %v146 = vunpack.c.l.b16 %v84
    %v147 = vunpack.c.h.b16 %v84
    %v148 = vunpack.c.l.b16 %v85
    %v149 = vunpack.c.h.b16 %v85
    %v150 = vunpack.c.l.b16 %v86
    %v151 = vunpack.c.h.b16 %v86
    %v152 = vunpack.c.l.b16 %v87
    %v153 = vunpack.c.h.b16 %v87
    %v154 = vunpack.c.l.b16 %v88
    %v155 = vunpack.c.h.b16 %v88
    %v156 = vunpack.c.l.b16 %v89
    %v157 = vunpack.c.h.b16 %v89
    %v158 = vpack.c.b16 %v128, %v126
    %v159 = vpack.c.b16 %v129, %v127
    %v160 = vpack.c.b16 %v132, %v130
    %v161 = vpack.c.b16 %v133, %v131
    %v162 = vpack.c.b16 %v136, %v134
    %v163 = vpack.c.b16 %v137, %v135
    %v164 = vpack.c.b16 %v140, %v138
    %v165 = vpack.c.b16 %v141, %v139
    %v166 = vpack.c.b16 %v144, %v142
    %v167 = vpack.c.b16 %v145, %v143
    %v168 = vpack.c.b16 %v148, %v146
    %v169 = vpack.c.b16 %v149, %v147
    %v170 = vpack.c.b16 %v152, %v150
    %v171 = vpack.c.b16 %v153, %v151
    %v172 = vpack.c.b16 %v156, %v154
    %v173 = vpack.c.b16 %v157, %v155
    %190 = vmatprep.subr.bf16.mxu0 %v159
    %191 = vmatpush1.bf16.msra.mxu0 %v158
    %192 = vmatprep.subr.bf16.mxu0 %v161
    %193 = vmatpush1.bf16.msra.mxu0 %v160
    %194 = vmatprep.subr.bf16.mxu0 %v163
    %195 = vmatpush1.bf16.msra.mxu0 %v162
    %196 = vmatprep.subr.bf16.mxu0 %v165
    %197 = vmatpush1.bf16.msra.mxu0 %v164
    %198 = vmatprep.subr.bf16.mxu0 %v167
    %199 = vmatpush1.bf16.msra.mxu0 %v166
    %200 = vmatprep.subr.bf16.mxu0 %v169
    %201 = vmatpush1.bf16.msra.mxu0 %v168
    %202 = vmatprep.subr.bf16.mxu0 %v171
    %203 = vmatpush1.bf16.msra.mxu0 %v170
    %204 = vmatprep.subr.bf16.mxu0 %v173
    %205 = vmatpush1.bf16.msra.mxu0 %v172
    %206 = vmatprep.subr.bf16.mxu0 0
    %207 = vmatpush1.bf16.msra.mxu0 0
    %208 = vmatprep.subr.bf16.mxu0 0
    %209 = vmatpush1.bf16.msra.mxu0 0
    %210 = vmatprep.subr.bf16.mxu0 0
    %211 = vmatpush1.bf16.msra.mxu0 0
    %212 = vmatprep.subr.bf16.mxu0 0
    %213 = vmatpush1.bf16.msra.mxu0 0
    %214 = vmatprep.subr.bf16.mxu0 0
    %215 = vmatpush1.bf16.msra.mxu0 0
    %216 = vmatprep.subr.bf16.mxu0 0
    %217 = vmatpush1.bf16.msra.mxu0 0
    %218 = vmatprep.subr.bf16.mxu0 0
    %219 = vmatpush1.bf16.msra.mxu0 0
    %220 = vmatprep.subr.bf16.mxu0 0
    %221 = vmatpush1.bf16.msra.mxu0 0
    %222 = vmatprep.mubr.bf16.mxu0 0
    %223 = vmatmul.mubr.bf16.gmra.mrb[0].mxu0 %v108
    %v224 = vpop.f32.mrb[0].mxu0
    %v225 = vadd.f32 %v95, %v224
    %v226 = vpop.f32.mrb[0].mxu0
    %v227 = vadd.f32 %v99, %v226
    %v228 = vpop.f32.mrb[0].mxu0
    %v229 = vpop.f32.mrb[0].mxu0
    %230 = vdwg.mxu0
    %v233 = vcombine.low %v225, %v227
    %v235 = vunpack.c.l.s4 1983009808
    %v236 = vunpack.c.0.s8 %v235
    %v237 = vlaneseq
    %v238 = vshrl.u32 %v237, 7
    %v239 = vsub.s32 %v236, %v238
    %v240 = vrot.slane %v233, %v239
    %242 = vst [vmem:[#allocation2] sm:$0xf] %v240
    // Predicated region
    $region22: #{foodnet_aspp_forward.7} parent=1 // pred_check
      _
    $region23: #{foodnet_aspp_forward.7} parent=1 // pred_check_branch
      %244 = sbr.rel (0) target = $region25
    $region24: #{foodnet_aspp_forward.7} parent=1 // pred_region
      %s246 = ssub.s32 64, 64
      %247 = vsyncadd [#allocation3], %s246
      %s249 = sshll.u32 [#allocation2], 4
      %s250 = int_to_ptr.vmem [resolvable:$true] %s249
      %252 = dma.vmem_to_hbm [thread:$0]  %s250, 64, %s5, [#allocation3]
    $region25: #{foodnet_aspp_forward.7} parent=1 // pred_fallthru
      _
    // Predicated region
    $region26: #{foodnet_aspp_forward.7} parent=1 // pred_check
      _
    $region27: #{foodnet_aspp_forward.7} parent=1 // pred_check_branch
      %254 = sbr.rel (0) target = $region29
    $region28: #{foodnet_aspp_forward.7} parent=1 // pred_region
      %255 = dma.done [#allocation3], 64
    $region29: #{foodnet_aspp_forward.7} parent=1 // pred_fallthru
      _
    %256 = vsyncpa [#allocation3], 1

</llo_original>
